<compile_context>
chip_gen: v7x
topology: tpu7x:2x2x1
jax: 0.10.0
libtpu: 0.0.40
codegen_flags: <defaults>
</compile_context>

<pallas_src>
import math
from functools import partial

import jax
import jax.numpy as jnp
from jax import lax
from jax.experimental import pallas as pl
from jax.experimental.pallas import tpu as pltpu


def _layernorm_cmajor(x_cs, gamma_c1, beta_c1, eps=1e-5):
    """LayerNorm over the channel axis of a channel-major (C, S) tile."""
    mu = jnp.mean(x_cs, axis=0, keepdims=True)
    var = jnp.mean(jnp.square(x_cs - mu), axis=0, keepdims=True)
    return (x_cs - mu) * lax.rsqrt(var + eps) * gamma_c1 + beta_c1


def _attn_block_kernel(
    x_ref,                            # (1, C, S)   full tokens (for K/V)
    xq_ref,                           # (1, C, Sq)  query-block tokens
    g1_ref, b1_ref,                   # (C, 1) layernorm1
    wq_ref, bq_ref,                   # (C, C) bf16 (scale folded), (C, 1) f32
    wkv_ref, bkv_ref,                 # (2C, C) bf16, (2C, 1) f32
    wo_ref, bo_ref,                   # (C, C) bf16, (C, 1) f32
    g2_ref, b2_ref,                   # (C, 1) layernorm2
    w1_ref, bb1_ref,                  # (4C, C) bf16, (4C, 1) f32
    w2_ref, bb2_ref,                  # (C, 4C) bf16, (C, 1) f32
    out_ref,                          # (1, C, Sq)
    *, num_heads, approx_gelu,
):
    f32 = jnp.float32
    bf16 = jnp.bfloat16

    x = x_ref[0].astype(f32)                                # (C, S)
    x_q = xq_ref[0].astype(f32)                             # (C, Sq)
    C, S = x.shape
    Sq = x_q.shape[1]
    Dh = C // num_heads

    # ---- LayerNorm 1 (per-token over channels, f32 stats, lane-dense) ----
    xn = _layernorm_cmajor(x, g1_ref[...], b1_ref[...]).astype(bf16)      # (C, S)
    xn_q = _layernorm_cmajor(x_q, g1_ref[...], b1_ref[...]).astype(bf16)  # (C, Sq)

    # ---- Q / KV projections: channel-major, N lane-dense matmuls ----
    q = jnp.dot(wq_ref[...], xn_q, preferred_element_type=f32) + bq_ref[...]    # (C, Sq)
    kv = jnp.dot(wkv_ref[...], xn, preferred_element_type=f32) + bkv_ref[...]   # (2C, S)

    qh = q.reshape(num_heads, Dh, Sq).astype(bf16)          # (H, Dh, Sq)
    kh = kv[:C].reshape(num_heads, Dh, S).astype(bf16)      # (H, Dh, S)
    vh = kv[C:].reshape(num_heads, Dh, S).astype(bf16)      # (H, Dh, S)

    # ---- scores + softmax (f32 stats; key axis on lanes) ----
    s = jnp.einsum('hdq,hdk->hqk', qh, kh, preferred_element_type=f32)   # (H, Sq, S)
    s = s - jnp.max(s, axis=-1, keepdims=True)
    p = jnp.exp(s)
    p = p * pl.reciprocal(jnp.sum(p, axis=-1, keepdims=True), approx=True)
    # attention dropout: identity in eval mode

    o = jnp.einsum('hdk,hqk->hdq', vh, p.astype(bf16),
                   preferred_element_type=f32)                            # (H, Dh, Sq)

    # ---- head merge fused with output projection ----
    attn = jnp.dot(wo_ref[...], o.reshape(C, Sq).astype(bf16),
                   preferred_element_type=f32) + bo_ref[...]              # (C, Sq)

    # ---- residual 1 ----
    x1 = x_q + attn

    # ---- LayerNorm 2 + MLP (channel-major, N = Sq lane-dense) ----
    x1n = _layernorm_cmajor(x1, g2_ref[...], b2_ref[...]).astype(bf16)
    hmid = jnp.dot(w1_ref[...], x1n, preferred_element_type=f32) + bb1_ref[...]  # (4C, Sq)
    hmid = jax.nn.gelu(hmid, approximate=approx_gelu)
    y = jnp.dot(w2_ref[...], hmid.astype(bf16), preferred_element_type=f32) + bb2_ref[...]

    # ---- residual 2 ----
    out_ref[0] = (x1 + y).astype(out_ref.dtype)


def self_attention_block(x_nchw, params, num_heads=8, num_q_blocks=None,
                         approx_gelu=True):
    """x_nchw: (B, C, H, W) float32. Returns (B, C, H, W)."""
    B, C, Hh, Ww = x_nchw.shape
    S = Hh * Ww
    Dh = C // num_heads
    assert C % num_heads == 0

    if num_q_blocks is None:
        # >= 2 "parallel" grid steps per v7x TensorCore while keeping the
        # query tile lane-dense (Sq multiple of 128).
        num_q_blocks = 2 if S % 256 == 0 else 1
    assert S % num_q_blocks == 0
    Sq = S // num_q_blocks

    x_cs = x_nchw.reshape(B, C, S)          # free reshape; NCHW is channel-major tokens

    (ln1_g, ln1_b, in_w, in_b, out_w, out_b,
     ln2_g, ln2_b, fc1_w, fc1_b, fc2_w, fc2_b) = params

    bf16, f32 = jnp.bfloat16, jnp.float32
    scale = 1.0 / math.sqrt(Dh)

    # Trace-time weight packing (PyTorch layouts are already channel-major-friendly):
    #   q_cs = (scale*Wq) @ xn_cs + scale*bq ;  kv_cs = Wkv @ xn_cs + bkv
    wq = (in_w[0 * C:1 * C] * scale).astype(bf16)            # (C, C), scale folded
    bq = (in_b[0 * C:1 * C] * scale).reshape(C, 1).astype(f32)
    wkv = in_w[1 * C:3 * C].astype(bf16)                     # (2C, C)
    bkv = in_b[1 * C:3 * C].reshape(2 * C, 1).astype(f32)
    wo = out_w.astype(bf16)                                  # (C, C)
    bo = out_b.reshape(C, 1).astype(f32)
    g1 = ln1_g.reshape(C, 1).astype(f32)
    b1 = ln1_b.reshape(C, 1).astype(f32)
    g2 = ln2_g.reshape(C, 1).astype(f32)
    b2 = ln2_b.reshape(C, 1).astype(f32)
    w1 = fc1_w.astype(bf16)                                  # (4C, C)
    bb1 = fc1_b.reshape(4 * C, 1).astype(f32)
    w2 = fc2_w.astype(bf16)                                  # (C, 4C)
    bb2 = fc2_b.reshape(C, 1).astype(f32)

    consts = (g1, b1, wq, bq, wkv, bkv, wo, bo, g2, b2, w1, bb1, w2, bb2)

    def const_spec(arr):
        nd = arr.ndim
        return pl.BlockSpec(arr.shape, lambda b, qb, _nd=nd: (0,) * _nd)

    kernel = partial(_attn_block_kernel, num_heads=num_heads,
                     approx_gelu=approx_gelu)

    out_cs = pl.pallas_call(
        kernel,
        out_shape=jax.ShapeDtypeStruct((B, C, S), x_nchw.dtype),
        grid_spec=pltpu.PrefetchScalarGridSpec(
            num_scalar_prefetch=0,
            grid=(B, num_q_blocks),
            in_specs=[
                # full token tile (for K/V): block index constant over qb,
                # so it is only DMA'd when b changes.
                pl.BlockSpec((1, C, S), lambda b, qb: (b, 0, 0)),
                # query block tile (for Q and the residual path).
                pl.BlockSpec((1, C, Sq), lambda b, qb: (b, 0, qb)),
            ] + [const_spec(a) for a in consts],
            out_specs=pl.BlockSpec((1, C, Sq), lambda b, qb: (b, 0, qb)),
        ),
        compiler_params=pltpu.CompilerParams(
            dimension_semantics=("parallel", "parallel")),
    )(x_cs, x_cs, *consts)

    return out_cs.reshape(B, C, Hh, Ww)


def init_params(key, dim):
    """Deterministic synthetic parameters in PyTorch layout."""
    ks = jax.random.split(key, 8)
    std = 0.02
    ln1_g = jnp.ones((dim,), jnp.float32)
    ln1_b = jnp.zeros((dim,), jnp.float32)
    ln2_g = jnp.ones((dim,), jnp.float32)
    ln2_b = jnp.zeros((dim,), jnp.float32)
    in_w = std * jax.random.normal(ks[0], (3 * dim, dim), jnp.float32)   # in_proj_weight
    in_b = std * jax.random.normal(ks[1], (3 * dim,), jnp.float32)       # in_proj_bias
    out_w = std * jax.random.normal(ks[2], (dim, dim), jnp.float32)      # out_proj.weight
    out_b = std * jax.random.normal(ks[3], (dim,), jnp.float32)
    fc1_w = std * jax.random.normal(ks[4], (4 * dim, dim), jnp.float32)
    fc1_b = std * jax.random.normal(ks[5], (4 * dim,), jnp.float32)
    fc2_w = std * jax.random.normal(ks[6], (dim, 4 * dim), jnp.float32)
    fc2_b = std * jax.random.normal(ks[7], (dim,), jnp.float32)
    return (ln1_g, ln1_b, in_w, in_b, out_w, out_b,
            ln2_g, ln2_b, fc1_w, fc1_b, fc2_w, fc2_b)


def _layernorm_tok(x, g, b, eps=1e-5):
    mu = jnp.mean(x, axis=-1, keepdims=True)
    var = jnp.mean(jnp.square(x - mu), axis=-1, keepdims=True)
    return (x - mu) * lax.rsqrt(var + eps) * g + b


def reference_jax(x_nchw, params, num_heads=8):
    """Pure-JAX f32 reference mirroring the PyTorch forward (eval mode, exact GELU)."""
    (ln1_g, ln1_b, in_w, in_b, out_w, out_b,
     ln2_g, ln2_b, fc1_w, fc1_b, fc2_w, fc2_b) = params
    B, C, Hh, Ww = x_nchw.shape
    S = Hh * Ww
    Dh = C // num_heads
    xt = jnp.transpose(x_nchw.reshape(B, C, S), (0, 2, 1))   # (B, S, C)
    xn = _layernorm_tok(xt, ln1_g, ln1_b)
    qkv = xn @ in_w.T + in_b
    q, k, v = qkv[..., :C], qkv[..., C:2 * C], qkv[..., 2 * C:]

    def split(t):
        return jnp.transpose(t.reshape(B, S, num_heads, Dh), (0, 2, 1, 3))

    qh, kh, vh = split(q), split(k), split(v)
    s = jnp.einsum('bhqd,bhkd->bhqk', qh, kh) / math.sqrt(Dh)
    p = jax.nn.softmax(s, axis=-1)
    o = jnp.einsum('bhqk,bhkd->bhqd', p, vh)
    o = jnp.transpose(o, (0, 2, 1, 3)).reshape(B, S, C)
    attn = o @ out_w.T + out_b
    x1 = xt + attn
    x1n = _layernorm_tok(x1, ln2_g, ln2_b)
    y = jax.nn.gelu(x1n @ fc1_w.T + fc1_b, approximate=False) @ fc2_w.T + fc2_b
    out = x1 + y
    return jnp.transpose(out, (0, 2, 1)).reshape(B, C, Hh, Ww)


if __name__ == "__main__":
    B, C, Hh, Ww = 2, 32, 16, 16        # dim=32 divisible by num_heads=8; S=256 (lane-dense)
    num_heads = 8

    key = jax.random.PRNGKey(0)
    kx, kp = jax.random.split(key)
    x = jax.random.normal(kx, (B, C, Hh, Ww), jnp.float32)
    params = init_params(kp, C)

    out = self_attention_block(x, params, num_heads=num_heads)
    out = jax.block_until_ready(out)

    ref = reference_jax(x, params, num_heads=num_heads)
    assert out.shape == (B, C, Hh, Ww)
    max_err = float(jnp.max(jnp.abs(out - ref)))
    # bf16 MXU inputs + approx softmax reciprocal + tanh GELU => looser than f32 tolerance.
    assert jnp.allclose(out, ref, atol=2e-2, rtol=2e-2), f"mismatch vs reference, max_err={max_err}"

    print("KERNEL_OK")
</pallas_src>

<mosaic_0001>
module attributes {stable_mosaic.version = 11 : i64} {
  func.func @_attn_block_kernel(%arg0: i32, %arg1: i32, %arg2: memref<1x32x256xf32, #tpu.memory_space<vmem>>, %arg3: memref<1x32x128xf32, #tpu.memory_space<vmem>>, %arg4: memref<32x1xf32, #tpu.memory_space<vmem>>, %arg5: memref<32x1xf32, #tpu.memory_space<vmem>>, %arg6: memref<32x32xbf16, #tpu.memory_space<vmem>>, %arg7: memref<32x1xf32, #tpu.memory_space<vmem>>, %arg8: memref<64x32xbf16, #tpu.memory_space<vmem>>, %arg9: memref<64x1xf32, #tpu.memory_space<vmem>>, %arg10: memref<32x32xbf16, #tpu.memory_space<vmem>>, %arg11: memref<32x1xf32, #tpu.memory_space<vmem>>, %arg12: memref<32x1xf32, #tpu.memory_space<vmem>>, %arg13: memref<32x1xf32, #tpu.memory_space<vmem>>, %arg14: memref<128x32xbf16, #tpu.memory_space<vmem>>, %arg15: memref<128x1xf32, #tpu.memory_space<vmem>>, %arg16: memref<32x128xbf16, #tpu.memory_space<vmem>>, %arg17: memref<32x1xf32, #tpu.memory_space<vmem>>, %arg18: memref<1x32x128xf32, #tpu.memory_space<vmem>>) attributes {dimension_semantics = [#tpu.dimension_semantics<parallel>, #tpu.dimension_semantics<parallel>], iteration_bounds = array<i64: 2, 2>, scalar_prefetch = 0 : i64, scratch_operands = 0 : i64, tpu.core_type = #tpu.core_type<tc>, window_params = [{transform_indices = @transform_0, window_bounds = array<i64: 1, 32, 256>}, {transform_indices = @transform_1, window_bounds = array<i64: 1, 32, 128>}, {pipeline_mode = #tpu.pipeline_mode<synchronous>, transform_indices = @transform_2, window_bounds = array<i64: 32, 1>}, {pipeline_mode = #tpu.pipeline_mode<synchronous>, transform_indices = @transform_3, window_bounds = array<i64: 32, 1>}, {pipeline_mode = #tpu.pipeline_mode<synchronous>, transform_indices = @transform_4, window_bounds = array<i64: 32, 32>}, {pipeline_mode = #tpu.pipeline_mode<synchronous>, transform_indices = @transform_5, window_bounds = array<i64: 32, 1>}, {pipeline_mode = #tpu.pipeline_mode<synchronous>, transform_indices = @transform_6, window_bounds = array<i64: 64, 32>}, {pipeline_mode = #tpu.pipeline_mode<synchronous>, transform_indices = @transform_7, window_bounds = array<i64: 64, 1>}, {pipeline_mode = #tpu.pipeline_mode<synchronous>, transform_indices = @transform_8, window_bounds = array<i64: 32, 32>}, {pipeline_mode = #tpu.pipeline_mode<synchronous>, transform_indices = @transform_9, window_bounds = array<i64: 32, 1>}, {pipeline_mode = #tpu.pipeline_mode<synchronous>, transform_indices = @transform_10, window_bounds = array<i64: 32, 1>}, {pipeline_mode = #tpu.pipeline_mode<synchronous>, transform_indices = @transform_11, window_bounds = array<i64: 32, 1>}, {pipeline_mode = #tpu.pipeline_mode<synchronous>, transform_indices = @transform_12, window_bounds = array<i64: 128, 32>}, {pipeline_mode = #tpu.pipeline_mode<synchronous>, transform_indices = @transform_13, window_bounds = array<i64: 128, 1>}, {pipeline_mode = #tpu.pipeline_mode<synchronous>, transform_indices = @transform_14, window_bounds = array<i64: 32, 128>}, {pipeline_mode = #tpu.pipeline_mode<synchronous>, transform_indices = @transform_15, window_bounds = array<i64: 32, 1>}, {transform_indices = @transform_16, window_bounds = array<i64: 1, 32, 128>}]} {
    %c0 = arith.constant 0 : index
    %c0_0 = arith.constant 0 : index
    %c0_1 = arith.constant 0 : index
    %0 = vector.load %arg2[%c0, %c0_0, %c0_1] : memref<1x32x256xf32, #tpu.memory_space<vmem>>, vector<1x32x256xf32>
    %1 = vector.shape_cast %0 : vector<1x32x256xf32> to vector<32x256xf32>
    %c0_2 = arith.constant 0 : index
    %c0_3 = arith.constant 0 : index
    %c0_4 = arith.constant 0 : index
    %2 = vector.load %arg3[%c0_2, %c0_3, %c0_4] : memref<1x32x128xf32, #tpu.memory_space<vmem>>, vector<1x32x128xf32>
    %3 = vector.shape_cast %2 : vector<1x32x128xf32> to vector<32x128xf32>
    %c0_5 = arith.constant 0 : index
    %c0_6 = arith.constant 0 : index
    %4 = vector.load %arg4[%c0_5, %c0_6] : memref<32x1xf32, #tpu.memory_space<vmem>>, vector<32x1xf32>
    %c0_7 = arith.constant 0 : index
    %c0_8 = arith.constant 0 : index
    %5 = vector.load %arg5[%c0_7, %c0_8] : memref<32x1xf32, #tpu.memory_space<vmem>>, vector<32x1xf32>
    %cst = arith.constant dense<0.000000e+00> : vector<256xf32>
    %6 = vector.multi_reduction <add>, %1, %cst [0] : vector<32x256xf32> to vector<256xf32>
    %7 = vector.shape_cast %6 : vector<256xf32> to vector<1x256xf32>
    %cst_9 = arith.constant 3.200000e+01 : f32
    %8 = vector.broadcast %cst_9 : f32 to vector<1x256xf32>
    %9 = arith.divf %7, %8 : vector<1x256xf32>
    %10 = vector.broadcast %9 : vector<1x256xf32> to vector<32x256xf32>
    %11 = arith.subf %1, %10 : vector<32x256xf32>
    %12 = arith.mulf %11, %11 : vector<32x256xf32>
    %cst_10 = arith.constant dense<0.000000e+00> : vector<256xf32>
    %13 = vector.multi_reduction <add>, %12, %cst_10 [0] : vector<32x256xf32> to vector<256xf32>
    %14 = vector.shape_cast %13 : vector<256xf32> to vector<1x256xf32>
    %cst_11 = arith.constant 3.200000e+01 : f32
    %15 = vector.broadcast %cst_11 : f32 to vector<1x256xf32>
    %16 = arith.divf %14, %15 : vector<1x256xf32>
    %17 = vector.broadcast %9 : vector<1x256xf32> to vector<32x256xf32>
    %18 = arith.subf %1, %17 : vector<32x256xf32>
    %cst_12 = arith.constant 9.99999974E-6 : f32
    %19 = vector.broadcast %cst_12 : f32 to vector<1x256xf32>
    %20 = arith.addf %16, %19 : vector<1x256xf32>
    %21 = math.rsqrt %20 : vector<1x256xf32>
    %22 = vector.broadcast %21 : vector<1x256xf32> to vector<32x256xf32>
    %23 = arith.mulf %18, %22 : vector<32x256xf32>
    %24 = vector.broadcast %4 : vector<32x1xf32> to vector<32x256xf32>
    %25 = arith.mulf %23, %24 : vector<32x256xf32>
    %26 = vector.broadcast %5 : vector<32x1xf32> to vector<32x256xf32>
    %27 = arith.addf %25, %26 : vector<32x256xf32>
    %28 = arith.truncf %27 : vector<32x256xf32> to vector<32x256xbf16>
    %c0_13 = arith.constant 0 : index
    %c0_14 = arith.constant 0 : index
    %29 = vector.load %arg4[%c0_13, %c0_14] : memref<32x1xf32, #tpu.memory_space<vmem>>, vector<32x1xf32>
    %c0_15 = arith.constant 0 : index
    %c0_16 = arith.constant 0 : index
    %30 = vector.load %arg5[%c0_15, %c0_16] : memref<32x1xf32, #tpu.memory_space<vmem>>, vector<32x1xf32>
    %cst_17 = arith.constant dense<0.000000e+00> : vector<128xf32>
    %31 = vector.multi_reduction <add>, %3, %cst_17 [0] : vector<32x128xf32> to vector<128xf32>
    %32 = vector.shape_cast %31 : vector<128xf32> to vector<1x128xf32>
    %cst_18 = arith.constant 3.200000e+01 : f32
    %33 = vector.broadcast %cst_18 : f32 to vector<1x128xf32>
    %34 = arith.divf %32, %33 : vector<1x128xf32>
    %35 = vector.broadcast %34 : vector<1x128xf32> to vector<32x128xf32>
    %36 = arith.subf %3, %35 : vector<32x128xf32>
    %37 = arith.mulf %36, %36 : vector<32x128xf32>
    %cst_19 = arith.constant dense<0.000000e+00> : vector<128xf32>
    %38 = vector.multi_reduction <add>, %37, %cst_19 [0] : vector<32x128xf32> to vector<128xf32>
    %39 = vector.shape_cast %38 : vector<128xf32> to vector<1x128xf32>
    %cst_20 = arith.constant 3.200000e+01 : f32
    %40 = vector.broadcast %cst_20 : f32 to vector<1x128xf32>
    %41 = arith.divf %39, %40 : vector<1x128xf32>
    %42 = vector.broadcast %34 : vector<1x128xf32> to vector<32x128xf32>
    %43 = arith.subf %3, %42 : vector<32x128xf32>
    %cst_21 = arith.constant 9.99999974E-6 : f32
    %44 = vector.broadcast %cst_21 : f32 to vector<1x128xf32>
    %45 = arith.addf %41, %44 : vector<1x128xf32>
    %46 = math.rsqrt %45 : vector<1x128xf32>
    %47 = vector.broadcast %46 : vector<1x128xf32> to vector<32x128xf32>
    %48 = arith.mulf %43, %47 : vector<32x128xf32>
    %49 = vector.broadcast %29 : vector<32x1xf32> to vector<32x128xf32>
    %50 = arith.mulf %48, %49 : vector<32x128xf32>
    %51 = vector.broadcast %30 : vector<32x1xf32> to vector<32x128xf32>
    %52 = arith.addf %50, %51 : vector<32x128xf32>
    %53 = arith.truncf %52 : vector<32x128xf32> to vector<32x128xbf16>
    %c0_22 = arith.constant 0 : index
    %c0_23 = arith.constant 0 : index
    %54 = vector.load %arg6[%c0_22, %c0_23] : memref<32x32xbf16, #tpu.memory_space<vmem>>, vector<32x32xbf16>
    %cst_24 = arith.constant dense<0.000000e+00> : vector<32x128xf32>
    %55 = tpu.matmul %54, %53, %cst_24 {dimension_numbers = #tpu.dot_dimension_numbers<[1], [0], [0], [1], [0, 0, 1, 1], [], []>} : vector<32x32xbf16>, vector<32x128xbf16>, vector<32x128xf32> -> vector<32x128xf32>
    %c0_25 = arith.constant 0 : index
    %c0_26 = arith.constant 0 : index
    %56 = vector.load %arg7[%c0_25, %c0_26] : memref<32x1xf32, #tpu.memory_space<vmem>>, vector<32x1xf32>
    %57 = vector.broadcast %56 : vector<32x1xf32> to vector<32x128xf32>
    %58 = arith.addf %55, %57 : vector<32x128xf32>
    %c0_27 = arith.constant 0 : index
    %c0_28 = arith.constant 0 : index
    %59 = vector.load %arg8[%c0_27, %c0_28] : memref<64x32xbf16, #tpu.memory_space<vmem>>, vector<64x32xbf16>
    %cst_29 = arith.constant dense<0.000000e+00> : vector<64x256xf32>
    %60 = tpu.matmul %59, %28, %cst_29 {dimension_numbers = #tpu.dot_dimension_numbers<[1], [0], [0], [1], [0, 0, 1, 1], [], []>} : vector<64x32xbf16>, vector<32x256xbf16>, vector<64x256xf32> -> vector<64x256xf32>
    %c0_30 = arith.constant 0 : index
    %c0_31 = arith.constant 0 : index
    %61 = vector.load %arg9[%c0_30, %c0_31] : memref<64x1xf32, #tpu.memory_space<vmem>>, vector<64x1xf32>
    %62 = vector.broadcast %61 : vector<64x1xf32> to vector<64x256xf32>
    %63 = arith.addf %60, %62 : vector<64x256xf32>
    %64 = vector.shape_cast %58 : vector<32x128xf32> to vector<8x4x128xf32>
    %65 = arith.truncf %64 : vector<8x4x128xf32> to vector<8x4x128xbf16>
    %66 = vector.extract_strided_slice %63 {offsets = [0, 0], sizes = [32, 256], strides = [1, 1]} : vector<64x256xf32> to vector<32x256xf32>
    %67 = vector.shape_cast %66 : vector<32x256xf32> to vector<8x4x256xf32>
    %68 = arith.truncf %67 : vector<8x4x256xf32> to vector<8x4x256xbf16>
    %69 = vector.extract_strided_slice %63 {offsets = [32, 0], sizes = [32, 256], strides = [1, 1]} : vector<64x256xf32> to vector<32x256xf32>
    %70 = vector.shape_cast %69 : vector<32x256xf32> to vector<8x4x256xf32>
    %71 = arith.truncf %70 : vector<8x4x256xf32> to vector<8x4x256xbf16>
    "tpu.trace_start"() <{level = 10 : i32, message = "hdq,hdk->hqk"}> : () -> ()
    %cst_32 = arith.constant dense<0.000000e+00> : vector<8x128x256xf32>
    %72 = tpu.matmul %65, %68, %cst_32 {dimension_numbers = #tpu.dot_dimension_numbers<[1], [1], [2], [2], [0, 0, 0, 2, 1, 2], [0], [0]>} : vector<8x4x128xbf16>, vector<8x4x256xbf16>, vector<8x128x256xf32> -> vector<8x128x256xf32>
    "tpu.trace_stop"() : () -> ()
    %cst_33 = arith.constant dense<0xFF800000> : vector<8x128xf32>
    %73 = vector.multi_reduction <maximumf>, %72, %cst_33 [2] : vector<8x128x256xf32> to vector<8x128xf32>
    %74 = vector.shape_cast %73 : vector<8x128xf32> to vector<8x128x1xf32>
    %75 = vector.broadcast %74 : vector<8x128x1xf32> to vector<8x128x256xf32>
    %76 = arith.subf %72, %75 : vector<8x128x256xf32>
    %77 = math.exp %76 : vector<8x128x256xf32>
    %cst_34 = arith.constant dense<0.000000e+00> : vector<8x128xf32>
    %78 = vector.multi_reduction <add>, %77, %cst_34 [2] : vector<8x128x256xf32> to vector<8x128xf32>
    %79 = vector.shape_cast %78 : vector<8x128xf32> to vector<8x128x1xf32>
    %80 = tpu.reciprocal %79 {approx = true} : vector<8x128x1xf32> -> vector<8x128x1xf32>
    %81 = vector.broadcast %80 : vector<8x128x1xf32> to vector<8x128x256xf32>
    %82 = arith.mulf %77, %81 : vector<8x128x256xf32>
    %83 = arith.truncf %82 : vector<8x128x256xf32> to vector<8x128x256xbf16>
    "tpu.trace_start"() <{level = 10 : i32, message = "hdk,hqk->hdq"}> : () -> ()
    %cst_35 = arith.constant dense<0.000000e+00> : vector<8x4x128xf32>
    %84 = tpu.matmul %71, %83, %cst_35 {dimension_numbers = #tpu.dot_dimension_numbers<[2], [2], [1], [1], [0, 0, 0, 1, 1, 1], [0], [0]>} : vector<8x4x256xbf16>, vector<8x128x256xbf16>, vector<8x4x128xf32> -> vector<8x4x128xf32>
    "tpu.trace_stop"() : () -> ()
    %c0_36 = arith.constant 0 : index
    %c0_37 = arith.constant 0 : index
    %85 = vector.load %arg10[%c0_36, %c0_37] : memref<32x32xbf16, #tpu.memory_space<vmem>>, vector<32x32xbf16>
    %86 = vector.shape_cast %84 : vector<8x4x128xf32> to vector<32x128xf32>
    %87 = arith.truncf %86 : vector<32x128xf32> to vector<32x128xbf16>
    %cst_38 = arith.constant dense<0.000000e+00> : vector<32x128xf32>
    %88 = tpu.matmul %85, %87, %cst_38 {dimension_numbers = #tpu.dot_dimension_numbers<[1], [0], [0], [1], [0, 0, 1, 1], [], []>} : vector<32x32xbf16>, vector<32x128xbf16>, vector<32x128xf32> -> vector<32x128xf32>
    %c0_39 = arith.constant 0 : index
    %c0_40 = arith.constant 0 : index
    %89 = vector.load %arg11[%c0_39, %c0_40] : memref<32x1xf32, #tpu.memory_space<vmem>>, vector<32x1xf32>
    %90 = vector.broadcast %89 : vector<32x1xf32> to vector<32x128xf32>
    %91 = arith.addf %88, %90 : vector<32x128xf32>
    %92 = arith.addf %3, %91 : vector<32x128xf32>
    %c0_41 = arith.constant 0 : index
    %c0_42 = arith.constant 0 : index
    %93 = vector.load %arg12[%c0_41, %c0_42] : memref<32x1xf32, #tpu.memory_space<vmem>>, vector<32x1xf32>
    %c0_43 = arith.constant 0 : index
    %c0_44 = arith.constant 0 : index
    %94 = vector.load %arg13[%c0_43, %c0_44] : memref<32x1xf32, #tpu.memory_space<vmem>>, vector<32x1xf32>
    %cst_45 = arith.constant dense<0.000000e+00> : vector<128xf32>
    %95 = vector.multi_reduction <add>, %92, %cst_45 [0] : vector<32x128xf32> to vector<128xf32>
    %96 = vector.shape_cast %95 : vector<128xf32> to vector<1x128xf32>
    %cst_46 = arith.constant 3.200000e+01 : f32
    %97 = vector.broadcast %cst_46 : f32 to vector<1x128xf32>
    %98 = arith.divf %96, %97 : vector<1x128xf32>
    %99 = vector.broadcast %98 : vector<1x128xf32> to vector<32x128xf32>
    %100 = arith.subf %92, %99 : vector<32x128xf32>
    %101 = arith.mulf %100, %100 : vector<32x128xf32>
    %cst_47 = arith.constant dense<0.000000e+00> : vector<128xf32>
    %102 = vector.multi_reduction <add>, %101, %cst_47 [0] : vector<32x128xf32> to vector<128xf32>
    %103 = vector.shape_cast %102 : vector<128xf32> to vector<1x128xf32>
    %cst_48 = arith.constant 3.200000e+01 : f32
    %104 = vector.broadcast %cst_48 : f32 to vector<1x128xf32>
    %105 = arith.divf %103, %104 : vector<1x128xf32>
    %106 = vector.broadcast %98 : vector<1x128xf32> to vector<32x128xf32>
    %107 = arith.subf %92, %106 : vector<32x128xf32>
    %cst_49 = arith.constant 9.99999974E-6 : f32
    %108 = vector.broadcast %cst_49 : f32 to vector<1x128xf32>
    %109 = arith.addf %105, %108 : vector<1x128xf32>
    %110 = math.rsqrt %109 : vector<1x128xf32>
    %111 = vector.broadcast %110 : vector<1x128xf32> to vector<32x128xf32>
    %112 = arith.mulf %107, %111 : vector<32x128xf32>
    %113 = vector.broadcast %93 : vector<32x1xf32> to vector<32x128xf32>
    %114 = arith.mulf %112, %113 : vector<32x128xf32>
    %115 = vector.broadcast %94 : vector<32x1xf32> to vector<32x128xf32>
    %116 = arith.addf %114, %115 : vector<32x128xf32>
    %117 = arith.truncf %116 : vector<32x128xf32> to vector<32x128xbf16>
    %c0_50 = arith.constant 0 : index
    %c0_51 = arith.constant 0 : index
    %118 = vector.load %arg14[%c0_50, %c0_51] : memref<128x32xbf16, #tpu.memory_space<vmem>>, vector<128x32xbf16>
    %cst_52 = arith.constant dense<0.000000e+00> : vector<128x128xf32>
    %119 = tpu.matmul %118, %117, %cst_52 {dimension_numbers = #tpu.dot_dimension_numbers<[1], [0], [0], [1], [0, 0, 1, 1], [], []>} : vector<128x32xbf16>, vector<32x128xbf16>, vector<128x128xf32> -> vector<128x128xf32>
    %c0_53 = arith.constant 0 : index
    %c0_54 = arith.constant 0 : index
    %120 = vector.load %arg15[%c0_53, %c0_54] : memref<128x1xf32, #tpu.memory_space<vmem>>, vector<128x1xf32>
    %121 = vector.broadcast %120 : vector<128x1xf32> to vector<128x128xf32>
    %122 = arith.addf %119, %121 : vector<128x128xf32>
    %123 = arith.mulf %122, %122 : vector<128x128xf32>
    %124 = arith.mulf %122, %123 : vector<128x128xf32>
    %cst_55 = arith.constant 4.471500e-02 : f32
    %125 = vector.broadcast %cst_55 : f32 to vector<128x128xf32>
    %126 = arith.mulf %125, %124 : vector<128x128xf32>
    %127 = arith.addf %122, %126 : vector<128x128xf32>
    %cst_56 = arith.constant 0.797884583 : f32
    %128 = vector.broadcast %cst_56 : f32 to vector<128x128xf32>
    %129 = arith.mulf %128, %127 : vector<128x128xf32>
    %130 = math.tanh %129 : vector<128x128xf32>
    %cst_57 = arith.constant 1.000000e+00 : f32
    %131 = vector.broadcast %cst_57 : f32 to vector<128x128xf32>
    %132 = arith.addf %131, %130 : vector<128x128xf32>
    %cst_58 = arith.constant 5.000000e-01 : f32
    %133 = vector.broadcast %cst_58 : f32 to vector<128x128xf32>
    %134 = arith.mulf %133, %132 : vector<128x128xf32>
    %135 = arith.mulf %122, %134 : vector<128x128xf32>
    %c0_59 = arith.constant 0 : index
    %c0_60 = arith.constant 0 : index
    %136 = vector.load %arg16[%c0_59, %c0_60] : memref<32x128xbf16, #tpu.memory_space<vmem>>, vector<32x128xbf16>
    %137 = arith.truncf %135 : vector<128x128xf32> to vector<128x128xbf16>
    %cst_61 = arith.constant dense<0.000000e+00> : vector<32x128xf32>
    %138 = tpu.matmul %136, %137, %cst_61 {dimension_numbers = #tpu.dot_dimension_numbers<[1], [0], [0], [1], [0, 0, 1, 1], [], []>} : vector<32x128xbf16>, vector<128x128xbf16>, vector<32x128xf32> -> vector<32x128xf32>
    %c0_62 = arith.constant 0 : index
    %c0_63 = arith.constant 0 : index
    %139 = vector.load %arg17[%c0_62, %c0_63] : memref<32x1xf32, #tpu.memory_space<vmem>>, vector<32x1xf32>
    %140 = vector.broadcast %139 : vector<32x1xf32> to vector<32x128xf32>
    %141 = arith.addf %138, %140 : vector<32x128xf32>
    %142 = arith.addf %92, %141 : vector<32x128xf32>
    %c0_64 = arith.constant 0 : index
    %c0_65 = arith.constant 0 : index
    %c0_66 = arith.constant 0 : index
    %143 = vector.load %arg18[%c0_64, %c0_65, %c0_66] : memref<1x32x128xf32, #tpu.memory_space<vmem>>, vector<1x32x128xf32>
    %144 = vector.shape_cast %143 : vector<1x32x128xf32> to vector<32x128xf32>
    %145 = vector.shape_cast %142 : vector<32x128xf32> to vector<1x32x128xf32>
    tpu.vector_store %arg18[%c0_64, %c0_65, %c0_66], %145 {strides = array<i32>} : memref<1x32x128xf32, #tpu.memory_space<vmem>>, vector<1x32x128xf32>,
    return
  }
  func.func @transform_0(%arg0: i32, %arg1: i32) -> (i32, i32, i32) {
    %c0_i32 = arith.constant 0 : i32
    %c0_i32_0 = arith.constant 0 : i32
    %c0_i32_1 = arith.constant 0 : i32
    return %arg0, %c0_i32, %c0_i32_0 : i32, i32, i32
  }
  func.func @transform_1(%arg0: i32, %arg1: i32) -> (i32, i32, i32) {
    %c0_i32 = arith.constant 0 : i32
    %c0_i32_0 = arith.constant 0 : i32
    return %arg0, %c0_i32, %arg1 : i32, i32, i32
  }
  func.func @transform_2(%arg0: i32, %arg1: i32) -> (i32, i32) {
    %c0_i32 = arith.constant 0 : i32
    %c0_i32_0 = arith.constant 0 : i32
    %c0_i32_1 = arith.constant 0 : i32
    return %c0_i32, %c0_i32_0 : i32, i32
  }
  func.func @transform_3(%arg0: i32, %arg1: i32) -> (i32, i32) {
    %c0_i32 = arith.constant 0 : i32
    %c0_i32_0 = arith.constant 0 : i32
    %c0_i32_1 = arith.constant 0 : i32
    return %c0_i32, %c0_i32_0 : i32, i32
  }
  func.func @transform_4(%arg0: i32, %arg1: i32) -> (i32, i32) {
    %c0_i32 = arith.constant 0 : i32
    %c0_i32_0 = arith.constant 0 : i32
    %c0_i32_1 = arith.constant 0 : i32
    return %c0_i32, %c0_i32_0 : i32, i32
  }
  func.func @transform_5(%arg0: i32, %arg1: i32) -> (i32, i32) {
    %c0_i32 = arith.constant 0 : i32
    %c0_i32_0 = arith.constant 0 : i32
    %c0_i32_1 = arith.constant 0 : i32
    return %c0_i32, %c0_i32_0 : i32, i32
  }
  func.func @transform_6(%arg0: i32, %arg1: i32) -> (i32, i32) {
    %c0_i32 = arith.constant 0 : i32
    %c0_i32_0 = arith.constant 0 : i32
    %c0_i32_1 = arith.constant 0 : i32
    return %c0_i32, %c0_i32_0 : i32, i32
  }
  func.func @transform_7(%arg0: i32, %arg1: i32) -> (i32, i32) {
    %c0_i32 = arith.constant 0 : i32
    %c0_i32_0 = arith.constant 0 : i32
    %c0_i32_1 = arith.constant 0 : i32
    return %c0_i32, %c0_i32_0 : i32, i32
  }
  func.func @transform_8(%arg0: i32, %arg1: i32) -> (i32, i32) {
    %c0_i32 = arith.constant 0 : i32
    %c0_i32_0 = arith.constant 0 : i32
    %c0_i32_1 = arith.constant 0 : i32
    return %c0_i32, %c0_i32_0 : i32, i32
  }
  func.func @transform_9(%arg0: i32, %arg1: i32) -> (i32, i32) {
    %c0_i32 = arith.constant 0 : i32
    %c0_i32_0 = arith.constant 0 : i32
    %c0_i32_1 = arith.constant 0 : i32
    return %c0_i32, %c0_i32_0 : i32, i32
  }
  func.func @transform_10(%arg0: i32, %arg1: i32) -> (i32, i32) {
    %c0_i32 = arith.constant 0 : i32
    %c0_i32_0 = arith.constant 0 : i32
    %c0_i32_1 = arith.constant 0 : i32
    return %c0_i32, %c0_i32_0 : i32, i32
  }
  func.func @transform_11(%arg0: i32, %arg1: i32) -> (i32, i32) {
    %c0_i32 = arith.constant 0 : i32
    %c0_i32_0 = arith.constant 0 : i32
    %c0_i32_1 = arith.constant 0 : i32
    return %c0_i32, %c0_i32_0 : i32, i32
  }
  func.func @transform_12(%arg0: i32, %arg1: i32) -> (i32, i32) {
    %c0_i32 = arith.constant 0 : i32
    %c0_i32_0 = arith.constant 0 : i32
    %c0_i32_1 = arith.constant 0 : i32
    return %c0_i32, %c0_i32_0 : i32, i32
  }
  func.func @transform_13(%arg0: i32, %arg1: i32) -> (i32, i32) {
    %c0_i32 = arith.constant 0 : i32
    %c0_i32_0 = arith.constant 0 : i32
    %c0_i32_1 = arith.constant 0 : i32
    return %c0_i32, %c0_i32_0 : i32, i32
  }
  func.func @transform_14(%arg0: i32, %arg1: i32) -> (i32, i32) {
    %c0_i32 = arith.constant 0 : i32
    %c0_i32_0 = arith.constant 0 : i32
    %c0_i32_1 = arith.constant 0 : i32
    return %c0_i32, %c0_i32_0 : i32, i32
  }
  func.func @transform_15(%arg0: i32, %arg1: i32) -> (i32, i32) {
    %c0_i32 = arith.constant 0 : i32
    %c0_i32_0 = arith.constant 0 : i32
    %c0_i32_1 = arith.constant 0 : i32
    return %c0_i32, %c0_i32_0 : i32, i32
  }
  func.func @transform_16(%arg0: i32, %arg1: i32) -> (i32, i32, i32) {
    %c0_i32 = arith.constant 0 : i32
    %c0_i32_0 = arith.constant 0 : i32
    return %arg0, %c0_i32, %arg1 : i32, i32, i32
  }
}

</mosaic_0001>

<llo_original>
// kernel: tpu_custom_call.1
$region0: #{tpu_custom_call.1}
  #allocation0 [shape = 'u32[]', space=smem, size = 0x4, offset = 0x4, fixed_abs, tag = 'smem constant byte address 0x4 - core index']
  #allocation1 [shape = 'u32[144,128]{1,0:T(1,128)}', space=vmem, size = 0x12000, scoped, tag = 'internal scratch']
  %s0 = inlined_call_operand.vmem [shape: f32[2,32,256], index: 0, kind: input, shape index: {}]
  %s1 = inlined_call_operand.vmem [shape: f32[2,32,256], index: 1, kind: input, shape index: {}]
  %s2 = inlined_call_operand.vmem [shape: f32[32,1], index: 2, kind: input, shape index: {}]
  %s3 = inlined_call_operand.vmem [shape: f32[32,1], index: 3, kind: input, shape index: {}]
  %s4 = inlined_call_operand.vmem [shape: bf16[32,32], index: 4, kind: input, shape index: {}]
  %s5 = inlined_call_operand.vmem [shape: f32[32,1], index: 5, kind: input, shape index: {}]
  %s6 = inlined_call_operand.vmem [shape: bf16[64,32], index: 6, kind: input, shape index: {}]
  %s7 = inlined_call_operand.vmem [shape: f32[64,1], index: 7, kind: input, shape index: {}]
  %s8 = inlined_call_operand.vmem [shape: bf16[32,32], index: 8, kind: input, shape index: {}]
  %s9 = inlined_call_operand.vmem [shape: f32[32,1], index: 9, kind: input, shape index: {}]
  %s10 = inlined_call_operand.vmem [shape: f32[32,1], index: 10, kind: input, shape index: {}]
  %s11 = inlined_call_operand.vmem [shape: f32[32,1], index: 11, kind: input, shape index: {}]
  %s12 = inlined_call_operand.vmem [shape: bf16[128,32], index: 12, kind: input, shape index: {}]
  %s13 = inlined_call_operand.vmem [shape: f32[128,1], index: 13, kind: input, shape index: {}]
  %s14 = inlined_call_operand.vmem [shape: bf16[32,128], index: 14, kind: input, shape index: {}]
  %s15 = inlined_call_operand.vmem [shape: f32[32,1], index: 15, kind: input, shape index: {}]
  %s16 = inlined_call_operand.hbm [shape: f32[2,32,256], index: 16, kind: output, shape index: {}]
  %s17 = sld [smem:[#allocation0]]
  $region135: #{tpu_custom_call.1} parent=0
    _
  %s19 = ssub.s32 1, %s17
  %s20 = scalar_select 0, %s19, %s17
  $region1: #{tpu_custom_call.1} parent=0
    #allocation2 [shape = 'u8[32768]{0}', space=vmem, size = 0x8000, scoped, tag = 'input window, operand 1']
    #allocation3 [shape = 'u8[32768]{0}', space=vmem, size = 0x8000, scoped, tag = 'output window, operand 0']
    #allocation4 [shape = 's32[2]{0}', space=sflag, size = 0x8, scoped, tag = 'scoped memory for tpu_custom_call.1']
    %21 = vsyncpa [#allocation4], 0
    %s22 = scalar_lea.sflag [#allocation4], 1
    %23 = vsyncpa %s22, 0
    loop: start=0, step=1, limit=6
    $region2: #{tpu_custom_call.1} parent=1 // loop_pre_header
      _
    $region3: #{tpu_custom_call.1} parent=1 // loop_header
      %s25 = sphi 0, %s29
      %p26 = scmp.ge.s32.totalorder %s25, 6
      %s32 = sphi 0, %s44
      %s33 = sphi 0, %s40
      %s34 = sphi 0, %s32
      %s35 = sphi 0, %s33
      %s36 = sphi 0, %s34
      %s37 = sphi 0, %s35
      %s47 = sphi 0, %s49
      %s50 = sphi 0, %s47
      %s51 = sphi 0, %s50
      %s67 = sphi 0, %s51
      %s75 = sphi 0, %s77
      %s78 = sphi 0, %s75
      %s79 = sphi 0, %s78
      %s95 = sphi 0, %s79
      %s99 = sphi 0, %s99
      %s101 = sphi 0, %s99
      %s102 = sphi 0, %s101
      %s116 = sphi 0, %s102
      %s120 = sphi 0, %s120
      %s122 = sphi 0, %s120
      %s123 = sphi 0, %s122
      %s137 = sphi 0, %s123
      %s141 = sphi 0, %s141
      %s143 = sphi 0, %s141
      %s144 = sphi 0, %s143
      %s158 = sphi 0, %s144
      %s162 = sphi 0, %s162
      %s164 = sphi 0, %s162
      %s165 = sphi 0, %s164
      %s179 = sphi 0, %s165
      %s183 = sphi 0, %s183
      %s185 = sphi 0, %s183
      %s186 = sphi 0, %s185
      %s200 = sphi 0, %s186
      %s204 = sphi 0, %s204
      %s206 = sphi 0, %s204
      %s207 = sphi 0, %s206
      %s221 = sphi 0, %s207
      %s225 = sphi 0, %s225
      %s227 = sphi 0, %s225
      %s228 = sphi 0, %s227
      %s242 = sphi 0, %s228
      %s246 = sphi 0, %s246
      %s248 = sphi 0, %s246
      %s249 = sphi 0, %s248
      %s263 = sphi 0, %s249
      %s267 = sphi 0, %s267
      %s269 = sphi 0, %s267
      %s270 = sphi 0, %s269
      %s284 = sphi 0, %s270
      %s288 = sphi 0, %s288
      %s290 = sphi 0, %s288
      %s291 = sphi 0, %s290
      %s305 = sphi 0, %s291
      %s309 = sphi 0, %s309
      %s311 = sphi 0, %s309
      %s312 = sphi 0, %s311
      %s326 = sphi 0, %s312
      %s330 = sphi 0, %s330
      %s332 = sphi 0, %s330
      %s333 = sphi 0, %s332
      %s347 = sphi 0, %s333
      %s351 = sphi 0, %s351
      %s353 = sphi 0, %s351
      %s354 = sphi 0, %s353
      %s368 = sphi 0, %s354
      %s372 = sphi 0, %s372
      %s374 = sphi 0, %s372
      %s375 = sphi 0, %s374
      %s389 = sphi 0, %s375
      %s397 = sphi 0, %s399
      %s400 = sphi 0, %s397
      %s401 = sphi 0, %s400
      %s417 = sphi 0, %s401
    $region4: #{tpu_custom_call.1} parent=1 // loop_header_branch
      %28 = sbr.rel (%p26) target = $region8
    $region5: #{tpu_custom_call.1} parent=1 // loop_body
      %s30 = ssub.s32 %s25, 1
      %s31 = ssub.s32 %s25, 2
      %s38 = sadd.s32 1, %s33
      %p39 = scmp.ge.s32.totalorder %s38, 2
      %s40 = scalar_select %p39, 0, %s38
      %s41 = sadd.s32 1, %s32
      %s42 = scalar_select %p39, %s41, %s32
      %p43 = scmp.ge.s32.totalorder %s42, 2
      %s44 = scalar_select %p43, 0, %s42
      %s45 = ssub.s32 %s32, %s44
      %p46 = scmp.eq.s32.totalorder %s45, 0
      %s48 = sadd.s32 %s47, 1
      %s49 = scalar_select %p46, %s47, %s48
      %p52 = pneg %p46
      %p53 = scmp.eq.s32.totalorder %s25, 3
      %p54 = por %p52, %p53
      %p55 = scmp.ne.s32.totalorder %s47, %s50
      %p56 = scmp.eq.s32.totalorder %s25, 0
      %p57 = por %p55, %p56
      %p58 = scmp.ne.s32.totalorder %s47, %s50
      %p59 = scmp.eq.s32.totalorder %s30, 3
      %p60 = por %p58, %p59
      %p61 = scmp.ne.s32.totalorder %s50, %s51
      %p62 = scmp.eq.s32.totalorder %s30, 0
      %p63 = por %p61, %p62
      %p64 = scmp.ne.s32.totalorder %s50, %s51
      %p65 = scmp.eq.s32.totalorder %s31, 3
      %p66 = por %p64, %p65
      %p68 = scmp.ne.s32.totalorder %s51, %s67
      %p69 = scmp.eq.s32.totalorder %s31, 0
      %p70 = por %p68, %p69
      %s71 = ssub.s32 %s32, %s44
      %s72 = ssub.s32 %s33, %s40
      %s73 = sor.u32 %s71, %s72
      %p74 = scmp.eq.s32.totalorder %s73, 0
      %s76 = sadd.s32 %s75, 1
      %s77 = scalar_select %p74, %s75, %s76
      %p80 = pneg %p74
      %p81 = scmp.eq.s32.totalorder %s25, 3
      %p82 = por %p80, %p81
      %p83 = scmp.ne.s32.totalorder %s75, %s78
      %p84 = scmp.eq.s32.totalorder %s25, 0
      %p85 = por %p83, %p84
      %p86 = scmp.ne.s32.totalorder %s75, %s78
      %p87 = scmp.eq.s32.totalorder %s30, 3
      %p88 = por %p86, %p87
      %p89 = scmp.ne.s32.totalorder %s78, %s79
      %p90 = scmp.eq.s32.totalorder %s30, 0
      %p91 = por %p89, %p90
      %p92 = scmp.ne.s32.totalorder %s78, %s79
      %p93 = scmp.eq.s32.totalorder %s31, 3
      %p94 = por %p92, %p93
      %p96 = scmp.ne.s32.totalorder %s79, %s95
      %p97 = scmp.eq.s32.totalorder %s31, 0
      %p98 = por %p96, %p97
      %s100 = sadd.s32 %s99, 1
      %p103 = scmp.eq.s32.totalorder %s25, 3
      %p104 = scmp.ne.s32.totalorder %s99, %s101
      %p105 = scmp.eq.s32.totalorder %s25, 0
      %p106 = por %p104, %p105
      %p107 = scmp.ne.s32.totalorder %s99, %s101
      %p108 = scmp.eq.s32.totalorder %s30, 3
      %p109 = por %p107, %p108
      %p110 = scmp.ne.s32.totalorder %s101, %s102
      %p111 = scmp.eq.s32.totalorder %s30, 0
      %p112 = por %p110, %p111
      %p113 = scmp.ne.s32.totalorder %s101, %s102
      %p114 = scmp.eq.s32.totalorder %s31, 3
      %p115 = por %p113, %p114
      %p117 = scmp.ne.s32.totalorder %s102, %s116
      %p118 = scmp.eq.s32.totalorder %s31, 0
      %p119 = por %p117, %p118
      %s121 = sadd.s32 %s120, 1
      %p124 = scmp.eq.s32.totalorder %s25, 3
      %p125 = scmp.ne.s32.totalorder %s120, %s122
      %p126 = scmp.eq.s32.totalorder %s25, 0
      %p127 = por %p125, %p126
      %p128 = scmp.ne.s32.totalorder %s120, %s122
      %p129 = scmp.eq.s32.totalorder %s30, 3
      %p130 = por %p128, %p129
      %p131 = scmp.ne.s32.totalorder %s122, %s123
      %p132 = scmp.eq.s32.totalorder %s30, 0
      %p133 = por %p131, %p132
      %p134 = scmp.ne.s32.totalorder %s122, %s123
      %p135 = scmp.eq.s32.totalorder %s31, 3
      %p136 = por %p134, %p135
      %p138 = scmp.ne.s32.totalorder %s123, %s137
      %p139 = scmp.eq.s32.totalorder %s31, 0
      %p140 = por %p138, %p139
      %s142 = sadd.s32 %s141, 1
      %p145 = scmp.eq.s32.totalorder %s25, 3
      %p146 = scmp.ne.s32.totalorder %s141, %s143
      %p147 = scmp.eq.s32.totalorder %s25, 0
      %p148 = por %p146, %p147
      %p149 = scmp.ne.s32.totalorder %s141, %s143
      %p150 = scmp.eq.s32.totalorder %s30, 3
      %p151 = por %p149, %p150
      %p152 = scmp.ne.s32.totalorder %s143, %s144
      %p153 = scmp.eq.s32.totalorder %s30, 0
      %p154 = por %p152, %p153
      %p155 = scmp.ne.s32.totalorder %s143, %s144
      %p156 = scmp.eq.s32.totalorder %s31, 3
      %p157 = por %p155, %p156
      %p159 = scmp.ne.s32.totalorder %s144, %s158
      %p160 = scmp.eq.s32.totalorder %s31, 0
      %p161 = por %p159, %p160
      %s163 = sadd.s32 %s162, 1
      %p166 = scmp.eq.s32.totalorder %s25, 3
      %p167 = scmp.ne.s32.totalorder %s162, %s164
      %p168 = scmp.eq.s32.totalorder %s25, 0
      %p169 = por %p167, %p168
      %p170 = scmp.ne.s32.totalorder %s162, %s164
      %p171 = scmp.eq.s32.totalorder %s30, 3
      %p172 = por %p170, %p171
      %p173 = scmp.ne.s32.totalorder %s164, %s165
      %p174 = scmp.eq.s32.totalorder %s30, 0
      %p175 = por %p173, %p174
      %p176 = scmp.ne.s32.totalorder %s164, %s165
      %p177 = scmp.eq.s32.totalorder %s31, 3
      %p178 = por %p176, %p177
      %p180 = scmp.ne.s32.totalorder %s165, %s179
      %p181 = scmp.eq.s32.totalorder %s31, 0
      %p182 = por %p180, %p181
      %s184 = sadd.s32 %s183, 1
      %p187 = scmp.eq.s32.totalorder %s25, 3
      %p188 = scmp.ne.s32.totalorder %s183, %s185
      %p189 = scmp.eq.s32.totalorder %s25, 0
      %p190 = por %p188, %p189
      %p191 = scmp.ne.s32.totalorder %s183, %s185
      %p192 = scmp.eq.s32.totalorder %s30, 3
      %p193 = por %p191, %p192
      %p194 = scmp.ne.s32.totalorder %s185, %s186
      %p195 = scmp.eq.s32.totalorder %s30, 0
      %p196 = por %p194, %p195
      %p197 = scmp.ne.s32.totalorder %s185, %s186
      %p198 = scmp.eq.s32.totalorder %s31, 3
      %p199 = por %p197, %p198
      %p201 = scmp.ne.s32.totalorder %s186, %s200
      %p202 = scmp.eq.s32.totalorder %s31, 0
      %p203 = por %p201, %p202
      %s205 = sadd.s32 %s204, 1
      %p208 = scmp.eq.s32.totalorder %s25, 3
      %p209 = scmp.ne.s32.totalorder %s204, %s206
      %p210 = scmp.eq.s32.totalorder %s25, 0
      %p211 = por %p209, %p210
      %p212 = scmp.ne.s32.totalorder %s204, %s206
      %p213 = scmp.eq.s32.totalorder %s30, 3
      %p214 = por %p212, %p213
      %p215 = scmp.ne.s32.totalorder %s206, %s207
      %p216 = scmp.eq.s32.totalorder %s30, 0
      %p217 = por %p215, %p216
      %p218 = scmp.ne.s32.totalorder %s206, %s207
      %p219 = scmp.eq.s32.totalorder %s31, 3
      %p220 = por %p218, %p219
      %p222 = scmp.ne.s32.totalorder %s207, %s221
      %p223 = scmp.eq.s32.totalorder %s31, 0
      %p224 = por %p222, %p223
      %s226 = sadd.s32 %s225, 1
      %p229 = scmp.eq.s32.totalorder %s25, 3
      %p230 = scmp.ne.s32.totalorder %s225, %s227
      %p231 = scmp.eq.s32.totalorder %s25, 0
      %p232 = por %p230, %p231
      %p233 = scmp.ne.s32.totalorder %s225, %s227
      %p234 = scmp.eq.s32.totalorder %s30, 3
      %p235 = por %p233, %p234
      %p236 = scmp.ne.s32.totalorder %s227, %s228
      %p237 = scmp.eq.s32.totalorder %s30, 0
      %p238 = por %p236, %p237
      %p239 = scmp.ne.s32.totalorder %s227, %s228
      %p240 = scmp.eq.s32.totalorder %s31, 3
      %p241 = por %p239, %p240
      %p243 = scmp.ne.s32.totalorder %s228, %s242
      %p244 = scmp.eq.s32.totalorder %s31, 0
      %p245 = por %p243, %p244
      %s247 = sadd.s32 %s246, 1
      %p250 = scmp.eq.s32.totalorder %s25, 3
      %p251 = scmp.ne.s32.totalorder %s246, %s248
      %p252 = scmp.eq.s32.totalorder %s25, 0
      %p253 = por %p251, %p252
      %p254 = scmp.ne.s32.totalorder %s246, %s248
      %p255 = scmp.eq.s32.totalorder %s30, 3
      %p256 = por %p254, %p255
      %p257 = scmp.ne.s32.totalorder %s248, %s249
      %p258 = scmp.eq.s32.totalorder %s30, 0
      %p259 = por %p257, %p258
      %p260 = scmp.ne.s32.totalorder %s248, %s249
      %p261 = scmp.eq.s32.totalorder %s31, 3
      %p262 = por %p260, %p261
      %p264 = scmp.ne.s32.totalorder %s249, %s263
      %p265 = scmp.eq.s32.totalorder %s31, 0
      %p266 = por %p264, %p265
      %s268 = sadd.s32 %s267, 1
      %p271 = scmp.eq.s32.totalorder %s25, 3
      %p272 = scmp.ne.s32.totalorder %s267, %s269
      %p273 = scmp.eq.s32.totalorder %s25, 0
      %p274 = por %p272, %p273
      %p275 = scmp.ne.s32.totalorder %s267, %s269
      %p276 = scmp.eq.s32.totalorder %s30, 3
      %p277 = por %p275, %p276
      %p278 = scmp.ne.s32.totalorder %s269, %s270
      %p279 = scmp.eq.s32.totalorder %s30, 0
      %p280 = por %p278, %p279
      %p281 = scmp.ne.s32.totalorder %s269, %s270
      %p282 = scmp.eq.s32.totalorder %s31, 3
      %p283 = por %p281, %p282
      %p285 = scmp.ne.s32.totalorder %s270, %s284
      %p286 = scmp.eq.s32.totalorder %s31, 0
      %p287 = por %p285, %p286
      %s289 = sadd.s32 %s288, 1
      %p292 = scmp.eq.s32.totalorder %s25, 3
      %p293 = scmp.ne.s32.totalorder %s288, %s290
      %p294 = scmp.eq.s32.totalorder %s25, 0
      %p295 = por %p293, %p294
      %p296 = scmp.ne.s32.totalorder %s288, %s290
      %p297 = scmp.eq.s32.totalorder %s30, 3
      %p298 = por %p296, %p297
      %p299 = scmp.ne.s32.totalorder %s290, %s291
      %p300 = scmp.eq.s32.totalorder %s30, 0
      %p301 = por %p299, %p300
      %p302 = scmp.ne.s32.totalorder %s290, %s291
      %p303 = scmp.eq.s32.totalorder %s31, 3
      %p304 = por %p302, %p303
      %p306 = scmp.ne.s32.totalorder %s291, %s305
      %p307 = scmp.eq.s32.totalorder %s31, 0
      %p308 = por %p306, %p307
      %s310 = sadd.s32 %s309, 1
      %p313 = scmp.eq.s32.totalorder %s25, 3
      %p314 = scmp.ne.s32.totalorder %s309, %s311
      %p315 = scmp.eq.s32.totalorder %s25, 0
      %p316 = por %p314, %p315
      %p317 = scmp.ne.s32.totalorder %s309, %s311
      %p318 = scmp.eq.s32.totalorder %s30, 3
      %p319 = por %p317, %p318
      %p320 = scmp.ne.s32.totalorder %s311, %s312
      %p321 = scmp.eq.s32.totalorder %s30, 0
      %p322 = por %p320, %p321
      %p323 = scmp.ne.s32.totalorder %s311, %s312
      %p324 = scmp.eq.s32.totalorder %s31, 3
      %p325 = por %p323, %p324
      %p327 = scmp.ne.s32.totalorder %s312, %s326
      %p328 = scmp.eq.s32.totalorder %s31, 0
      %p329 = por %p327, %p328
      %s331 = sadd.s32 %s330, 1
      %p334 = scmp.eq.s32.totalorder %s25, 3
      %p335 = scmp.ne.s32.totalorder %s330, %s332
      %p336 = scmp.eq.s32.totalorder %s25, 0
      %p337 = por %p335, %p336
      %p338 = scmp.ne.s32.totalorder %s330, %s332
      %p339 = scmp.eq.s32.totalorder %s30, 3
      %p340 = por %p338, %p339
      %p341 = scmp.ne.s32.totalorder %s332, %s333
      %p342 = scmp.eq.s32.totalorder %s30, 0
      %p343 = por %p341, %p342
      %p344 = scmp.ne.s32.totalorder %s332, %s333
      %p345 = scmp.eq.s32.totalorder %s31, 3
      %p346 = por %p344, %p345
      %p348 = scmp.ne.s32.totalorder %s333, %s347
      %p349 = scmp.eq.s32.totalorder %s31, 0
      %p350 = por %p348, %p349
      %s352 = sadd.s32 %s351, 1
      %p355 = scmp.eq.s32.totalorder %s25, 3
      %p356 = scmp.ne.s32.totalorder %s351, %s353
      %p357 = scmp.eq.s32.totalorder %s25, 0
      %p358 = por %p356, %p357
      %p359 = scmp.ne.s32.totalorder %s351, %s353
      %p360 = scmp.eq.s32.totalorder %s30, 3
      %p361 = por %p359, %p360
      %p362 = scmp.ne.s32.totalorder %s353, %s354
      %p363 = scmp.eq.s32.totalorder %s30, 0
      %p364 = por %p362, %p363
      %p365 = scmp.ne.s32.totalorder %s353, %s354
      %p366 = scmp.eq.s32.totalorder %s31, 3
      %p367 = por %p365, %p366
      %p369 = scmp.ne.s32.totalorder %s354, %s368
      %p370 = scmp.eq.s32.totalorder %s31, 0
      %p371 = por %p369, %p370
      %s373 = sadd.s32 %s372, 1
      %p376 = scmp.eq.s32.totalorder %s25, 3
      %p377 = scmp.ne.s32.totalorder %s372, %s374
      %p378 = scmp.eq.s32.totalorder %s25, 0
      %p379 = por %p377, %p378
      %p380 = scmp.ne.s32.totalorder %s372, %s374
      %p381 = scmp.eq.s32.totalorder %s30, 3
      %p382 = por %p380, %p381
      %p383 = scmp.ne.s32.totalorder %s374, %s375
      %p384 = scmp.eq.s32.totalorder %s30, 0
      %p385 = por %p383, %p384
      %p386 = scmp.ne.s32.totalorder %s374, %s375
      %p387 = scmp.eq.s32.totalorder %s31, 3
      %p388 = por %p386, %p387
      %p390 = scmp.ne.s32.totalorder %s375, %s389
      %p391 = scmp.eq.s32.totalorder %s31, 0
      %p392 = por %p390, %p391
      %s393 = ssub.s32 %s32, %s44
      %s394 = ssub.s32 %s33, %s40
      %s395 = sor.u32 %s393, %s394
      %p396 = scmp.eq.s32.totalorder %s395, 0
      %s398 = sadd.s32 %s397, 1
      %s399 = scalar_select %p396, %s397, %s398
      %p402 = pneg %p396
      %p403 = scmp.eq.s32.totalorder %s25, 3
      %p404 = por %p402, %p403
      %p405 = scmp.ne.s32.totalorder %s397, %s400
      %p406 = scmp.eq.s32.totalorder %s25, 0
      %p407 = por %p405, %p406
      %p408 = scmp.ne.s32.totalorder %s397, %s400
      %p409 = scmp.eq.s32.totalorder %s30, 3
      %p410 = por %p408, %p409
      %p411 = scmp.ne.s32.totalorder %s400, %s401
      %p412 = scmp.eq.s32.totalorder %s30, 0
      %p413 = por %p411, %p412
      %p414 = scmp.ne.s32.totalorder %s400, %s401
      %p415 = scmp.eq.s32.totalorder %s31, 3
      %p416 = por %p414, %p415
      %p418 = scmp.ne.s32.totalorder %s401, %s417
      %p419 = scmp.eq.s32.totalorder %s31, 0
      %p420 = por %p418, %p419
      %p421 = scmp.le.s32.totalorder 1, %s25
      %p422 = scmp.lt.s32.totalorder %s25, 5
      %p423 = pnand %p421, %p422
      %p424 = pneg %p423
      // Predicated region
      $region9: #{tpu_custom_call.1} parent=5 // pred_check
        _
      $region10: #{tpu_custom_call.1} parent=5 // pred_check_branch
        %426 = sbr.rel (%p423) target = $region12
      $region11: #{tpu_custom_call.1} parent=5 // pred_region
        %s427 = ssub.s32 %s25, 1
        // Predicated region
        $region13: #{tpu_custom_call.1} parent=11 // pred_check
          %p428 = pneg %p112
        $region14: #{tpu_custom_call.1} parent=11 // pred_check_branch
          %430 = sbr.rel (%p428) target = $region16
        $region15: #{tpu_custom_call.1} parent=11 // pred_region
          _
        $region16: #{tpu_custom_call.1} parent=11 // pred_fallthru
          _
        // Predicated region
        $region17: #{tpu_custom_call.1} parent=11 // pred_check
          %p431 = pneg %p133
        $region18: #{tpu_custom_call.1} parent=11 // pred_check_branch
          %433 = sbr.rel (%p431) target = $region20
        $region19: #{tpu_custom_call.1} parent=11 // pred_region
          _
        $region20: #{tpu_custom_call.1} parent=11 // pred_fallthru
          _
        // Predicated region
        $region21: #{tpu_custom_call.1} parent=11 // pred_check
          %p434 = pneg %p154
        $region22: #{tpu_custom_call.1} parent=11 // pred_check_branch
          %436 = sbr.rel (%p434) target = $region24
        $region23: #{tpu_custom_call.1} parent=11 // pred_region
          _
        $region24: #{tpu_custom_call.1} parent=11 // pred_fallthru
          _
        // Predicated region
        $region25: #{tpu_custom_call.1} parent=11 // pred_check
          %p437 = pneg %p175
        $region26: #{tpu_custom_call.1} parent=11 // pred_check_branch
          %439 = sbr.rel (%p437) target = $region28
        $region27: #{tpu_custom_call.1} parent=11 // pred_region
          _
        $region28: #{tpu_custom_call.1} parent=11 // pred_fallthru
          _
        // Predicated region
        $region29: #{tpu_custom_call.1} parent=11 // pred_check
          %p440 = pneg %p196
        $region30: #{tpu_custom_call.1} parent=11 // pred_check_branch
          %442 = sbr.rel (%p440) target = $region32
        $region31: #{tpu_custom_call.1} parent=11 // pred_region
          _
        $region32: #{tpu_custom_call.1} parent=11 // pred_fallthru
          _
        // Predicated region
        $region33: #{tpu_custom_call.1} parent=11 // pred_check
          %p443 = pneg %p217
        $region34: #{tpu_custom_call.1} parent=11 // pred_check_branch
          %445 = sbr.rel (%p443) target = $region36
        $region35: #{tpu_custom_call.1} parent=11 // pred_region
          _
        $region36: #{tpu_custom_call.1} parent=11 // pred_fallthru
          _
        // Predicated region
        $region37: #{tpu_custom_call.1} parent=11 // pred_check
          %p446 = pneg %p238
        $region38: #{tpu_custom_call.1} parent=11 // pred_check_branch
          %448 = sbr.rel (%p446) target = $region40
        $region39: #{tpu_custom_call.1} parent=11 // pred_region
          _
        $region40: #{tpu_custom_call.1} parent=11 // pred_fallthru
          _
        // Predicated region
        $region41: #{tpu_custom_call.1} parent=11 // pred_check
          %p449 = pneg %p259
        $region42: #{tpu_custom_call.1} parent=11 // pred_check_branch
          %451 = sbr.rel (%p449) target = $region44
        $region43: #{tpu_custom_call.1} parent=11 // pred_region
          _
        $region44: #{tpu_custom_call.1} parent=11 // pred_fallthru
          _
        // Predicated region
        $region45: #{tpu_custom_call.1} parent=11 // pred_check
          %p452 = pneg %p280
        $region46: #{tpu_custom_call.1} parent=11 // pred_check_branch
          %454 = sbr.rel (%p452) target = $region48
        $region47: #{tpu_custom_call.1} parent=11 // pred_region
          _
        $region48: #{tpu_custom_call.1} parent=11 // pred_fallthru
          _
        // Predicated region
        $region49: #{tpu_custom_call.1} parent=11 // pred_check
          %p455 = pneg %p301
        $region50: #{tpu_custom_call.1} parent=11 // pred_check_branch
          %457 = sbr.rel (%p455) target = $region52
        $region51: #{tpu_custom_call.1} parent=11 // pred_region
          _
        $region52: #{tpu_custom_call.1} parent=11 // pred_fallthru
          _
        // Predicated region
        $region53: #{tpu_custom_call.1} parent=11 // pred_check
          %p458 = pneg %p322
        $region54: #{tpu_custom_call.1} parent=11 // pred_check_branch
          %460 = sbr.rel (%p458) target = $region56
        $region55: #{tpu_custom_call.1} parent=11 // pred_region
          _
        $region56: #{tpu_custom_call.1} parent=11 // pred_fallthru
          _
        // Predicated region
        $region57: #{tpu_custom_call.1} parent=11 // pred_check
          %p461 = pneg %p343
        $region58: #{tpu_custom_call.1} parent=11 // pred_check_branch
          %463 = sbr.rel (%p461) target = $region60
        $region59: #{tpu_custom_call.1} parent=11 // pred_region
          _
        $region60: #{tpu_custom_call.1} parent=11 // pred_fallthru
          _
        // Predicated region
        $region61: #{tpu_custom_call.1} parent=11 // pred_check
          %p464 = pneg %p364
        $region62: #{tpu_custom_call.1} parent=11 // pred_check_branch
          %466 = sbr.rel (%p464) target = $region64
        $region63: #{tpu_custom_call.1} parent=11 // pred_region
          _
        $region64: #{tpu_custom_call.1} parent=11 // pred_fallthru
          _
        // Predicated region
        $region65: #{tpu_custom_call.1} parent=11 // pred_check
          %p467 = pneg %p385
        $region66: #{tpu_custom_call.1} parent=11 // pred_check_branch
          %469 = sbr.rel (%p467) target = $region68
        $region67: #{tpu_custom_call.1} parent=11 // pred_region
          _
        $region68: #{tpu_custom_call.1} parent=11 // pred_fallthru
          _
      $region12: #{tpu_custom_call.1} parent=5 // pred_fallthru
        _
      %p470 = scmp.lt.s32.totalorder %s25, 4
      // Predicated region
      $region69: #{tpu_custom_call.1} parent=5 // pred_check
        %p471 = pneg %p470
      $region70: #{tpu_custom_call.1} parent=5 // pred_check_branch
        %473 = sbr.rel (%p471) target = $region72
      $region71: #{tpu_custom_call.1} parent=5 // pred_region
        // Predicated region
        $region73: #{tpu_custom_call.1} parent=71 // pred_check
          %p474 = pneg %p57
        $region74: #{tpu_custom_call.1} parent=71 // pred_check_branch
          %476 = sbr.rel (%p474) target = $region76
        $region75: #{tpu_custom_call.1} parent=71 // pred_region
          %p477 = scmp.lt.s32.totalorder %s32, 1
          %s478 = scalar_select %p477, %s32, 1
          %s479 = smul.addr %s478, 8
          %s480 = smul.addr %s479, 8
          %s481 = scalar_lea.vmem %s0, %s480
        $region76: #{tpu_custom_call.1} parent=71 // pred_fallthru
          _
        // Predicated region
        $region77: #{tpu_custom_call.1} parent=71 // pred_check
          %p482 = pneg %p85
        $region78: #{tpu_custom_call.1} parent=71 // pred_check_branch
          %484 = sbr.rel (%p482) target = $region80
        $region79: #{tpu_custom_call.1} parent=71 // pred_region
          %s485 = sand.u32 %s75, 1
          %s486 = sand.u32 %s75, 1
          %s487 = smul.addr %s486, 32
          %s488 = scalar_lea.vmem [#allocation2], %s487
          %s489 = smul.addr %s32, 8
          %s490 = sadd.s32 %s33, %s489
          %s491 = smul.addr %s490, 8
          %s492 = scalar_lea.vmem %s1, %s491
          // Predicated region
          $region81: #{tpu_custom_call.1} parent=79 // pred_check
            _
          $region82: #{tpu_custom_call.1} parent=79 // pred_check_branch
            %494 = sbr.rel (0) target = $region84
          $region83: #{tpu_custom_call.1} parent=79 // pred_region
            // Predicated region
            $region85: #{tpu_custom_call.1} parent=83 // pred_check
              _
            $region86: #{tpu_custom_call.1} parent=83 // pred_check_branch
              %496 = sbr.rel (0) target = $region88
            $region87: #{tpu_custom_call.1} parent=83 // pred_region
              // Predicated region
              $region100: #{tpu_custom_call.1} parent=87 // pred_check
                _
              $region101: #{tpu_custom_call.1} parent=87 // pred_check_branch
                %517 = sbr.rel (0) target = $region103
              $region102: #{tpu_custom_call.1} parent=87 // pred_region
                loop: start=0, step=1, limit=1
                $region104: #{tpu_custom_call.1} parent=102 // loop_pre_header
                  _
                $region105: #{tpu_custom_call.1} parent=102 // loop_header
                  %s519 = sphi 0, %s523
                  %p520 = scmp.ge.s32.totalorder %s519, 1
                  %s524 = sphi %s492, %s492
                  %s525 = sphi %s488, %s488
                $region106: #{tpu_custom_call.1} parent=102 // loop_header_branch
                  %522 = sbr.rel (%p520) target = $region110
                $region107: #{tpu_custom_call.1} parent=102 // loop_body
                  %v526 = vld [vmem:[%s524] sm:$0xff]
                  %527 = vst [vmem:[%s525] sm:$0xff] %v526
                  %v528 = vld [vmem:[%s524 + $0x10] sm:$0xff]
                  %529 = vst [vmem:[%s525 + $0x8] sm:$0xff] %v528
                  %v530 = vld [vmem:[%s524 + $0x20] sm:$0xff]
                  %531 = vst [vmem:[%s525 + $0x10] sm:$0xff] %v530
                  %v532 = vld [vmem:[%s524 + $0x30] sm:$0xff]
                  %533 = vst [vmem:[%s525 + $0x18] sm:$0xff] %v532
                $region108: #{tpu_custom_call.1} parent=102 // loop_footer
                  %s523 = sadd.s32 1, %s519
                $region109: #{tpu_custom_call.1} parent=102 // loop_footer_branch
                  %518 = sbr.rel target = $region105
                $region110: #{tpu_custom_call.1} parent=102 // loop_exit
                  _
              $region103: #{tpu_custom_call.1} parent=87 // pred_fallthru
                _
              // Predicated region
              $region111: #{tpu_custom_call.1} parent=87 // pred_check
                _
              $region112: #{tpu_custom_call.1} parent=87 // pred_check_branch
                %535 = sbr.rel target = $region114
              $region113: #{tpu_custom_call.1} parent=87 // pred_region
                _
              $region114: #{tpu_custom_call.1} parent=87 // pred_fallthru
                _
            $region88: #{tpu_custom_call.1} parent=83 // pred_fallthru
              _
            // Predicated region
            $region89: #{tpu_custom_call.1} parent=83 // pred_check
              _
            $region90: #{tpu_custom_call.1} parent=83 // pred_check_branch
              %498 = sbr.rel target = $region92
            $region91: #{tpu_custom_call.1} parent=83 // pred_region
              loop: start=0, step=1, limit=1
              $region93: #{tpu_custom_call.1} parent=91 // loop_pre_header
                _
              $region94: #{tpu_custom_call.1} parent=91 // loop_header
                %s501 = sphi 0, %s505
                %p502 = scmp.ge.s32.totalorder %s501, 1
                %s506 = sphi %s492, %s492
                %s507 = sphi %s488, %s488
              $region95: #{tpu_custom_call.1} parent=91 // loop_header_branch
                %504 = sbr.rel (%p502) target = $region99
              $region96: #{tpu_custom_call.1} parent=91 // loop_body
                %v508 = vld [vmem:[%s506] sm:$0xff]
                %509 = vst [vmem:[%s507] sm:$0xff] %v508
                %v510 = vld [vmem:[%s506 + $0x10] sm:$0xff]
                %511 = vst [vmem:[%s507 + $0x8] sm:$0xff] %v510
                %v512 = vld [vmem:[%s506 + $0x20] sm:$0xff]
                %513 = vst [vmem:[%s507 + $0x10] sm:$0xff] %v512
                %v514 = vld [vmem:[%s506 + $0x30] sm:$0xff]
                %515 = vst [vmem:[%s507 + $0x18] sm:$0xff] %v514
              $region97: #{tpu_custom_call.1} parent=91 // loop_footer
                %s505 = sadd.s32 1, %s501
              $region98: #{tpu_custom_call.1} parent=91 // loop_footer_branch
                %500 = sbr.rel target = $region94
              $region99: #{tpu_custom_call.1} parent=91 // loop_exit
                _
            $region92: #{tpu_custom_call.1} parent=83 // pred_fallthru
              _
          $region84: #{tpu_custom_call.1} parent=79 // pred_fallthru
            _
          %536 = vnop
        $region80: #{tpu_custom_call.1} parent=71 // pred_fallthru
          _
      $region72: #{tpu_custom_call.1} parent=5 // pred_fallthru
        _
      %p537 = scmp.le.s32.totalorder 1, %s25
      %p538 = scmp.lt.s32.totalorder %s25, 5
      %p539 = pnand %p537, %p538
      %p540 = pneg %p539
      // Predicated region
      $region115: #{tpu_custom_call.1} parent=5 // pred_check
        _
      $region116: #{tpu_custom_call.1} parent=5 // pred_check_branch
        %542 = sbr.rel (%p539) target = $region118
      $region117: #{tpu_custom_call.1} parent=5 // pred_region
        %s543 = ssub.s32 %s25, 1
        %s544 = sand.u32 %s78, 1
        %s545 = sand.u32 %s78, 1
        %s546 = smul.addr %s545, 32
        %s547 = scalar_lea.vmem [#allocation2], %s546
        // Predicated region
        $region119: #{tpu_custom_call.1} parent=117 // pred_check
          %p548 = pneg %p91
        $region120: #{tpu_custom_call.1} parent=117 // pred_check_branch
          %550 = sbr.rel (%p548) target = $region122
        $region121: #{tpu_custom_call.1} parent=117 // pred_region
          _
        $region122: #{tpu_custom_call.1} parent=117 // pred_fallthru
          _
        %p551 = scmp.lt.s32.totalorder %s34, 1
        %s552 = scalar_select %p551, %s34, 1
        %s553 = smul.addr %s552, 8
        %s554 = smul.addr %s553, 8
        %s555 = scalar_lea.vmem %s0, %s554
        %p556 = pneg %p63
        %p557 = pneg %p60
        %s558 = sand.u32 %s78, 1
        %s559 = sand.u32 %s78, 1
        %s560 = smul.addr %s559, 32
        %s561 = scalar_lea.vmem [#allocation2], %s560
        %p562 = pneg %p91
        %p563 = pneg %p88
        %p564 = pneg %p112
        %p565 = pneg %p109
        %p566 = pneg %p133
        %p567 = pneg %p130
        %p568 = pneg %p154
        %p569 = pneg %p151
        %p570 = pneg %p175
        %p571 = pneg %p172
        %p572 = pneg %p196
        %p573 = pneg %p193
        %p574 = pneg %p217
        %p575 = pneg %p214
        %p576 = pneg %p238
        %p577 = pneg %p235
        %p578 = pneg %p259
        %p579 = pneg %p256
        %p580 = pneg %p280
        %p581 = pneg %p277
        %p582 = pneg %p301
        %p583 = pneg %p298
        %p584 = pneg %p322
        %p585 = pneg %p319
        %p586 = pneg %p343
        %p587 = pneg %p340
        %p588 = pneg %p364
        %p589 = pneg %p361
        %p590 = pneg %p385
        %p591 = pneg %p382
        %p592 = pneg %p413
        %p593 = pneg %p410
        %s594 = sand.u32 %s400, 1
        %s595 = scalar_lea.sflag [#allocation4], %s594
        %s596 = sand.u32 %s400, 1
        %s597 = smul.addr %s596, 32
        %s598 = scalar_lea.vmem [#allocation3], %s597
        %p599 = scmp.lt.s32.totalorder %s34, 1
        %s600 = scalar_select %p599, %s34, 1
        %s601 = smul.addr %s600, 8
        %s602 = smul.addr %s601, 8
        %s603 = scalar_lea.vmem %s0, %s602
        %v605 = vld [vmem:[%s603] sm:$0xff]
        %v606 = vld [vmem:[%s603 + $0x8] sm:$0xff]
        %v607 = vld [vmem:[%s603 + $0x10] sm:$0xff]
        %v608 = vld [vmem:[%s603 + $0x18] sm:$0xff]
        %v609 = vld [vmem:[%s603 + $0x20] sm:$0xff]
        %v610 = vld [vmem:[%s603 + $0x28] sm:$0xff]
        %v611 = vld [vmem:[%s603 + $0x30] sm:$0xff]
        %v612 = vld [vmem:[%s603 + $0x38] sm:$0xff]
        %v613 = vld [vmem:[%s547] sm:$0xff]
        %v614 = vld [vmem:[%s547 + $0x8] sm:$0xff]
        %v615 = vld [vmem:[%s547 + $0x10] sm:$0xff]
        %v616 = vld [vmem:[%s547 + $0x18] sm:$0xff]
        %v617 = vld [vmem:[%s2] sm:$0xff]
        %v618 = vld [vmem:[%s2 + $0x8] sm:$0xff]
        %v619 = vld [vmem:[%s2 + $0x10] sm:$0xff]
        %v620 = vld [vmem:[%s2 + $0x18] sm:$0xff]
        %v621 = vld [vmem:[%s3] sm:$0xff]
        %v622 = vld [vmem:[%s3 + $0x8] sm:$0xff]
        %v623 = vld [vmem:[%s3 + $0x10] sm:$0xff]
        %v624 = vld [vmem:[%s3 + $0x18] sm:$0xff]
        %v625 = vadd.f32 %v605, %v607
        %v626 = vadd.f32 %v625, %v609
        %v627 = vadd.f32 %v626, %v611
        %v628 = vrot.slane %v627, 4
        %v629 = vadd.f32 %v627, %v628
        %v630 = vrot.slane %v629, 2
        %v631 = vadd.f32 %v629, %v630
        %v632 = vrot.slane %v631, 1
        %v633 = vadd.f32 %v631, %v632
        %v634 = vadd.f32 %v606, %v608
        %v635 = vadd.f32 %v634, %v610
        %v636 = vadd.f32 %v635, %v612
        %v637 = vrot.slane %v636, 4
        %v638 = vadd.f32 %v636, %v637
        %v639 = vrot.slane %v638, 2
        %v640 = vadd.f32 %v638, %v639
        %v641 = vrot.slane %v640, 1
        %v642 = vadd.f32 %v640, %v641
        %v643 = vrcp.pop 32.0
        %v644 = vmul.f32 %v633, %v643
        %v645 = vmul.f32 %v642, %v643
        %v646 = vsub.f32 %v605, %v644
        %v647 = vsub.f32 %v606, %v645
        %v648 = vsub.f32 %v607, %v644
        %v649 = vsub.f32 %v608, %v645
        %v650 = vsub.f32 %v609, %v644
        %v651 = vsub.f32 %v610, %v645
        %v652 = vsub.f32 %v611, %v644
        %v653 = vsub.f32 %v612, %v645
        %v654 = vmul.f32 %v646, %v646
        %v655 = vmul.f32 %v647, %v647
        %v656 = vmul.f32 %v648, %v648
        %v657 = vmul.f32 %v649, %v649
        %v658 = vmul.f32 %v650, %v650
        %v659 = vmul.f32 %v651, %v651
        %v660 = vmul.f32 %v652, %v652
        %v661 = vmul.f32 %v653, %v653
        %v662 = vadd.f32 %v654, %v656
        %v663 = vadd.f32 %v662, %v658
        %v664 = vadd.f32 %v663, %v660
        %v665 = vrot.slane %v664, 4
        %v666 = vadd.f32 %v664, %v665
        %v667 = vrot.slane %v666, 2
        %v668 = vadd.f32 %v666, %v667
        %v669 = vrot.slane %v668, 1
        %v670 = vadd.f32 %v668, %v669
        %v671 = vadd.f32 %v655, %v657
        %v672 = vadd.f32 %v671, %v659
        %v673 = vadd.f32 %v672, %v661
        %v674 = vrot.slane %v673, 4
        %v675 = vadd.f32 %v673, %v674
        %v676 = vrot.slane %v675, 2
        %v677 = vadd.f32 %v675, %v676
        %v678 = vrot.slane %v677, 1
        %v679 = vadd.f32 %v677, %v678
        %v680 = vmul.f32 %v670, %v643
        %v681 = vmul.f32 %v679, %v643
        %v682 = vadd.f32 %v680, 1e-05
        %v683 = vadd.f32 %v681, 1e-05
        %v684 = vrsqrt.pop %v682
        %v685 = vrsqrt.pop %v683
        %v686 = vmul.f32 %v646, %v684
        %v687 = vmul.f32 %v647, %v685
        %v688 = vmul.f32 %v648, %v684
        %v689 = vmul.f32 %v649, %v685
        %v690 = vmul.f32 %v650, %v684
        %v691 = vmul.f32 %v651, %v685
        %v692 = vmul.f32 %v652, %v684
        %v693 = vmul.f32 %v653, %v685
        %695 = vset.pattern.permute.xlu0 0
        %696 = vperm.xlu0 %695, %v617
        %v697 = vpop.permute.xlu0 %696
        %700 = vset.pattern.permute.xlu0 0
        %701 = vperm.xlu0 %700, %v618
        %v702 = vpop.permute.xlu0 %701
        %705 = vset.pattern.permute.xlu0 0
        %706 = vperm.xlu0 %705, %v619
        %v707 = vpop.permute.xlu0 %706
        %710 = vset.pattern.permute.xlu0 0
        %711 = vperm.xlu0 %710, %v620
        %v712 = vpop.permute.xlu0 %711
        %v714 = vmul.f32 %v686, %v697
        %v715 = vmul.f32 %v687, %v697
        %v716 = vmul.f32 %v688, %v702
        %v717 = vmul.f32 %v689, %v702
        %v718 = vmul.f32 %v690, %v707
        %v719 = vmul.f32 %v691, %v707
        %v720 = vmul.f32 %v692, %v712
        %v721 = vmul.f32 %v693, %v712
        %723 = vset.pattern.permute.xlu0 0
        %724 = vperm.xlu0 %723, %v621
        %v725 = vpop.permute.xlu0 %724
        %728 = vset.pattern.permute.xlu0 0
        %729 = vperm.xlu0 %728, %v622
        %v730 = vpop.permute.xlu0 %729
        %733 = vset.pattern.permute.xlu0 0
        %734 = vperm.xlu0 %733, %v623
        %v735 = vpop.permute.xlu0 %734
        %738 = vset.pattern.permute.xlu0 0
        %739 = vperm.xlu0 %738, %v624
        %v740 = vpop.permute.xlu0 %739
        %v742 = vadd.f32 %v714, %v725
        %v743 = vadd.f32 %v715, %v725
        %v744 = vadd.f32 %v716, %v730
        %v745 = vadd.f32 %v717, %v730
        %v746 = vadd.f32 %v718, %v735
        %v747 = vadd.f32 %v719, %v735
        %v748 = vadd.f32 %v720, %v740
        %v749 = vadd.f32 %v721, %v740
        %v750 = vpack.c.bf16 %v744, %v742
        %v751 = vpack.c.bf16 %v745, %v743
        %v752 = vpack.c.bf16 %v748, %v746
        %v753 = vpack.c.bf16 %v749, %v747
        %v754 = vadd.f32 %v613, %v614
        %v755 = vadd.f32 %v754, %v615
        %v756 = vadd.f32 %v755, %v616
        %v757 = vrot.slane %v756, 4
        %v758 = vadd.f32 %v756, %v757
        %v759 = vrot.slane %v758, 2
        %v760 = vadd.f32 %v758, %v759
        %v761 = vrot.slane %v760, 1
        %v762 = vadd.f32 %v760, %v761
        %v763 = vmul.f32 %v762, %v643
        %v764 = vsub.f32 %v613, %v763
        %v765 = vsub.f32 %v614, %v763
        %v766 = vsub.f32 %v615, %v763
        %v767 = vsub.f32 %v616, %v763
        %v768 = vmul.f32 %v764, %v764
        %v769 = vmul.f32 %v765, %v765
        %v770 = vmul.f32 %v766, %v766
        %v771 = vmul.f32 %v767, %v767
        %v772 = vadd.f32 %v768, %v769
        %v773 = vadd.f32 %v772, %v770
        %v774 = vadd.f32 %v773, %v771
        %v775 = vrot.slane %v774, 4
        %v776 = vadd.f32 %v774, %v775
        %v777 = vrot.slane %v776, 2
        %v778 = vadd.f32 %v776, %v777
        %v779 = vrot.slane %v778, 1
        %v780 = vadd.f32 %v778, %v779
        %v781 = vmul.f32 %v780, %v643
        %v782 = vadd.f32 %v781, 1e-05
        %v783 = vrsqrt.pop %v782
        %v784 = vmul.f32 %v764, %v783
        %v785 = vmul.f32 %v765, %v783
        %v786 = vmul.f32 %v766, %v783
        %v787 = vmul.f32 %v767, %v783
        %v788 = vmul.f32 %v784, %v697
        %v789 = vmul.f32 %v785, %v702
        %v790 = vmul.f32 %v786, %v707
        %v791 = vmul.f32 %v787, %v712
        %v792 = vadd.f32 %v788, %v725
        %v793 = vadd.f32 %v789, %v730
        %v794 = vadd.f32 %v790, %v735
        %v795 = vadd.f32 %v791, %v740
        %v796 = vpack.c.bf16 %v793, %v792
        %v797 = vpack.c.bf16 %v795, %v794
        %v798 = vld [vmem:[%s4] sm:$0xf]
        %v799 = vld [vmem:[%s4 + $0x4] sm:$0xf]
        %v800 = vld [vmem:[%s4 + $0x8] sm:$0xf]
        %v801 = vld [vmem:[%s4 + $0xc] sm:$0xf]
        %v802 = vld [vmem:[%s5] sm:$0xff]
        %v803 = vld [vmem:[%s5 + $0x8] sm:$0xff]
        %v804 = vld [vmem:[%s5 + $0x10] sm:$0xff]
        %v805 = vld [vmem:[%s5 + $0x18] sm:$0xff]
        %807 = vset.pattern.permute.xlu0 0
        %808 = vperm.xlu0 %807, %v802
        %v809 = vpop.permute.xlu0 %808
        %812 = vset.pattern.permute.xlu0 0
        %813 = vperm.xlu0 %812, %v803
        %v814 = vpop.permute.xlu0 %813
        %817 = vset.pattern.permute.xlu0 0
        %818 = vperm.xlu0 %817, %v804
        %v819 = vpop.permute.xlu0 %818
        %822 = vset.pattern.permute.xlu0 0
        %823 = vperm.xlu0 %822, %v805
        %v824 = vpop.permute.xlu0 %823
        %v830 = vunpack.c.l.b16 %v798
        %v831 = vunpack.c.l.b16 %v799
        %v832 = vunpack.c.l.b16 %v800
        %v833 = vunpack.c.l.b16 %v801
        %v834 = vpack.c.b16 %v831, %v830
        %v835 = vpack.c.b16 %v833, %v832
        %vm836 = vcmask 261120
        %v838 = vsel %vm836, %v834, 0
        %v841 = vsel %vm836, %v835, 0
        %843 = vmatprep.subr.bf16.mxu0 0
        %844 = vmatpush1.bf16.msra.mxu0 %v796
        %845 = vmatprep.subr.bf16.mxu0 0
        %846 = vmatpush1.bf16.msra.mxu0 %v797
        %847 = vmatprep.subr.bf16.mxu0 0
        %848 = vmatpush1.bf16.msra.mxu0 0
        %849 = vmatprep.subr.bf16.mxu0 0
        %850 = vmatpush1.bf16.msra.mxu0 0
        %851 = vmatprep.subr.bf16.mxu0 0
        %852 = vmatpush1.bf16.msra.mxu0 0
        %853 = vmatprep.subr.bf16.mxu0 0
        %854 = vmatpush1.bf16.msra.mxu0 0
        %855 = vmatprep.subr.bf16.mxu0 0
        %856 = vmatpush1.bf16.msra.mxu0 0
        %857 = vmatprep.subr.bf16.mxu0 0
        %858 = vmatpush1.bf16.msra.mxu0 0
        %859 = vmatprep.subr.bf16.mxu0 0
        %860 = vmatpush1.bf16.msra.mxu0 0
        %861 = vmatprep.subr.bf16.mxu0 0
        %862 = vmatpush1.bf16.msra.mxu0 0
        %863 = vmatprep.subr.bf16.mxu0 0
        %864 = vmatpush1.bf16.msra.mxu0 0
        %865 = vmatprep.subr.bf16.mxu0 0
        %866 = vmatpush1.bf16.msra.mxu0 0
        %867 = vmatprep.subr.bf16.mxu0 0
        %868 = vmatpush1.bf16.msra.mxu0 0
        %869 = vmatprep.subr.bf16.mxu0 0
        %870 = vmatpush1.bf16.msra.mxu0 0
        %871 = vmatprep.subr.bf16.mxu0 0
        %872 = vmatpush1.bf16.msra.mxu0 0
        %873 = vmatprep.subr.bf16.mxu0 0
        %874 = vmatpush1.bf16.msra.mxu0 0
        %875 = vmatprep.mubr.bf16.mxu0 0
        %876 = vmatmul.mubr.bf16.gmra.mrb[0].mxu0 %v838
        %v877 = vpop.f32.mrb[0].mxu0
        %v878 = vadd.f32 %v809, %v877
        %v879 = vpop.f32.mrb[0].mxu0
        %v880 = vpop.f32.mrb[0].mxu0
        %v881 = vadd.f32 %v814, %v880
        %v882 = vpop.f32.mrb[0].mxu0
        %883 = vmatprep.mubr.bf16.mxu0 0
        %884 = vmatmul.mubr.bf16.gmra.mrb[0].mxu0 %v841
        %v885 = vpop.f32.mrb[0].mxu0
        %v886 = vadd.f32 %v819, %v885
        %v887 = vpop.f32.mrb[0].mxu0
        %v888 = vpop.f32.mrb[0].mxu0
        %v889 = vadd.f32 %v824, %v888
        %v890 = vpop.f32.mrb[0].mxu0
        %891 = vdwg.mxu0
        %v892 = vld [vmem:[%s6] sm:$0xf]
        %v893 = vld [vmem:[%s6 + $0x4] sm:$0xf]
        %v894 = vld [vmem:[%s6 + $0x8] sm:$0xf]
        %v895 = vld [vmem:[%s6 + $0xc] sm:$0xf]
        %v896 = vld [vmem:[%s6 + $0x10] sm:$0xf]
        %v897 = vld [vmem:[%s6 + $0x14] sm:$0xf]
        %v898 = vld [vmem:[%s6 + $0x18] sm:$0xf]
        %v899 = vld [vmem:[%s6 + $0x1c] sm:$0xf]
        %v900 = vld [vmem:[%s7] sm:$0xff]
        %v901 = vld [vmem:[%s7 + $0x8] sm:$0xff]
        %v902 = vld [vmem:[%s7 + $0x10] sm:$0xff]
        %v903 = vld [vmem:[%s7 + $0x18] sm:$0xff]
        %v904 = vld [vmem:[%s7 + $0x20] sm:$0xff]
        %v905 = vld [vmem:[%s7 + $0x28] sm:$0xff]
        %v906 = vld [vmem:[%s7 + $0x30] sm:$0xff]
        %v907 = vld [vmem:[%s7 + $0x38] sm:$0xff]
        %909 = vset.pattern.permute.xlu0 0
        %910 = vperm.xlu0 %909, %v900
        %v911 = vpop.permute.xlu0 %910
        %914 = vset.pattern.permute.xlu0 0
        %915 = vperm.xlu0 %914, %v901
        %v916 = vpop.permute.xlu0 %915
        %919 = vset.pattern.permute.xlu0 0
        %920 = vperm.xlu0 %919, %v902
        %v921 = vpop.permute.xlu0 %920
        %924 = vset.pattern.permute.xlu0 0
        %925 = vperm.xlu0 %924, %v903
        %v926 = vpop.permute.xlu0 %925
        %929 = vset.pattern.permute.xlu0 0
        %930 = vperm.xlu0 %929, %v904
        %v931 = vpop.permute.xlu0 %930
        %934 = vset.pattern.permute.xlu0 0
        %935 = vperm.xlu0 %934, %v905
        %v936 = vpop.permute.xlu0 %935
        %939 = vset.pattern.permute.xlu0 0
        %940 = vperm.xlu0 %939, %v906
        %v941 = vpop.permute.xlu0 %940
        %944 = vset.pattern.permute.xlu0 0
        %945 = vperm.xlu0 %944, %v907
        %v946 = vpop.permute.xlu0 %945
        %v956 = vunpack.c.l.b16 %v892
        %v957 = vunpack.c.l.b16 %v893
        %v958 = vunpack.c.l.b16 %v894
        %v959 = vunpack.c.l.b16 %v895
        %v960 = vunpack.c.l.b16 %v896
        %v961 = vunpack.c.l.b16 %v897
        %v962 = vunpack.c.l.b16 %v898
        %v963 = vunpack.c.l.b16 %v899
        %v964 = vpack.c.b16 %v957, %v956
        %v965 = vpack.c.b16 %v959, %v958
        %v966 = vpack.c.b16 %v961, %v960
        %v967 = vpack.c.b16 %v963, %v962
        %v969 = vsel %vm836, %v964, 0
        %v972 = vsel %vm836, %v965, 0
        %v975 = vsel %vm836, %v966, 0
        %v978 = vsel %vm836, %v967, 0
        %980 = vmatprep.subr.bf16.mxu0 %v751
        %981 = vmatpush1.bf16.msra.mxu0 %v750
        %982 = vmatprep.subr.bf16.mxu0 %v753
        %983 = vmatpush1.bf16.msra.mxu0 %v752
        %984 = vmatprep.subr.bf16.mxu0 0
        %985 = vmatpush1.bf16.msra.mxu0 0
        %986 = vmatprep.subr.bf16.mxu0 0
        %987 = vmatpush1.bf16.msra.mxu0 0
        %988 = vmatprep.subr.bf16.mxu0 0
        %989 = vmatpush1.bf16.msra.mxu0 0
        %990 = vmatprep.subr.bf16.mxu0 0
        %991 = vmatpush1.bf16.msra.mxu0 0
        %992 = vmatprep.subr.bf16.mxu0 0
        %993 = vmatpush1.bf16.msra.mxu0 0
        %994 = vmatprep.subr.bf16.mxu0 0
        %995 = vmatpush1.bf16.msra.mxu0 0
        %996 = vmatprep.subr.bf16.mxu0 0
        %997 = vmatpush1.bf16.msra.mxu0 0
        %998 = vmatprep.subr.bf16.mxu0 0
        %999 = vmatpush1.bf16.msra.mxu0 0
        %1000 = vmatprep.subr.bf16.mxu0 0
        %1001 = vmatpush1.bf16.msra.mxu0 0
        %1002 = vmatprep.subr.bf16.mxu0 0
        %1003 = vmatpush1.bf16.msra.mxu0 0
        %1004 = vmatprep.subr.bf16.mxu0 0
        %1005 = vmatpush1.bf16.msra.mxu0 0
        %1006 = vmatprep.subr.bf16.mxu0 0
        %1007 = vmatpush1.bf16.msra.mxu0 0
        %1008 = vmatprep.subr.bf16.mxu0 0
        %1009 = vmatpush1.bf16.msra.mxu0 0
        %1010 = vmatprep.subr.bf16.mxu0 0
        %1011 = vmatpush1.bf16.msra.mxu0 0
        %1012 = vmatprep.mubr.bf16.mxu0 0
        %1013 = vmatmul.mubr.bf16.gmra.mrb[0].mxu0 %v969
        %v1014 = vpop.f32.mrb[0].mxu0
        %v1015 = vadd.f32 %v911, %v1014
        %v1016 = vpop.f32.mrb[0].mxu0
        %v1017 = vadd.f32 %v911, %v1016
        %v1018 = vpop.f32.mrb[0].mxu0
        %v1019 = vadd.f32 %v916, %v1018
        %v1020 = vpop.f32.mrb[0].mxu0
        %v1021 = vadd.f32 %v916, %v1020
        %1022 = vmatprep.mubr.bf16.mxu0 0
        %1023 = vmatmul.mubr.bf16.gmra.mrb[0].mxu0 %v972
        %v1024 = vpop.f32.mrb[0].mxu0
        %v1025 = vadd.f32 %v921, %v1024
        %v1026 = vpop.f32.mrb[0].mxu0
        %v1027 = vadd.f32 %v921, %v1026
        %v1028 = vpop.f32.mrb[0].mxu0
        %v1029 = vadd.f32 %v926, %v1028
        %v1030 = vpop.f32.mrb[0].mxu0
        %v1031 = vadd.f32 %v926, %v1030
        %1032 = vmatprep.mubr.bf16.mxu0 0
        %1033 = vmatmul.mubr.bf16.gmra.mrb[0].mxu0 %v975
        %v1034 = vpop.f32.mrb[0].mxu0
        %v1035 = vadd.f32 %v931, %v1034
        %v1036 = vpop.f32.mrb[0].mxu0
        %v1037 = vadd.f32 %v931, %v1036
        %v1038 = vpop.f32.mrb[0].mxu0
        %v1039 = vadd.f32 %v936, %v1038
        %v1040 = vpop.f32.mrb[0].mxu0
        %v1041 = vadd.f32 %v936, %v1040
        %1042 = vmatprep.mubr.bf16.mxu0 0
        %1043 = vmatmul.mubr.bf16.gmra.mrb[0].mxu0 %v978
        %v1044 = vpop.f32.mrb[0].mxu0
        %v1045 = vadd.f32 %v941, %v1044
        %v1046 = vpop.f32.mrb[0].mxu0
        %v1047 = vadd.f32 %v941, %v1046
        %v1048 = vpop.f32.mrb[0].mxu0
        %v1049 = vadd.f32 %v946, %v1048
        %v1050 = vpop.f32.mrb[0].mxu0
        %v1051 = vadd.f32 %v946, %v1050
        %1052 = vdwg.mxu0
        %v1057 = vcombine.high %v878, %v878
        %v1058 = vcombine.high %v881, %v881
        %v1059 = vcombine.high %v886, %v886
        %v1060 = vcombine.high %v889, %v889
        %v1065 = vpack.c.bf16 %v878, %v878
        %v1066 = vpack.c.bf16 %v1057, %v1057
        %v1067 = vpack.c.bf16 %v881, %v881
        %v1068 = vpack.c.bf16 %v1058, %v1058
        %v1069 = vpack.c.bf16 %v886, %v886
        %v1070 = vpack.c.bf16 %v1059, %v1059
        %v1071 = vpack.c.bf16 %v889, %v889
        %v1072 = vpack.c.bf16 %v1060, %v1060
        %v1081 = vcombine.low %v1015, %v1017
        %v1082 = vcombine.high %v1015, %v1017
        %v1083 = vcombine.low %v1019, %v1021
        %v1084 = vcombine.high %v1019, %v1021
        %v1085 = vcombine.low %v1025, %v1027
        %v1086 = vcombine.high %v1025, %v1027
        %v1087 = vcombine.low %v1029, %v1031
        %v1088 = vcombine.high %v1029, %v1031
        %v1097 = vcombine.high %v1081, %v1081
        %v1098 = vcombine.high %v1082, %v1082
        %v1099 = vcombine.high %v1083, %v1083
        %v1100 = vcombine.high %v1084, %v1084
        %v1101 = vcombine.high %v1085, %v1085
        %v1102 = vcombine.high %v1086, %v1086
        %v1103 = vcombine.high %v1087, %v1087
        %v1104 = vcombine.high %v1088, %v1088
        %v1113 = vpack.c.bf16 %v1081, %v1081
        %v1114 = vpack.c.bf16 %v1097, %v1097
        %v1115 = vpack.c.bf16 %v1082, %v1082
        %v1116 = vpack.c.bf16 %v1098, %v1098
        %v1117 = vpack.c.bf16 %v1083, %v1083
        %v1118 = vpack.c.bf16 %v1099, %v1099
        %v1119 = vpack.c.bf16 %v1084, %v1084
        %v1120 = vpack.c.bf16 %v1100, %v1100
        %v1121 = vpack.c.bf16 %v1085, %v1085
        %v1122 = vpack.c.bf16 %v1101, %v1101
        %v1123 = vpack.c.bf16 %v1086, %v1086
        %v1124 = vpack.c.bf16 %v1102, %v1102
        %v1125 = vpack.c.bf16 %v1087, %v1087
        %v1126 = vpack.c.bf16 %v1103, %v1103
        %v1127 = vpack.c.bf16 %v1088, %v1088
        %v1128 = vpack.c.bf16 %v1104, %v1104
        %v1137 = vcombine.low %v1035, %v1037
        %v1138 = vcombine.high %v1035, %v1037
        %v1139 = vcombine.low %v1039, %v1041
        %v1140 = vcombine.high %v1039, %v1041
        %v1141 = vcombine.low %v1045, %v1047
        %v1142 = vcombine.high %v1045, %v1047
        %v1143 = vcombine.low %v1049, %v1051
        %v1144 = vcombine.high %v1049, %v1051
        %v1153 = vcombine.high %v1137, %v1137
        %v1154 = vcombine.high %v1138, %v1138
        %v1155 = vcombine.high %v1139, %v1139
        %v1156 = vcombine.high %v1140, %v1140
        %v1157 = vcombine.high %v1141, %v1141
        %v1158 = vcombine.high %v1142, %v1142
        %v1159 = vcombine.high %v1143, %v1143
        %v1160 = vcombine.high %v1144, %v1144
        %v1169 = vpack.c.bf16 %v1137, %v1137
        %v1170 = vpack.c.bf16 %v1153, %v1153
        %v1171 = vpack.c.bf16 %v1138, %v1138
        %v1172 = vpack.c.bf16 %v1154, %v1154
        %v1173 = vpack.c.bf16 %v1139, %v1139
        %v1174 = vpack.c.bf16 %v1155, %v1155
        %v1175 = vpack.c.bf16 %v1140, %v1140
        %v1176 = vpack.c.bf16 %v1156, %v1156
        %v1177 = vpack.c.bf16 %v1141, %v1141
        %v1178 = vpack.c.bf16 %v1157, %v1157
        %v1179 = vpack.c.bf16 %v1142, %v1142
        %v1180 = vpack.c.bf16 %v1158, %v1158
        %v1181 = vpack.c.bf16 %v1143, %v1143
        %v1182 = vpack.c.bf16 %v1159, %v1159
        %v1183 = vpack.c.bf16 %v1144, %v1144
        %v1184 = vpack.c.bf16 %v1160, %v1160
        %1185 = vxpose.xlu0.c.b16.start [1/8] %v1065, 128
        %1186 = vxpose.xlu0.c.b16.cont [2/8] 0, 128
        %1187 = vxpose.xlu0.c.b16.cont [3/8] 0, 128
        %1188 = vxpose.xlu0.c.b16.cont [4/8] 0, 128
        %1189 = vxpose.xlu0.c.b16.cont [5/8] 0, 128
        %1190 = vxpose.xlu0.c.b16.cont [6/8] 0, 128
        %1191 = vxpose.xlu0.c.b16.cont [7/8] 0, 128
        %1192 = vxpose.xlu0.c.b16.end [8/8] 0, 128
        %v1193 = vpop.trf.xlu0
        %v1194 = vpop.trf.xlu0
        %v1195 = vpop.trf.xlu0
        %v1196 = vpop.trf.xlu0
        %v1197 = vpop.trf.xlu0
        %v1198 = vpop.trf.xlu0
        %v1199 = vpop.trf.xlu0
        %v1200 = vpop.trf.xlu0
        %vm1201 = vcmask 31744
        %v1203 = vsel %vm1201, %v1193, 0
        %v1206 = vsel %vm1201, %v1194, 0
        %v1209 = vsel %vm1201, %v1195, 0
        %v1212 = vsel %vm1201, %v1196, 0
        %v1215 = vsel %vm1201, %v1197, 0
        %v1218 = vsel %vm1201, %v1198, 0
        %v1221 = vsel %vm1201, %v1199, 0
        %v1224 = vsel %vm1201, %v1200, 0
        %vm1226 = vcmask 1041408
        %v1228 = vsel %vm1226, %v1113, 0
        %v1231 = vsel %vm1226, %v1114, 0
        %1233 = vmatprep.subr.bf16.mxu0 %v1231
        %1234 = vmatpush1.bf16.msra.mxu0 %v1228
        %1235 = vmatprep.subr.bf16.mxu0 0
        %1236 = vmatpush1.bf16.msra.mxu0 0
        %1237 = vmatprep.subr.bf16.mxu0 0
        %1238 = vmatpush1.bf16.msra.mxu0 0
        %1239 = vmatprep.subr.bf16.mxu0 0
        %1240 = vmatpush1.bf16.msra.mxu0 0
        %1241 = vmatprep.subr.bf16.mxu0 0
        %1242 = vmatpush1.bf16.msra.mxu0 0
        %1243 = vmatprep.subr.bf16.mxu0 0
        %1244 = vmatpush1.bf16.msra.mxu0 0
        %1245 = vmatprep.subr.bf16.mxu0 0
        %1246 = vmatpush1.bf16.msra.mxu0 0
        %1247 = vmatprep.subr.bf16.mxu0 0
        %1248 = vmatpush1.bf16.msra.mxu0 0
        %1249 = vmatprep.subr.bf16.mxu0 0
        %1250 = vmatpush1.bf16.msra.mxu0 0
        %1251 = vmatprep.subr.bf16.mxu0 0
        %1252 = vmatpush1.bf16.msra.mxu0 0
        %1253 = vmatprep.subr.bf16.mxu0 0
        %1254 = vmatpush1.bf16.msra.mxu0 0
        %1255 = vmatprep.subr.bf16.mxu0 0
        %1256 = vmatpush1.bf16.msra.mxu0 0
        %1257 = vmatprep.subr.bf16.mxu0 0
        %1258 = vmatpush1.bf16.msra.mxu0 0
        %1259 = vmatprep.subr.bf16.mxu0 0
        %1260 = vmatpush1.bf16.msra.mxu0 0
        %1261 = vmatprep.subr.bf16.mxu0 0
        %1262 = vmatpush1.bf16.msra.mxu0 0
        %1263 = vmatprep.subr.bf16.mxu0 0
        %1264 = vmatpush1.bf16.msra.mxu0 0
        %1265 = vmatprep.mubr.bf16.mxu0 0
        %1266 = vmatmul.mubr.bf16.gmra.mrb[0].mxu0 %v1203
        %v1267 = vpop.f32.mrb[0].mxu0
        %v1268 = vadd.f32 0.0, %v1267
        %v1269 = vpop.f32.mrb[0].mxu0
        %v1270 = vadd.f32 0.0, %v1269
        %v1271 = vpop.f32.mrb[0].mxu0
        %v1272 = vadd.f32 0.0, %v1271
        %v1273 = vpop.f32.mrb[0].mxu0
        %v1274 = vadd.f32 0.0, %v1273
        %1275 = vmatprep.mubr.bf16.mxu0 0
        %1276 = vmatmul.mubr.bf16.gmra.mrb[0].mxu0 %v1206
        %v1277 = vpop.f32.mrb[0].mxu0
        %v1278 = vadd.f32 0.0, %v1277
        %v1279 = vpop.f32.mrb[0].mxu0
        %v1280 = vadd.f32 0.0, %v1279
        %v1281 = vpop.f32.mrb[0].mxu0
        %v1282 = vadd.f32 0.0, %v1281
        %v1283 = vpop.f32.mrb[0].mxu0
        %v1284 = vadd.f32 0.0, %v1283
        %1285 = vmatprep.mubr.bf16.mxu0 0
        %1286 = vmatmul.mubr.bf16.gmra.mrb[0].mxu0 %v1209
        %v1287 = vpop.f32.mrb[0].mxu0
        %v1288 = vadd.f32 0.0, %v1287
        %v1289 = vpop.f32.mrb[0].mxu0
        %v1290 = vadd.f32 0.0, %v1289
        %v1291 = vpop.f32.mrb[0].mxu0
        %v1292 = vadd.f32 0.0, %v1291
        %v1293 = vpop.f32.mrb[0].mxu0
        %v1294 = vadd.f32 0.0, %v1293
        %1295 = vmatprep.mubr.bf16.mxu0 0
        %1296 = vmatmul.mubr.bf16.gmra.mrb[0].mxu0 %v1212
        %v1297 = vpop.f32.mrb[0].mxu0
        %v1298 = vadd.f32 0.0, %v1297
        %v1299 = vpop.f32.mrb[0].mxu0
        %v1300 = vadd.f32 0.0, %v1299
        %v1301 = vpop.f32.mrb[0].mxu0
        %v1302 = vadd.f32 0.0, %v1301
        %v1303 = vpop.f32.mrb[0].mxu0
        %v1304 = vadd.f32 0.0, %v1303
        %1305 = vmatprep.mubr.bf16.mxu0 0
        %1306 = vmatmul.mubr.bf16.gmra.mrb[0].mxu0 %v1215
        %v1307 = vpop.f32.mrb[0].mxu0
        %v1308 = vadd.f32 0.0, %v1307
        %v1309 = vpop.f32.mrb[0].mxu0
        %v1310 = vadd.f32 0.0, %v1309
        %v1311 = vpop.f32.mrb[0].mxu0
        %v1312 = vadd.f32 0.0, %v1311
        %v1313 = vpop.f32.mrb[0].mxu0
        %v1314 = vadd.f32 0.0, %v1313
        %1315 = vmatprep.mubr.bf16.mxu0 0
        %1316 = vmatmul.mubr.bf16.gmra.mrb[0].mxu0 %v1218
        %v1317 = vpop.f32.mrb[0].mxu0
        %v1318 = vadd.f32 0.0, %v1317
        %v1319 = vpop.f32.mrb[0].mxu0
        %v1320 = vadd.f32 0.0, %v1319
        %v1321 = vpop.f32.mrb[0].mxu0
        %v1322 = vadd.f32 0.0, %v1321
        %v1323 = vpop.f32.mrb[0].mxu0
        %v1324 = vadd.f32 0.0, %v1323
        %1325 = vmatprep.mubr.bf16.mxu0 0
        %1326 = vmatmul.mubr.bf16.gmra.mrb[0].mxu0 %v1221
        %v1327 = vpop.f32.mrb[0].mxu0
        %v1328 = vadd.f32 0.0, %v1327
        %v1329 = vpop.f32.mrb[0].mxu0
        %v1330 = vadd.f32 0.0, %v1329
        %v1331 = vpop.f32.mrb[0].mxu0
        %v1332 = vadd.f32 0.0, %v1331
        %v1333 = vpop.f32.mrb[0].mxu0
        %v1334 = vadd.f32 0.0, %v1333
        %1335 = vmatprep.mubr.bf16.mxu0 0
        %1336 = vmatmul.mubr.bf16.gmra.mrb[0].mxu0 %v1224
        %v1337 = vpop.f32.mrb[0].mxu0
        %v1338 = vadd.f32 0.0, %v1337
        %v1339 = vpop.f32.mrb[0].mxu0
        %v1340 = vadd.f32 0.0, %v1339
        %v1341 = vpop.f32.mrb[0].mxu0
        %v1342 = vadd.f32 0.0, %v1341
        %v1343 = vpop.f32.mrb[0].mxu0
        %v1344 = vadd.f32 0.0, %v1343
        %1345 = vdwg.mxu0
        %1346 = vxpose.xlu0.c.b16.start [1/8] %v1066, 128
        %1347 = vxpose.xlu0.c.b16.cont [2/8] 0, 128
        %1348 = vxpose.xlu0.c.b16.cont [3/8] 0, 128
        %1349 = vxpose.xlu0.c.b16.cont [4/8] 0, 128
        %1350 = vxpose.xlu0.c.b16.cont [5/8] 0, 128
        %1351 = vxpose.xlu0.c.b16.cont [6/8] 0, 128
        %1352 = vxpose.xlu0.c.b16.cont [7/8] 0, 128
        %1353 = vxpose.xlu0.c.b16.end [8/8] 0, 128
        %v1354 = vpop.trf.xlu0
        %v1355 = vpop.trf.xlu0
        %v1356 = vpop.trf.xlu0
        %v1357 = vpop.trf.xlu0
        %v1358 = vpop.trf.xlu0
        %v1359 = vpop.trf.xlu0
        %v1360 = vpop.trf.xlu0
        %v1361 = vpop.trf.xlu0
        %v1363 = vsel %vm1201, %v1354, 0
        %v1366 = vsel %vm1201, %v1355, 0
        %v1369 = vsel %vm1201, %v1356, 0
        %v1372 = vsel %vm1201, %v1357, 0
        %v1375 = vsel %vm1201, %v1358, 0
        %v1378 = vsel %vm1201, %v1359, 0
        %v1381 = vsel %vm1201, %v1360, 0
        %v1384 = vsel %vm1201, %v1361, 0
        %v1387 = vsel %vm1226, %v1115, 0
        %v1390 = vsel %vm1226, %v1116, 0
        %1392 = vmatprep.subr.bf16.mxu0 %v1390
        %1393 = vmatpush1.bf16.msra.mxu0 %v1387
        %1394 = vmatprep.subr.bf16.mxu0 0
        %1395 = vmatpush1.bf16.msra.mxu0 0
        %1396 = vmatprep.subr.bf16.mxu0 0
        %1397 = vmatpush1.bf16.msra.mxu0 0
        %1398 = vmatprep.subr.bf16.mxu0 0
        %1399 = vmatpush1.bf16.msra.mxu0 0
        %1400 = vmatprep.subr.bf16.mxu0 0
        %1401 = vmatpush1.bf16.msra.mxu0 0
        %1402 = vmatprep.subr.bf16.mxu0 0
        %1403 = vmatpush1.bf16.msra.mxu0 0
        %1404 = vmatprep.subr.bf16.mxu0 0
        %1405 = vmatpush1.bf16.msra.mxu0 0
        %1406 = vmatprep.subr.bf16.mxu0 0
        %1407 = vmatpush1.bf16.msra.mxu0 0
        %1408 = vmatprep.subr.bf16.mxu0 0
        %1409 = vmatpush1.bf16.msra.mxu0 0
        %1410 = vmatprep.subr.bf16.mxu0 0
        %1411 = vmatpush1.bf16.msra.mxu0 0
        %1412 = vmatprep.subr.bf16.mxu0 0
        %1413 = vmatpush1.bf16.msra.mxu0 0
        %1414 = vmatprep.subr.bf16.mxu0 0
        %1415 = vmatpush1.bf16.msra.mxu0 0
        %1416 = vmatprep.subr.bf16.mxu0 0
        %1417 = vmatpush1.bf16.msra.mxu0 0
        %1418 = vmatprep.subr.bf16.mxu0 0
        %1419 = vmatpush1.bf16.msra.mxu0 0
        %1420 = vmatprep.subr.bf16.mxu0 0
        %1421 = vmatpush1.bf16.msra.mxu0 0
        %1422 = vmatprep.subr.bf16.mxu0 0
        %1423 = vmatpush1.bf16.msra.mxu0 0
        %1424 = vmatprep.mubr.bf16.mxu0 0
        %1425 = vmatmul.mubr.bf16.gmra.mrb[0].mxu0 %v1363
        %v1426 = vpop.f32.mrb[0].mxu0
        %v1427 = vadd.f32 0.0, %v1426
        %v1428 = vpop.f32.mrb[0].mxu0
        %v1429 = vadd.f32 0.0, %v1428
        %v1430 = vpop.f32.mrb[0].mxu0
        %v1431 = vadd.f32 0.0, %v1430
        %v1432 = vpop.f32.mrb[0].mxu0
        %v1433 = vadd.f32 0.0, %v1432
        %1434 = vmatprep.mubr.bf16.mxu0 0
        %1435 = vmatmul.mubr.bf16.gmra.mrb[0].mxu0 %v1366
        %v1436 = vpop.f32.mrb[0].mxu0
        %v1437 = vadd.f32 0.0, %v1436
        %v1438 = vpop.f32.mrb[0].mxu0
        %v1439 = vadd.f32 0.0, %v1438
        %v1440 = vpop.f32.mrb[0].mxu0
        %v1441 = vadd.f32 0.0, %v1440
        %v1442 = vpop.f32.mrb[0].mxu0
        %v1443 = vadd.f32 0.0, %v1442
        %1444 = vmatprep.mubr.bf16.mxu0 0
        %1445 = vmatmul.mubr.bf16.gmra.mrb[0].mxu0 %v1369
        %v1446 = vpop.f32.mrb[0].mxu0
        %v1447 = vadd.f32 0.0, %v1446
        %v1448 = vpop.f32.mrb[0].mxu0
        %v1449 = vadd.f32 0.0, %v1448
        %v1450 = vpop.f32.mrb[0].mxu0
        %v1451 = vadd.f32 0.0, %v1450
        %v1452 = vpop.f32.mrb[0].mxu0
        %v1453 = vadd.f32 0.0, %v1452
        %1454 = vmatprep.mubr.bf16.mxu0 0
        %1455 = vmatmul.mubr.bf16.gmra.mrb[0].mxu0 %v1372
        %v1456 = vpop.f32.mrb[0].mxu0
        %v1457 = vadd.f32 0.0, %v1456
        %v1458 = vpop.f32.mrb[0].mxu0
        %v1459 = vadd.f32 0.0, %v1458
        %v1460 = vpop.f32.mrb[0].mxu0
        %v1461 = vadd.f32 0.0, %v1460
        %v1462 = vpop.f32.mrb[0].mxu0
        %v1463 = vadd.f32 0.0, %v1462
        %1464 = vmatprep.mubr.bf16.mxu0 0
        %1465 = vmatmul.mubr.bf16.gmra.mrb[0].mxu0 %v1375
        %v1466 = vpop.f32.mrb[0].mxu0
        %v1467 = vadd.f32 0.0, %v1466
        %v1468 = vpop.f32.mrb[0].mxu0
        %v1469 = vadd.f32 0.0, %v1468
        %v1470 = vpop.f32.mrb[0].mxu0
        %v1471 = vadd.f32 0.0, %v1470
        %v1472 = vpop.f32.mrb[0].mxu0
        %v1473 = vadd.f32 0.0, %v1472
        %1474 = vmatprep.mubr.bf16.mxu0 0
        %1475 = vmatmul.mubr.bf16.gmra.mrb[0].mxu0 %v1378
        %v1476 = vpop.f32.mrb[0].mxu0
        %v1477 = vadd.f32 0.0, %v1476
        %v1478 = vpop.f32.mrb[0].mxu0
        %v1479 = vadd.f32 0.0, %v1478
        %v1480 = vpop.f32.mrb[0].mxu0
        %v1481 = vadd.f32 0.0, %v1480
        %v1482 = vpop.f32.mrb[0].mxu0
        %v1483 = vadd.f32 0.0, %v1482
        %1484 = vmatprep.mubr.bf16.mxu0 0
        %1485 = vmatmul.mubr.bf16.gmra.mrb[0].mxu0 %v1381
        %v1486 = vpop.f32.mrb[0].mxu0
        %v1487 = vadd.f32 0.0, %v1486
        %v1488 = vpop.f32.mrb[0].mxu0
        %v1489 = vadd.f32 0.0, %v1488
        %v1490 = vpop.f32.mrb[0].mxu0
        %v1491 = vadd.f32 0.0, %v1490
        %v1492 = vpop.f32.mrb[0].mxu0
        %v1493 = vadd.f32 0.0, %v1492
        %1494 = vmatprep.mubr.bf16.mxu0 0
        %1495 = vmatmul.mubr.bf16.gmra.mrb[0].mxu0 %v1384
        %v1496 = vpop.f32.mrb[0].mxu0
        %v1497 = vadd.f32 0.0, %v1496
        %v1498 = vpop.f32.mrb[0].mxu0
        %v1499 = vadd.f32 0.0, %v1498
        %v1500 = vpop.f32.mrb[0].mxu0
        %v1501 = vadd.f32 0.0, %v1500
        %v1502 = vpop.f32.mrb[0].mxu0
        %v1503 = vadd.f32 0.0, %v1502
        %1504 = vdwg.mxu0
        %1505 = vxpose.xlu0.c.b16.start [1/8] %v1067, 128
        %1506 = vxpose.xlu0.c.b16.cont [2/8] 0, 128
        %1507 = vxpose.xlu0.c.b16.cont [3/8] 0, 128
        %1508 = vxpose.xlu0.c.b16.cont [4/8] 0, 128
        %1509 = vxpose.xlu0.c.b16.cont [5/8] 0, 128
        %1510 = vxpose.xlu0.c.b16.cont [6/8] 0, 128
        %1511 = vxpose.xlu0.c.b16.cont [7/8] 0, 128
        %1512 = vxpose.xlu0.c.b16.end [8/8] 0, 128
        %v1513 = vpop.trf.xlu0
        %v1514 = vpop.trf.xlu0
        %v1515 = vpop.trf.xlu0
        %v1516 = vpop.trf.xlu0
        %v1517 = vpop.trf.xlu0
        %v1518 = vpop.trf.xlu0
        %v1519 = vpop.trf.xlu0
        %v1520 = vpop.trf.xlu0
        %v1522 = vsel %vm1201, %v1513, 0
        %v1525 = vsel %vm1201, %v1514, 0
        %v1528 = vsel %vm1201, %v1515, 0
        %v1531 = vsel %vm1201, %v1516, 0
        %v1534 = vsel %vm1201, %v1517, 0
        %v1537 = vsel %vm1201, %v1518, 0
        %v1540 = vsel %vm1201, %v1519, 0
        %v1543 = vsel %vm1201, %v1520, 0
        %v1546 = vsel %vm1226, %v1117, 0
        %v1549 = vsel %vm1226, %v1118, 0
        %1551 = vmatprep.subr.bf16.mxu0 %v1549
        %1552 = vmatpush1.bf16.msra.mxu0 %v1546
        %1553 = vmatprep.subr.bf16.mxu0 0
        %1554 = vmatpush1.bf16.msra.mxu0 0
        %1555 = vmatprep.subr.bf16.mxu0 0
        %1556 = vmatpush1.bf16.msra.mxu0 0
        %1557 = vmatprep.subr.bf16.mxu0 0
        %1558 = vmatpush1.bf16.msra.mxu0 0
        %1559 = vmatprep.subr.bf16.mxu0 0
        %1560 = vmatpush1.bf16.msra.mxu0 0
        %1561 = vmatprep.subr.bf16.mxu0 0
        %1562 = vmatpush1.bf16.msra.mxu0 0
        %1563 = vmatprep.subr.bf16.mxu0 0
        %1564 = vmatpush1.bf16.msra.mxu0 0
        %1565 = vmatprep.subr.bf16.mxu0 0
        %1566 = vmatpush1.bf16.msra.mxu0 0
        %1567 = vmatprep.subr.bf16.mxu0 0
        %1568 = vmatpush1.bf16.msra.mxu0 0
        %1569 = vmatprep.subr.bf16.mxu0 0
        %1570 = vmatpush1.bf16.msra.mxu0 0
        %1571 = vmatprep.subr.bf16.mxu0 0
        %1572 = vmatpush1.bf16.msra.mxu0 0
        %1573 = vmatprep.subr.bf16.mxu0 0
        %1574 = vmatpush1.bf16.msra.mxu0 0
        %1575 = vmatprep.subr.bf16.mxu0 0
        %1576 = vmatpush1.bf16.msra.mxu0 0
        %1577 = vmatprep.subr.bf16.mxu0 0
        %1578 = vmatpush1.bf16.msra.mxu0 0
        %1579 = vmatprep.subr.bf16.mxu0 0
        %1580 = vmatpush1.bf16.msra.mxu0 0
        %1581 = vmatprep.subr.bf16.mxu0 0
        %1582 = vmatpush1.bf16.msra.mxu0 0
        %1583 = vmatprep.mubr.bf16.mxu0 0
        %1584 = vmatmul.mubr.bf16.gmra.mrb[0].mxu0 %v1522
        %v1585 = vpop.f32.mrb[0].mxu0
        %v1586 = vadd.f32 0.0, %v1585
        %v1587 = vpop.f32.mrb[0].mxu0
        %v1588 = vadd.f32 0.0, %v1587
        %v1589 = vpop.f32.mrb[0].mxu0
        %v1590 = vadd.f32 0.0, %v1589
        %v1591 = vpop.f32.mrb[0].mxu0
        %v1592 = vadd.f32 0.0, %v1591
        %1593 = vmatprep.mubr.bf16.mxu0 0
        %1594 = vmatmul.mubr.bf16.gmra.mrb[0].mxu0 %v1525
        %v1595 = vpop.f32.mrb[0].mxu0
        %v1596 = vadd.f32 0.0, %v1595
        %v1597 = vpop.f32.mrb[0].mxu0
        %v1598 = vadd.f32 0.0, %v1597
        %v1599 = vpop.f32.mrb[0].mxu0
        %v1600 = vadd.f32 0.0, %v1599
        %v1601 = vpop.f32.mrb[0].mxu0
        %v1602 = vadd.f32 0.0, %v1601
        %1603 = vmatprep.mubr.bf16.mxu0 0
        %1604 = vmatmul.mubr.bf16.gmra.mrb[0].mxu0 %v1528
        %v1605 = vpop.f32.mrb[0].mxu0
        %v1606 = vadd.f32 0.0, %v1605
        %v1607 = vpop.f32.mrb[0].mxu0
        %v1608 = vadd.f32 0.0, %v1607
        %v1609 = vpop.f32.mrb[0].mxu0
        %v1610 = vadd.f32 0.0, %v1609
        %v1611 = vpop.f32.mrb[0].mxu0
        %v1612 = vadd.f32 0.0, %v1611
        %1613 = vmatprep.mubr.bf16.mxu0 0
        %1614 = vmatmul.mubr.bf16.gmra.mrb[0].mxu0 %v1531
        %v1615 = vpop.f32.mrb[0].mxu0
        %v1616 = vadd.f32 0.0, %v1615
        %v1617 = vpop.f32.mrb[0].mxu0
        %v1618 = vadd.f32 0.0, %v1617
        %v1619 = vpop.f32.mrb[0].mxu0
        %v1620 = vadd.f32 0.0, %v1619
        %v1621 = vpop.f32.mrb[0].mxu0
        %v1622 = vadd.f32 0.0, %v1621
        %1623 = vmatprep.mubr.bf16.mxu0 0
        %1624 = vmatmul.mubr.bf16.gmra.mrb[0].mxu0 %v1534
        %v1625 = vpop.f32.mrb[0].mxu0
        %v1626 = vadd.f32 0.0, %v1625
        %v1627 = vpop.f32.mrb[0].mxu0
        %v1628 = vadd.f32 0.0, %v1627
        %v1629 = vpop.f32.mrb[0].mxu0
        %v1630 = vadd.f32 0.0, %v1629
        %v1631 = vpop.f32.mrb[0].mxu0
        %v1632 = vadd.f32 0.0, %v1631
        %1633 = vmatprep.mubr.bf16.mxu0 0
        %1634 = vmatmul.mubr.bf16.gmra.mrb[0].mxu0 %v1537
        %v1635 = vpop.f32.mrb[0].mxu0
        %v1636 = vadd.f32 0.0, %v1635
        %v1637 = vpop.f32.mrb[0].mxu0
        %v1638 = vadd.f32 0.0, %v1637
        %v1639 = vpop.f32.mrb[0].mxu0
        %v1640 = vadd.f32 0.0, %v1639
        %v1641 = vpop.f32.mrb[0].mxu0
        %v1642 = vadd.f32 0.0, %v1641
        %1643 = vmatprep.mubr.bf16.mxu0 0
        %1644 = vmatmul.mubr.bf16.gmra.mrb[0].mxu0 %v1540
        %v1645 = vpop.f32.mrb[0].mxu0
        %v1646 = vadd.f32 0.0, %v1645
        %v1647 = vpop.f32.mrb[0].mxu0
        %v1648 = vadd.f32 0.0, %v1647
        %v1649 = vpop.f32.mrb[0].mxu0
        %v1650 = vadd.f32 0.0, %v1649
        %v1651 = vpop.f32.mrb[0].mxu0
        %v1652 = vadd.f32 0.0, %v1651
        %1653 = vmatprep.mubr.bf16.mxu0 0
        %1654 = vmatmul.mubr.bf16.gmra.mrb[0].mxu0 %v1543
        %v1655 = vpop.f32.mrb[0].mxu0
        %v1656 = vadd.f32 0.0, %v1655
        %v1657 = vpop.f32.mrb[0].mxu0
        %v1658 = vadd.f32 0.0, %v1657
        %v1659 = vpop.f32.mrb[0].mxu0
        %v1660 = vadd.f32 0.0, %v1659
        %v1661 = vpop.f32.mrb[0].mxu0
        %v1662 = vadd.f32 0.0, %v1661
        %1663 = vdwg.mxu0
        %1664 = vxpose.xlu0.c.b16.start [1/8] %v1068, 128
        %1665 = vxpose.xlu0.c.b16.cont [2/8] 0, 128
        %1666 = vxpose.xlu0.c.b16.cont [3/8] 0, 128
        %1667 = vxpose.xlu0.c.b16.cont [4/8] 0, 128
        %1668 = vxpose.xlu0.c.b16.cont [5/8] 0, 128
        %1669 = vxpose.xlu0.c.b16.cont [6/8] 0, 128
        %1670 = vxpose.xlu0.c.b16.cont [7/8] 0, 128
        %1671 = vxpose.xlu0.c.b16.end [8/8] 0, 128
        %v1672 = vpop.trf.xlu0
        %v1673 = vpop.trf.xlu0
        %v1674 = vpop.trf.xlu0
        %v1675 = vpop.trf.xlu0
        %v1676 = vpop.trf.xlu0
        %v1677 = vpop.trf.xlu0
        %v1678 = vpop.trf.xlu0
        %v1679 = vpop.trf.xlu0
        %v1681 = vsel %vm1201, %v1672, 0
        %v1684 = vsel %vm1201, %v1673, 0
        %v1687 = vsel %vm1201, %v1674, 0
        %v1690 = vsel %vm1201, %v1675, 0
        %v1693 = vsel %vm1201, %v1676, 0
        %v1696 = vsel %vm1201, %v1677, 0
        %v1699 = vsel %vm1201, %v1678, 0
        %v1702 = vsel %vm1201, %v1679, 0
        %v1705 = vsel %vm1226, %v1119, 0
        %v1708 = vsel %vm1226, %v1120, 0
        %1710 = vmatprep.subr.bf16.mxu0 %v1708
        %1711 = vmatpush1.bf16.msra.mxu0 %v1705
        %1712 = vmatprep.subr.bf16.mxu0 0
        %1713 = vmatpush1.bf16.msra.mxu0 0
        %1714 = vmatprep.subr.bf16.mxu0 0
        %1715 = vmatpush1.bf16.msra.mxu0 0
        %1716 = vmatprep.subr.bf16.mxu0 0
        %1717 = vmatpush1.bf16.msra.mxu0 0
        %1718 = vmatprep.subr.bf16.mxu0 0
        %1719 = vmatpush1.bf16.msra.mxu0 0
        %1720 = vmatprep.subr.bf16.mxu0 0
        %1721 = vmatpush1.bf16.msra.mxu0 0
        %1722 = vmatprep.subr.bf16.mxu0 0
        %1723 = vmatpush1.bf16.msra.mxu0 0
        %1724 = vmatprep.subr.bf16.mxu0 0
        %1725 = vmatpush1.bf16.msra.mxu0 0
        %1726 = vmatprep.subr.bf16.mxu0 0
        %1727 = vmatpush1.bf16.msra.mxu0 0
        %1728 = vmatprep.subr.bf16.mxu0 0
        %1729 = vmatpush1.bf16.msra.mxu0 0
        %1730 = vmatprep.subr.bf16.mxu0 0
        %1731 = vmatpush1.bf16.msra.mxu0 0
        %1732 = vmatprep.subr.bf16.mxu0 0
        %1733 = vmatpush1.bf16.msra.mxu0 0
        %1734 = vmatprep.subr.bf16.mxu0 0
        %1735 = vmatpush1.bf16.msra.mxu0 0
        %1736 = vmatprep.subr.bf16.mxu0 0
        %1737 = vmatpush1.bf16.msra.mxu0 0
        %1738 = vmatprep.subr.bf16.mxu0 0
        %1739 = vmatpush1.bf16.msra.mxu0 0
        %1740 = vmatprep.subr.bf16.mxu0 0
        %1741 = vmatpush1.bf16.msra.mxu0 0
        %1742 = vmatprep.mubr.bf16.mxu0 0
        %1743 = vmatmul.mubr.bf16.gmra.mrb[0].mxu0 %v1681
        %v1744 = vpop.f32.mrb[0].mxu0
        %v1745 = vadd.f32 0.0, %v1744
        %v1746 = vpop.f32.mrb[0].mxu0
        %v1747 = vadd.f32 0.0, %v1746
        %v1748 = vpop.f32.mrb[0].mxu0
        %v1749 = vadd.f32 0.0, %v1748
        %v1750 = vpop.f32.mrb[0].mxu0
        %v1751 = vadd.f32 0.0, %v1750
        %1752 = vmatprep.mubr.bf16.mxu0 0
        %1753 = vmatmul.mubr.bf16.gmra.mrb[0].mxu0 %v1684
        %v1754 = vpop.f32.mrb[0].mxu0
        %v1755 = vadd.f32 0.0, %v1754
        %v1756 = vpop.f32.mrb[0].mxu0
        %v1757 = vadd.f32 0.0, %v1756
        %v1758 = vpop.f32.mrb[0].mxu0
        %v1759 = vadd.f32 0.0, %v1758
        %v1760 = vpop.f32.mrb[0].mxu0
        %v1761 = vadd.f32 0.0, %v1760
        %1762 = vmatprep.mubr.bf16.mxu0 0
        %1763 = vmatmul.mubr.bf16.gmra.mrb[0].mxu0 %v1687
        %v1764 = vpop.f32.mrb[0].mxu0
        %v1765 = vadd.f32 0.0, %v1764
        %v1766 = vpop.f32.mrb[0].mxu0
        %v1767 = vadd.f32 0.0, %v1766
        %v1768 = vpop.f32.mrb[0].mxu0
        %v1769 = vadd.f32 0.0, %v1768
        %v1770 = vpop.f32.mrb[0].mxu0
        %v1771 = vadd.f32 0.0, %v1770
        %1772 = vmatprep.mubr.bf16.mxu0 0
        %1773 = vmatmul.mubr.bf16.gmra.mrb[0].mxu0 %v1690
        %v1774 = vpop.f32.mrb[0].mxu0
        %v1775 = vadd.f32 0.0, %v1774
        %v1776 = vpop.f32.mrb[0].mxu0
        %v1777 = vadd.f32 0.0, %v1776
        %v1778 = vpop.f32.mrb[0].mxu0
        %v1779 = vadd.f32 0.0, %v1778
        %v1780 = vpop.f32.mrb[0].mxu0
        %v1781 = vadd.f32 0.0, %v1780
        %1782 = vmatprep.mubr.bf16.mxu0 0
        %1783 = vmatmul.mubr.bf16.gmra.mrb[0].mxu0 %v1693
        %v1784 = vpop.f32.mrb[0].mxu0
        %v1785 = vadd.f32 0.0, %v1784
        %v1786 = vpop.f32.mrb[0].mxu0
        %v1787 = vadd.f32 0.0, %v1786
        %v1788 = vpop.f32.mrb[0].mxu0
        %v1789 = vadd.f32 0.0, %v1788
        %v1790 = vpop.f32.mrb[0].mxu0
        %v1791 = vadd.f32 0.0, %v1790
        %1792 = vmatprep.mubr.bf16.mxu0 0
        %1793 = vmatmul.mubr.bf16.gmra.mrb[0].mxu0 %v1696
        %v1794 = vpop.f32.mrb[0].mxu0
        %v1795 = vadd.f32 0.0, %v1794
        %v1796 = vpop.f32.mrb[0].mxu0
        %v1797 = vadd.f32 0.0, %v1796
        %v1798 = vpop.f32.mrb[0].mxu0
        %v1799 = vadd.f32 0.0, %v1798
        %v1800 = vpop.f32.mrb[0].mxu0
        %v1801 = vadd.f32 0.0, %v1800
        %1802 = vmatprep.mubr.bf16.mxu0 0
        %1803 = vmatmul.mubr.bf16.gmra.mrb[0].mxu0 %v1699
        %v1804 = vpop.f32.mrb[0].mxu0
        %v1805 = vadd.f32 0.0, %v1804
        %v1806 = vpop.f32.mrb[0].mxu0
        %v1807 = vadd.f32 0.0, %v1806
        %v1808 = vpop.f32.mrb[0].mxu0
        %v1809 = vadd.f32 0.0, %v1808
        %v1810 = vpop.f32.mrb[0].mxu0
        %v1811 = vadd.f32 0.0, %v1810
        %1812 = vmatprep.mubr.bf16.mxu0 0
        %1813 = vmatmul.mubr.bf16.gmra.mrb[0].mxu0 %v1702
        %v1814 = vpop.f32.mrb[0].mxu0
        %v1815 = vadd.f32 0.0, %v1814
        %v1816 = vpop.f32.mrb[0].mxu0
        %v1817 = vadd.f32 0.0, %v1816
        %v1818 = vpop.f32.mrb[0].mxu0
        %v1819 = vadd.f32 0.0, %v1818
        %v1820 = vpop.f32.mrb[0].mxu0
        %v1821 = vadd.f32 0.0, %v1820
        %1822 = vdwg.mxu0
        %1823 = vxpose.xlu0.c.b16.start [1/8] %v1069, 128
        %1824 = vxpose.xlu0.c.b16.cont [2/8] 0, 128
        %1825 = vxpose.xlu0.c.b16.cont [3/8] 0, 128
        %1826 = vxpose.xlu0.c.b16.cont [4/8] 0, 128
        %1827 = vxpose.xlu0.c.b16.cont [5/8] 0, 128
        %1828 = vxpose.xlu0.c.b16.cont [6/8] 0, 128
        %1829 = vxpose.xlu0.c.b16.cont [7/8] 0, 128
        %1830 = vxpose.xlu0.c.b16.end [8/8] 0, 128
        %v1831 = vpop.trf.xlu0
        %v1832 = vpop.trf.xlu0
        %v1833 = vpop.trf.xlu0
        %v1834 = vpop.trf.xlu0
        %v1835 = vpop.trf.xlu0
        %v1836 = vpop.trf.xlu0
        %v1837 = vpop.trf.xlu0
        %v1838 = vpop.trf.xlu0
        %v1840 = vsel %vm1201, %v1831, 0
        %v1843 = vsel %vm1201, %v1832, 0
        %v1846 = vsel %vm1201, %v1833, 0
        %v1849 = vsel %vm1201, %v1834, 0
        %v1852 = vsel %vm1201, %v1835, 0
        %v1855 = vsel %vm1201, %v1836, 0
        %v1858 = vsel %vm1201, %v1837, 0
        %v1861 = vsel %vm1201, %v1838, 0
        %v1864 = vsel %vm1226, %v1121, 0
        %v1867 = vsel %vm1226, %v1122, 0
        %1869 = vmatprep.subr.bf16.mxu0 %v1867
        %1870 = vmatpush1.bf16.msra.mxu0 %v1864
        %1871 = vmatprep.subr.bf16.mxu0 0
        %1872 = vmatpush1.bf16.msra.mxu0 0
        %1873 = vmatprep.subr.bf16.mxu0 0
        %1874 = vmatpush1.bf16.msra.mxu0 0
        %1875 = vmatprep.subr.bf16.mxu0 0
        %1876 = vmatpush1.bf16.msra.mxu0 0
        %1877 = vmatprep.subr.bf16.mxu0 0
        %1878 = vmatpush1.bf16.msra.mxu0 0
        %1879 = vmatprep.subr.bf16.mxu0 0
        %1880 = vmatpush1.bf16.msra.mxu0 0
        %1881 = vmatprep.subr.bf16.mxu0 0
        %1882 = vmatpush1.bf16.msra.mxu0 0
        %1883 = vmatprep.subr.bf16.mxu0 0
        %1884 = vmatpush1.bf16.msra.mxu0 0
        %1885 = vmatprep.subr.bf16.mxu0 0
        %1886 = vmatpush1.bf16.msra.mxu0 0
        %1887 = vmatprep.subr.bf16.mxu0 0
        %1888 = vmatpush1.bf16.msra.mxu0 0
        %1889 = vmatprep.subr.bf16.mxu0 0
        %1890 = vmatpush1.bf16.msra.mxu0 0
        %1891 = vmatprep.subr.bf16.mxu0 0
        %1892 = vmatpush1.bf16.msra.mxu0 0
        %1893 = vmatprep.subr.bf16.mxu0 0
        %1894 = vmatpush1.bf16.msra.mxu0 0
        %1895 = vmatprep.subr.bf16.mxu0 0
        %1896 = vmatpush1.bf16.msra.mxu0 0
        %1897 = vmatprep.subr.bf16.mxu0 0
        %1898 = vmatpush1.bf16.msra.mxu0 0
        %1899 = vmatprep.subr.bf16.mxu0 0
        %1900 = vmatpush1.bf16.msra.mxu0 0
        %1901 = vmatprep.mubr.bf16.mxu0 0
        %1902 = vmatmul.mubr.bf16.gmra.mrb[0].mxu0 %v1840
        %v1903 = vpop.f32.mrb[0].mxu0
        %v1904 = vadd.f32 0.0, %v1903
        %v1905 = vpop.f32.mrb[0].mxu0
        %v1906 = vadd.f32 0.0, %v1905
        %v1907 = vpop.f32.mrb[0].mxu0
        %v1908 = vadd.f32 0.0, %v1907
        %v1909 = vpop.f32.mrb[0].mxu0
        %v1910 = vadd.f32 0.0, %v1909
        %1911 = vmatprep.mubr.bf16.mxu0 0
        %1912 = vmatmul.mubr.bf16.gmra.mrb[0].mxu0 %v1843
        %v1913 = vpop.f32.mrb[0].mxu0
        %v1914 = vadd.f32 0.0, %v1913
        %v1915 = vpop.f32.mrb[0].mxu0
        %v1916 = vadd.f32 0.0, %v1915
        %v1917 = vpop.f32.mrb[0].mxu0
        %v1918 = vadd.f32 0.0, %v1917
        %v1919 = vpop.f32.mrb[0].mxu0
        %v1920 = vadd.f32 0.0, %v1919
        %1921 = vmatprep.mubr.bf16.mxu0 0
        %1922 = vmatmul.mubr.bf16.gmra.mrb[0].mxu0 %v1846
        %v1923 = vpop.f32.mrb[0].mxu0
        %v1924 = vadd.f32 0.0, %v1923
        %v1925 = vpop.f32.mrb[0].mxu0
        %v1926 = vadd.f32 0.0, %v1925
        %v1927 = vpop.f32.mrb[0].mxu0
        %v1928 = vadd.f32 0.0, %v1927
        %v1929 = vpop.f32.mrb[0].mxu0
        %v1930 = vadd.f32 0.0, %v1929
        %1931 = vmatprep.mubr.bf16.mxu0 0
        %1932 = vmatmul.mubr.bf16.gmra.mrb[0].mxu0 %v1849
        %v1933 = vpop.f32.mrb[0].mxu0
        %v1934 = vadd.f32 0.0, %v1933
        %v1935 = vpop.f32.mrb[0].mxu0
        %v1936 = vadd.f32 0.0, %v1935
        %v1937 = vpop.f32.mrb[0].mxu0
        %v1938 = vadd.f32 0.0, %v1937
        %v1939 = vpop.f32.mrb[0].mxu0
        %v1940 = vadd.f32 0.0, %v1939
        %1941 = vmatprep.mubr.bf16.mxu0 0
        %1942 = vmatmul.mubr.bf16.gmra.mrb[0].mxu0 %v1852
        %v1943 = vpop.f32.mrb[0].mxu0
        %v1944 = vadd.f32 0.0, %v1943
        %v1945 = vpop.f32.mrb[0].mxu0
        %v1946 = vadd.f32 0.0, %v1945
        %v1947 = vpop.f32.mrb[0].mxu0
        %v1948 = vadd.f32 0.0, %v1947
        %v1949 = vpop.f32.mrb[0].mxu0
        %v1950 = vadd.f32 0.0, %v1949
        %1951 = vmatprep.mubr.bf16.mxu0 0
        %1952 = vmatmul.mubr.bf16.gmra.mrb[0].mxu0 %v1855
        %v1953 = vpop.f32.mrb[0].mxu0
        %v1954 = vadd.f32 0.0, %v1953
        %v1955 = vpop.f32.mrb[0].mxu0
        %v1956 = vadd.f32 0.0, %v1955
        %v1957 = vpop.f32.mrb[0].mxu0
        %v1958 = vadd.f32 0.0, %v1957
        %v1959 = vpop.f32.mrb[0].mxu0
        %v1960 = vadd.f32 0.0, %v1959
        %1961 = vmatprep.mubr.bf16.mxu0 0
        %1962 = vmatmul.mubr.bf16.gmra.mrb[0].mxu0 %v1858
        %v1963 = vpop.f32.mrb[0].mxu0
        %v1964 = vadd.f32 0.0, %v1963
        %v1965 = vpop.f32.mrb[0].mxu0
        %v1966 = vadd.f32 0.0, %v1965
        %v1967 = vpop.f32.mrb[0].mxu0
        %v1968 = vadd.f32 0.0, %v1967
        %v1969 = vpop.f32.mrb[0].mxu0
        %v1970 = vadd.f32 0.0, %v1969
        %1971 = vmatprep.mubr.bf16.mxu0 0
        %1972 = vmatmul.mubr.bf16.gmra.mrb[0].mxu0 %v1861
        %v1973 = vpop.f32.mrb[0].mxu0
        %v1974 = vadd.f32 0.0, %v1973
        %v1975 = vpop.f32.mrb[0].mxu0
        %v1976 = vadd.f32 0.0, %v1975
        %v1977 = vpop.f32.mrb[0].mxu0
        %v1978 = vadd.f32 0.0, %v1977
        %v1979 = vpop.f32.mrb[0].mxu0
        %v1980 = vadd.f32 0.0, %v1979
        %1981 = vdwg.mxu0
        %1982 = vxpose.xlu0.c.b16.start [1/8] %v1070, 128
        %1983 = vxpose.xlu0.c.b16.cont [2/8] 0, 128
        %1984 = vxpose.xlu0.c.b16.cont [3/8] 0, 128
        %1985 = vxpose.xlu0.c.b16.cont [4/8] 0, 128
        %1986 = vxpose.xlu0.c.b16.cont [5/8] 0, 128
        %1987 = vxpose.xlu0.c.b16.cont [6/8] 0, 128
        %1988 = vxpose.xlu0.c.b16.cont [7/8] 0, 128
        %1989 = vxpose.xlu0.c.b16.end [8/8] 0, 128
        %v1990 = vpop.trf.xlu0
        %v1991 = vpop.trf.xlu0
        %v1992 = vpop.trf.xlu0
        %v1993 = vpop.trf.xlu0
        %v1994 = vpop.trf.xlu0
        %v1995 = vpop.trf.xlu0
        %v1996 = vpop.trf.xlu0
        %v1997 = vpop.trf.xlu0
        %v1999 = vsel %vm1201, %v1990, 0
        %v2002 = vsel %vm1201, %v1991, 0
        %v2005 = vsel %vm1201, %v1992, 0
        %v2008 = vsel %vm1201, %v1993, 0
        %v2011 = vsel %vm1201, %v1994, 0
        %v2014 = vsel %vm1201, %v1995, 0
        %v2017 = vsel %vm1201, %v1996, 0
        %v2020 = vsel %vm1201, %v1997, 0
        %v2023 = vsel %vm1226, %v1123, 0
        %v2026 = vsel %vm1226, %v1124, 0
        %2028 = vmatprep.subr.bf16.mxu0 %v2026
        %2029 = vmatpush1.bf16.msra.mxu0 %v2023
        %2030 = vmatprep.subr.bf16.mxu0 0
        %2031 = vmatpush1.bf16.msra.mxu0 0
        %2032 = vmatprep.subr.bf16.mxu0 0
        %2033 = vmatpush1.bf16.msra.mxu0 0
        %2034 = vmatprep.subr.bf16.mxu0 0
        %2035 = vmatpush1.bf16.msra.mxu0 0
        %2036 = vmatprep.subr.bf16.mxu0 0
        %2037 = vmatpush1.bf16.msra.mxu0 0
        %2038 = vmatprep.subr.bf16.mxu0 0
        %2039 = vmatpush1.bf16.msra.mxu0 0
        %2040 = vmatprep.subr.bf16.mxu0 0
        %2041 = vmatpush1.bf16.msra.mxu0 0
        %2042 = vmatprep.subr.bf16.mxu0 0
        %2043 = vmatpush1.bf16.msra.mxu0 0
        %2044 = vmatprep.subr.bf16.mxu0 0
        %2045 = vmatpush1.bf16.msra.mxu0 0
        %2046 = vmatprep.subr.bf16.mxu0 0
        %2047 = vmatpush1.bf16.msra.mxu0 0
        %2048 = vmatprep.subr.bf16.mxu0 0
        %2049 = vmatpush1.bf16.msra.mxu0 0
        %2050 = vmatprep.subr.bf16.mxu0 0
        %2051 = vmatpush1.bf16.msra.mxu0 0
        %2052 = vmatprep.subr.bf16.mxu0 0
        %2053 = vmatpush1.bf16.msra.mxu0 0
        %2054 = vmatprep.subr.bf16.mxu0 0
        %2055 = vmatpush1.bf16.msra.mxu0 0
        %2056 = vmatprep.subr.bf16.mxu0 0
        %2057 = vmatpush1.bf16.msra.mxu0 0
        %2058 = vmatprep.subr.bf16.mxu0 0
        %2059 = vmatpush1.bf16.msra.mxu0 0
        %2060 = vmatprep.mubr.bf16.mxu0 0
        %2061 = vmatmul.mubr.bf16.gmra.mrb[0].mxu0 %v1999
        %v2062 = vpop.f32.mrb[0].mxu0
        %v2063 = vadd.f32 0.0, %v2062
        %v2064 = vpop.f32.mrb[0].mxu0
        %v2065 = vadd.f32 0.0, %v2064
        %v2066 = vpop.f32.mrb[0].mxu0
        %v2067 = vadd.f32 0.0, %v2066
        %v2068 = vpop.f32.mrb[0].mxu0
        %v2069 = vadd.f32 0.0, %v2068
        %2070 = vmatprep.mubr.bf16.mxu0 0
        %2071 = vmatmul.mubr.bf16.gmra.mrb[0].mxu0 %v2002
        %v2072 = vpop.f32.mrb[0].mxu0
        %v2073 = vadd.f32 0.0, %v2072
        %v2074 = vpop.f32.mrb[0].mxu0
        %v2075 = vadd.f32 0.0, %v2074
        %v2076 = vpop.f32.mrb[0].mxu0
        %v2077 = vadd.f32 0.0, %v2076
        %v2078 = vpop.f32.mrb[0].mxu0
        %v2079 = vadd.f32 0.0, %v2078
        %2080 = vmatprep.mubr.bf16.mxu0 0
        %2081 = vmatmul.mubr.bf16.gmra.mrb[0].mxu0 %v2005
        %v2082 = vpop.f32.mrb[0].mxu0
        %v2083 = vadd.f32 0.0, %v2082
        %v2084 = vpop.f32.mrb[0].mxu0
        %v2085 = vadd.f32 0.0, %v2084
        %v2086 = vpop.f32.mrb[0].mxu0
        %v2087 = vadd.f32 0.0, %v2086
        %v2088 = vpop.f32.mrb[0].mxu0
        %v2089 = vadd.f32 0.0, %v2088
        %2090 = vmatprep.mubr.bf16.mxu0 0
        %2091 = vmatmul.mubr.bf16.gmra.mrb[0].mxu0 %v2008
        %v2092 = vpop.f32.mrb[0].mxu0
        %v2093 = vadd.f32 0.0, %v2092
        %v2094 = vpop.f32.mrb[0].mxu0
        %v2095 = vadd.f32 0.0, %v2094
        %v2096 = vpop.f32.mrb[0].mxu0
        %v2097 = vadd.f32 0.0, %v2096
        %v2098 = vpop.f32.mrb[0].mxu0
        %v2099 = vadd.f32 0.0, %v2098
        %2100 = vmatprep.mubr.bf16.mxu0 0
        %2101 = vmatmul.mubr.bf16.gmra.mrb[0].mxu0 %v2011
        %v2102 = vpop.f32.mrb[0].mxu0
        %v2103 = vadd.f32 0.0, %v2102
        %v2104 = vpop.f32.mrb[0].mxu0
        %v2105 = vadd.f32 0.0, %v2104
        %v2106 = vpop.f32.mrb[0].mxu0
        %v2107 = vadd.f32 0.0, %v2106
        %v2108 = vpop.f32.mrb[0].mxu0
        %v2109 = vadd.f32 0.0, %v2108
        %2110 = vmatprep.mubr.bf16.mxu0 0
        %2111 = vmatmul.mubr.bf16.gmra.mrb[0].mxu0 %v2014
        %v2112 = vpop.f32.mrb[0].mxu0
        %v2113 = vadd.f32 0.0, %v2112
        %v2114 = vpop.f32.mrb[0].mxu0
        %v2115 = vadd.f32 0.0, %v2114
        %v2116 = vpop.f32.mrb[0].mxu0
        %v2117 = vadd.f32 0.0, %v2116
        %v2118 = vpop.f32.mrb[0].mxu0
        %v2119 = vadd.f32 0.0, %v2118
        %2120 = vmatprep.mubr.bf16.mxu0 0
        %2121 = vmatmul.mubr.bf16.gmra.mrb[0].mxu0 %v2017
        %v2122 = vpop.f32.mrb[0].mxu0
        %v2123 = vadd.f32 0.0, %v2122
        %v2124 = vpop.f32.mrb[0].mxu0
        %v2125 = vadd.f32 0.0, %v2124
        %v2126 = vpop.f32.mrb[0].mxu0
        %v2127 = vadd.f32 0.0, %v2126
        %v2128 = vpop.f32.mrb[0].mxu0
        %v2129 = vadd.f32 0.0, %v2128
        %2130 = vmatprep.mubr.bf16.mxu0 0
        %2131 = vmatmul.mubr.bf16.gmra.mrb[0].mxu0 %v2020
        %v2132 = vpop.f32.mrb[0].mxu0
        %v2133 = vadd.f32 0.0, %v2132
        %v2134 = vpop.f32.mrb[0].mxu0
        %v2135 = vadd.f32 0.0, %v2134
        %v2136 = vpop.f32.mrb[0].mxu0
        %v2137 = vadd.f32 0.0, %v2136
        %v2138 = vpop.f32.mrb[0].mxu0
        %v2139 = vadd.f32 0.0, %v2138
        %2140 = vdwg.mxu0
        %2141 = vxpose.xlu0.c.b16.start [1/8] %v1071, 128
        %2142 = vxpose.xlu0.c.b16.cont [2/8] 0, 128
        %2143 = vxpose.xlu0.c.b16.cont [3/8] 0, 128
        %2144 = vxpose.xlu0.c.b16.cont [4/8] 0, 128
        %2145 = vxpose.xlu0.c.b16.cont [5/8] 0, 128
        %2146 = vxpose.xlu0.c.b16.cont [6/8] 0, 128
        %2147 = vxpose.xlu0.c.b16.cont [7/8] 0, 128
        %2148 = vxpose.xlu0.c.b16.end [8/8] 0, 128
        %v2149 = vpop.trf.xlu0
        %v2150 = vpop.trf.xlu0
        %v2151 = vpop.trf.xlu0
        %v2152 = vpop.trf.xlu0
        %v2153 = vpop.trf.xlu0
        %v2154 = vpop.trf.xlu0
        %v2155 = vpop.trf.xlu0
        %v2156 = vpop.trf.xlu0
        %v2158 = vsel %vm1201, %v2149, 0
        %v2161 = vsel %vm1201, %v2150, 0
        %v2164 = vsel %vm1201, %v2151, 0
        %v2167 = vsel %vm1201, %v2152, 0
        %v2170 = vsel %vm1201, %v2153, 0
        %v2173 = vsel %vm1201, %v2154, 0
        %v2176 = vsel %vm1201, %v2155, 0
        %v2179 = vsel %vm1201, %v2156, 0
        %v2182 = vsel %vm1226, %v1125, 0
        %v2185 = vsel %vm1226, %v1126, 0
        %2187 = vmatprep.subr.bf16.mxu0 %v2185
        %2188 = vmatpush1.bf16.msra.mxu0 %v2182
        %2189 = vmatprep.subr.bf16.mxu0 0
        %2190 = vmatpush1.bf16.msra.mxu0 0
        %2191 = vmatprep.subr.bf16.mxu0 0
        %2192 = vmatpush1.bf16.msra.mxu0 0
        %2193 = vmatprep.subr.bf16.mxu0 0
        %2194 = vmatpush1.bf16.msra.mxu0 0
        %2195 = vmatprep.subr.bf16.mxu0 0
        %2196 = vmatpush1.bf16.msra.mxu0 0
        %2197 = vmatprep.subr.bf16.mxu0 0
        %2198 = vmatpush1.bf16.msra.mxu0 0
        %2199 = vmatprep.subr.bf16.mxu0 0
        %2200 = vmatpush1.bf16.msra.mxu0 0
        %2201 = vmatprep.subr.bf16.mxu0 0
        %2202 = vmatpush1.bf16.msra.mxu0 0
        %2203 = vmatprep.subr.bf16.mxu0 0
        %2204 = vmatpush1.bf16.msra.mxu0 0
        %2205 = vmatprep.subr.bf16.mxu0 0
        %2206 = vmatpush1.bf16.msra.mxu0 0
        %2207 = vmatprep.subr.bf16.mxu0 0
        %2208 = vmatpush1.bf16.msra.mxu0 0
        %2209 = vmatprep.subr.bf16.mxu0 0
        %2210 = vmatpush1.bf16.msra.mxu0 0
        %2211 = vmatprep.subr.bf16.mxu0 0
        %2212 = vmatpush1.bf16.msra.mxu0 0
        %2213 = vmatprep.subr.bf16.mxu0 0
        %2214 = vmatpush1.bf16.msra.mxu0 0
        %2215 = vmatprep.subr.bf16.mxu0 0
        %2216 = vmatpush1.bf16.msra.mxu0 0
        %2217 = vmatprep.subr.bf16.mxu0 0
        %2218 = vmatpush1.bf16.msra.mxu0 0
        %2219 = vmatprep.mubr.bf16.mxu0 0
        %2220 = vmatmul.mubr.bf16.gmra.mrb[0].mxu0 %v2158
        %v2221 = vpop.f32.mrb[0].mxu0
        %v2222 = vadd.f32 0.0, %v2221
        %v2223 = vpop.f32.mrb[0].mxu0
        %v2224 = vadd.f32 0.0, %v2223
        %v2225 = vpop.f32.mrb[0].mxu0
        %v2226 = vadd.f32 0.0, %v2225
        %v2227 = vpop.f32.mrb[0].mxu0
        %v2228 = vadd.f32 0.0, %v2227
        %2229 = vmatprep.mubr.bf16.mxu0 0
        %2230 = vmatmul.mubr.bf16.gmra.mrb[0].mxu0 %v2161
        %v2231 = vpop.f32.mrb[0].mxu0
        %v2232 = vadd.f32 0.0, %v2231
        %v2233 = vpop.f32.mrb[0].mxu0
        %v2234 = vadd.f32 0.0, %v2233
        %v2235 = vpop.f32.mrb[0].mxu0
        %v2236 = vadd.f32 0.0, %v2235
        %v2237 = vpop.f32.mrb[0].mxu0
        %v2238 = vadd.f32 0.0, %v2237
        %2239 = vmatprep.mubr.bf16.mxu0 0
        %2240 = vmatmul.mubr.bf16.gmra.mrb[0].mxu0 %v2164
        %v2241 = vpop.f32.mrb[0].mxu0
        %v2242 = vadd.f32 0.0, %v2241
        %v2243 = vpop.f32.mrb[0].mxu0
        %v2244 = vadd.f32 0.0, %v2243
        %v2245 = vpop.f32.mrb[0].mxu0
        %v2246 = vadd.f32 0.0, %v2245
        %v2247 = vpop.f32.mrb[0].mxu0
        %v2248 = vadd.f32 0.0, %v2247
        %2249 = vmatprep.mubr.bf16.mxu0 0
        %2250 = vmatmul.mubr.bf16.gmra.mrb[0].mxu0 %v2167
        %v2251 = vpop.f32.mrb[0].mxu0
        %v2252 = vadd.f32 0.0, %v2251
        %v2253 = vpop.f32.mrb[0].mxu0
        %v2254 = vadd.f32 0.0, %v2253
        %v2255 = vpop.f32.mrb[0].mxu0
        %v2256 = vadd.f32 0.0, %v2255
        %v2257 = vpop.f32.mrb[0].mxu0
        %v2258 = vadd.f32 0.0, %v2257
        %2259 = vmatprep.mubr.bf16.mxu0 0
        %2260 = vmatmul.mubr.bf16.gmra.mrb[0].mxu0 %v2170
        %v2261 = vpop.f32.mrb[0].mxu0
        %v2262 = vadd.f32 0.0, %v2261
        %v2263 = vpop.f32.mrb[0].mxu0
        %v2264 = vadd.f32 0.0, %v2263
        %v2265 = vpop.f32.mrb[0].mxu0
        %v2266 = vadd.f32 0.0, %v2265
        %v2267 = vpop.f32.mrb[0].mxu0
        %v2268 = vadd.f32 0.0, %v2267
        %2269 = vmatprep.mubr.bf16.mxu0 0
        %2270 = vmatmul.mubr.bf16.gmra.mrb[0].mxu0 %v2173
        %v2271 = vpop.f32.mrb[0].mxu0
        %v2272 = vadd.f32 0.0, %v2271
        %v2273 = vpop.f32.mrb[0].mxu0
        %v2274 = vadd.f32 0.0, %v2273
        %v2275 = vpop.f32.mrb[0].mxu0
        %v2276 = vadd.f32 0.0, %v2275
        %v2277 = vpop.f32.mrb[0].mxu0
        %v2278 = vadd.f32 0.0, %v2277
        %2279 = vmatprep.mubr.bf16.mxu0 0
        %2280 = vmatmul.mubr.bf16.gmra.mrb[0].mxu0 %v2176
        %v2281 = vpop.f32.mrb[0].mxu0
        %v2282 = vadd.f32 0.0, %v2281
        %v2283 = vpop.f32.mrb[0].mxu0
        %v2284 = vadd.f32 0.0, %v2283
        %v2285 = vpop.f32.mrb[0].mxu0
        %v2286 = vadd.f32 0.0, %v2285
        %v2287 = vpop.f32.mrb[0].mxu0
        %v2288 = vadd.f32 0.0, %v2287
        %2289 = vmatprep.mubr.bf16.mxu0 0
        %2290 = vmatmul.mubr.bf16.gmra.mrb[0].mxu0 %v2179
        %v2291 = vpop.f32.mrb[0].mxu0
        %v2292 = vadd.f32 0.0, %v2291
        %v2293 = vpop.f32.mrb[0].mxu0
        %v2294 = vadd.f32 0.0, %v2293
        %v2295 = vpop.f32.mrb[0].mxu0
        %v2296 = vadd.f32 0.0, %v2295
        %v2297 = vpop.f32.mrb[0].mxu0
        %v2298 = vadd.f32 0.0, %v2297
        %2299 = vdwg.mxu0
        %2300 = vxpose.xlu0.c.b16.start [1/8] %v1072, 128
        %2301 = vxpose.xlu0.c.b16.cont [2/8] 0, 128
        %2302 = vxpose.xlu0.c.b16.cont [3/8] 0, 128
        %2303 = vxpose.xlu0.c.b16.cont [4/8] 0, 128
        %2304 = vxpose.xlu0.c.b16.cont [5/8] 0, 128
        %2305 = vxpose.xlu0.c.b16.cont [6/8] 0, 128
        %2306 = vxpose.xlu0.c.b16.cont [7/8] 0, 128
        %2307 = vxpose.xlu0.c.b16.end [8/8] 0, 128
        %v2308 = vpop.trf.xlu0
        %v2309 = vpop.trf.xlu0
        %v2310 = vpop.trf.xlu0
        %v2311 = vpop.trf.xlu0
        %v2312 = vpop.trf.xlu0
        %v2313 = vpop.trf.xlu0
        %v2314 = vpop.trf.xlu0
        %v2315 = vpop.trf.xlu0
        %v2317 = vsel %vm1201, %v2308, 0
        %v2320 = vsel %vm1201, %v2309, 0
        %v2323 = vsel %vm1201, %v2310, 0
        %v2326 = vsel %vm1201, %v2311, 0
        %v2329 = vsel %vm1201, %v2312, 0
        %v2332 = vsel %vm1201, %v2313, 0
        %v2335 = vsel %vm1201, %v2314, 0
        %v2338 = vsel %vm1201, %v2315, 0
        %v2341 = vsel %vm1226, %v1127, 0
        %v2344 = vsel %vm1226, %v1128, 0
        %2346 = vmatprep.subr.bf16.mxu0 %v2344
        %2347 = vmatpush1.bf16.msra.mxu0 %v2341
        %2348 = vmatprep.subr.bf16.mxu0 0
        %2349 = vmatpush1.bf16.msra.mxu0 0
        %2350 = vmatprep.subr.bf16.mxu0 0
        %2351 = vmatpush1.bf16.msra.mxu0 0
        %2352 = vmatprep.subr.bf16.mxu0 0
        %2353 = vmatpush1.bf16.msra.mxu0 0
        %2354 = vmatprep.subr.bf16.mxu0 0
        %2355 = vmatpush1.bf16.msra.mxu0 0
        %2356 = vmatprep.subr.bf16.mxu0 0
        %2357 = vmatpush1.bf16.msra.mxu0 0
        %2358 = vmatprep.subr.bf16.mxu0 0
        %2359 = vmatpush1.bf16.msra.mxu0 0
        %2360 = vmatprep.subr.bf16.mxu0 0
        %2361 = vmatpush1.bf16.msra.mxu0 0
        %2362 = vmatprep.subr.bf16.mxu0 0
        %2363 = vmatpush1.bf16.msra.mxu0 0
        %2364 = vmatprep.subr.bf16.mxu0 0
        %2365 = vmatpush1.bf16.msra.mxu0 0
        %2366 = vmatprep.subr.bf16.mxu0 0
        %2367 = vmatpush1.bf16.msra.mxu0 0
        %2368 = vmatprep.subr.bf16.mxu0 0
        %2369 = vmatpush1.bf16.msra.mxu0 0
        %2370 = vmatprep.subr.bf16.mxu0 0
        %2371 = vmatpush1.bf16.msra.mxu0 0
        %2372 = vmatprep.subr.bf16.mxu0 0
        %2373 = vmatpush1.bf16.msra.mxu0 0
        %2374 = vmatprep.subr.bf16.mxu0 0
        %2375 = vmatpush1.bf16.msra.mxu0 0
        %2376 = vmatprep.subr.bf16.mxu0 0
        %2377 = vmatpush1.bf16.msra.mxu0 0
        %2378 = vmatprep.mubr.bf16.mxu0 0
        %2379 = vmatmul.mubr.bf16.gmra.mrb[0].mxu0 %v2317
        %v2380 = vpop.f32.mrb[0].mxu0
        %v2381 = vadd.f32 0.0, %v2380
        %v2382 = vpop.f32.mrb[0].mxu0
        %v2383 = vadd.f32 0.0, %v2382
        %v2384 = vpop.f32.mrb[0].mxu0
        %v2385 = vadd.f32 0.0, %v2384
        %v2386 = vpop.f32.mrb[0].mxu0
        %v2387 = vadd.f32 0.0, %v2386
        %2388 = vmatprep.mubr.bf16.mxu0 0
        %2389 = vmatmul.mubr.bf16.gmra.mrb[0].mxu0 %v2320
        %v2390 = vpop.f32.mrb[0].mxu0
        %v2391 = vadd.f32 0.0, %v2390
        %v2392 = vpop.f32.mrb[0].mxu0
        %v2393 = vadd.f32 0.0, %v2392
        %v2394 = vpop.f32.mrb[0].mxu0
        %v2395 = vadd.f32 0.0, %v2394
        %v2396 = vpop.f32.mrb[0].mxu0
        %v2397 = vadd.f32 0.0, %v2396
        %2398 = vmatprep.mubr.bf16.mxu0 0
        %2399 = vmatmul.mubr.bf16.gmra.mrb[0].mxu0 %v2323
        %v2400 = vpop.f32.mrb[0].mxu0
        %v2401 = vadd.f32 0.0, %v2400
        %v2402 = vpop.f32.mrb[0].mxu0
        %v2403 = vadd.f32 0.0, %v2402
        %v2404 = vpop.f32.mrb[0].mxu0
        %v2405 = vadd.f32 0.0, %v2404
        %v2406 = vpop.f32.mrb[0].mxu0
        %v2407 = vadd.f32 0.0, %v2406
        %2408 = vmatprep.mubr.bf16.mxu0 0
        %2409 = vmatmul.mubr.bf16.gmra.mrb[0].mxu0 %v2326
        %v2410 = vpop.f32.mrb[0].mxu0
        %v2411 = vadd.f32 0.0, %v2410
        %v2412 = vpop.f32.mrb[0].mxu0
        %v2413 = vadd.f32 0.0, %v2412
        %v2414 = vpop.f32.mrb[0].mxu0
        %v2415 = vadd.f32 0.0, %v2414
        %v2416 = vpop.f32.mrb[0].mxu0
        %v2417 = vadd.f32 0.0, %v2416
        %2418 = vmatprep.mubr.bf16.mxu0 0
        %2419 = vmatmul.mubr.bf16.gmra.mrb[0].mxu0 %v2329
        %v2420 = vpop.f32.mrb[0].mxu0
        %v2421 = vadd.f32 0.0, %v2420
        %v2422 = vpop.f32.mrb[0].mxu0
        %v2423 = vadd.f32 0.0, %v2422
        %v2424 = vpop.f32.mrb[0].mxu0
        %v2425 = vadd.f32 0.0, %v2424
        %v2426 = vpop.f32.mrb[0].mxu0
        %v2427 = vadd.f32 0.0, %v2426
        %2428 = vmatprep.mubr.bf16.mxu0 0
        %2429 = vmatmul.mubr.bf16.gmra.mrb[0].mxu0 %v2332
        %v2430 = vpop.f32.mrb[0].mxu0
        %v2431 = vadd.f32 0.0, %v2430
        %v2432 = vpop.f32.mrb[0].mxu0
        %v2433 = vadd.f32 0.0, %v2432
        %v2434 = vpop.f32.mrb[0].mxu0
        %v2435 = vadd.f32 0.0, %v2434
        %v2436 = vpop.f32.mrb[0].mxu0
        %v2437 = vadd.f32 0.0, %v2436
        %2438 = vmatprep.mubr.bf16.mxu0 0
        %2439 = vmatmul.mubr.bf16.gmra.mrb[0].mxu0 %v2335
        %v2440 = vpop.f32.mrb[0].mxu0
        %v2441 = vadd.f32 0.0, %v2440
        %v2442 = vpop.f32.mrb[0].mxu0
        %v2443 = vadd.f32 0.0, %v2442
        %v2444 = vpop.f32.mrb[0].mxu0
        %v2445 = vadd.f32 0.0, %v2444
        %v2446 = vpop.f32.mrb[0].mxu0
        %v2447 = vadd.f32 0.0, %v2446
        %2448 = vmatprep.mubr.bf16.mxu0 0
        %2449 = vmatmul.mubr.bf16.gmra.mrb[0].mxu0 %v2338
        %v2450 = vpop.f32.mrb[0].mxu0
        %v2451 = vadd.f32 0.0, %v2450
        %v2452 = vpop.f32.mrb[0].mxu0
        %v2453 = vadd.f32 0.0, %v2452
        %v2454 = vpop.f32.mrb[0].mxu0
        %v2455 = vadd.f32 0.0, %v2454
        %v2456 = vpop.f32.mrb[0].mxu0
        %v2457 = vadd.f32 0.0, %v2456
        %2458 = vdwg.mxu0
        %v2459 = vmax.f32 %v1268, %v1270
        %2460 = vmax.xlane.f32.xlu0 %v2459
        %v2461 = vpop.xlane.xlu0 %2460
        %v2462 = vmax.f32 %v1272, %v1274
        %2463 = vmax.xlane.f32.xlu0 %v2462
        %v2464 = vpop.xlane.xlu0 %2463
        %v2465 = vmax.f32 %v1278, %v1280
        %2466 = vmax.xlane.f32.xlu0 %v2465
        %v2467 = vpop.xlane.xlu0 %2466
        %v2468 = vmax.f32 %v1282, %v1284
        %2469 = vmax.xlane.f32.xlu0 %v2468
        %v2470 = vpop.xlane.xlu0 %2469
        %v2471 = vmax.f32 %v1288, %v1290
        %2472 = vmax.xlane.f32.xlu0 %v2471
        %v2473 = vpop.xlane.xlu0 %2472
        %v2474 = vmax.f32 %v1292, %v1294
        %2475 = vmax.xlane.f32.xlu0 %v2474
        %v2476 = vpop.xlane.xlu0 %2475
        %v2477 = vmax.f32 %v1298, %v1300
        %2478 = vmax.xlane.f32.xlu0 %v2477
        %v2479 = vpop.xlane.xlu0 %2478
        %v2480 = vmax.f32 %v1302, %v1304
        %2481 = vmax.xlane.f32.xlu0 %v2480
        %v2482 = vpop.xlane.xlu0 %2481
        %v2483 = vmax.f32 %v1308, %v1310
        %2484 = vmax.xlane.f32.xlu0 %v2483
        %v2485 = vpop.xlane.xlu0 %2484
        %v2486 = vmax.f32 %v1312, %v1314
        %2487 = vmax.xlane.f32.xlu0 %v2486
        %v2488 = vpop.xlane.xlu0 %2487
        %v2489 = vmax.f32 %v1318, %v1320
        %2490 = vmax.xlane.f32.xlu0 %v2489
        %v2491 = vpop.xlane.xlu0 %2490
        %v2492 = vmax.f32 %v1322, %v1324
        %2493 = vmax.xlane.f32.xlu0 %v2492
        %v2494 = vpop.xlane.xlu0 %2493
        %v2495 = vmax.f32 %v1328, %v1330
        %2496 = vmax.xlane.f32.xlu0 %v2495
        %v2497 = vpop.xlane.xlu0 %2496
        %v2498 = vmax.f32 %v1332, %v1334
        %2499 = vmax.xlane.f32.xlu0 %v2498
        %v2500 = vpop.xlane.xlu0 %2499
        %v2501 = vmax.f32 %v1338, %v1340
        %2502 = vmax.xlane.f32.xlu0 %v2501
        %v2503 = vpop.xlane.xlu0 %2502
        %v2504 = vmax.f32 %v1342, %v1344
        %2505 = vmax.xlane.f32.xlu0 %v2504
        %v2506 = vpop.xlane.xlu0 %2505
        %v2507 = vmax.f32 %v1427, %v1429
        %2508 = vmax.xlane.f32.xlu0 %v2507
        %v2509 = vpop.xlane.xlu0 %2508
        %v2510 = vmax.f32 %v1431, %v1433
        %2511 = vmax.xlane.f32.xlu0 %v2510
        %v2512 = vpop.xlane.xlu0 %2511
        %v2513 = vmax.f32 %v1437, %v1439
        %2514 = vmax.xlane.f32.xlu0 %v2513
        %v2515 = vpop.xlane.xlu0 %2514
        %v2516 = vmax.f32 %v1441, %v1443
        %2517 = vmax.xlane.f32.xlu0 %v2516
        %v2518 = vpop.xlane.xlu0 %2517
        %v2519 = vmax.f32 %v1447, %v1449
        %2520 = vmax.xlane.f32.xlu0 %v2519
        %v2521 = vpop.xlane.xlu0 %2520
        %v2522 = vmax.f32 %v1451, %v1453
        %2523 = vmax.xlane.f32.xlu0 %v2522
        %v2524 = vpop.xlane.xlu0 %2523
        %v2525 = vmax.f32 %v1457, %v1459
        %2526 = vmax.xlane.f32.xlu0 %v2525
        %v2527 = vpop.xlane.xlu0 %2526
        %v2528 = vmax.f32 %v1461, %v1463
        %2529 = vmax.xlane.f32.xlu0 %v2528
        %v2530 = vpop.xlane.xlu0 %2529
        %v2531 = vmax.f32 %v1467, %v1469
        %2532 = vmax.xlane.f32.xlu0 %v2531
        %v2533 = vpop.xlane.xlu0 %2532
        %v2534 = vmax.f32 %v1471, %v1473
        %2535 = vmax.xlane.f32.xlu0 %v2534
        %v2536 = vpop.xlane.xlu0 %2535
        %v2537 = vmax.f32 %v1477, %v1479
        %2538 = vmax.xlane.f32.xlu0 %v2537
        %v2539 = vpop.xlane.xlu0 %2538
        %v2540 = vmax.f32 %v1481, %v1483
        %2541 = vmax.xlane.f32.xlu0 %v2540
        %v2542 = vpop.xlane.xlu0 %2541
        %v2543 = vmax.f32 %v1487, %v1489
        %2544 = vmax.xlane.f32.xlu0 %v2543
        %v2545 = vpop.xlane.xlu0 %2544
        %v2546 = vmax.f32 %v1491, %v1493
        %2547 = vmax.xlane.f32.xlu0 %v2546
        %v2548 = vpop.xlane.xlu0 %2547
        %v2549 = vmax.f32 %v1497, %v1499
        %2550 = vmax.xlane.f32.xlu0 %v2549
        %v2551 = vpop.xlane.xlu0 %2550
        %v2552 = vmax.f32 %v1501, %v1503
        %2553 = vmax.xlane.f32.xlu0 %v2552
        %v2554 = vpop.xlane.xlu0 %2553
        %v2555 = vmax.f32 %v1586, %v1588
        %2556 = vmax.xlane.f32.xlu0 %v2555
        %v2557 = vpop.xlane.xlu0 %2556
        %v2558 = vmax.f32 %v1590, %v1592
        %2559 = vmax.xlane.f32.xlu0 %v2558
        %v2560 = vpop.xlane.xlu0 %2559
        %v2561 = vmax.f32 %v1596, %v1598
        %2562 = vmax.xlane.f32.xlu0 %v2561
        %v2563 = vpop.xlane.xlu0 %2562
        %v2564 = vmax.f32 %v1600, %v1602
        %2565 = vmax.xlane.f32.xlu0 %v2564
        %v2566 = vpop.xlane.xlu0 %2565
        %v2567 = vmax.f32 %v1606, %v1608
        %2568 = vmax.xlane.f32.xlu0 %v2567
        %v2569 = vpop.xlane.xlu0 %2568
        %v2570 = vmax.f32 %v1610, %v1612
        %2571 = vmax.xlane.f32.xlu0 %v2570
        %v2572 = vpop.xlane.xlu0 %2571
        %v2573 = vmax.f32 %v1616, %v1618
        %2574 = vmax.xlane.f32.xlu0 %v2573
        %v2575 = vpop.xlane.xlu0 %2574
        %v2576 = vmax.f32 %v1620, %v1622
        %2577 = vmax.xlane.f32.xlu0 %v2576
        %v2578 = vpop.xlane.xlu0 %2577
        %v2579 = vmax.f32 %v1626, %v1628
        %2580 = vmax.xlane.f32.xlu0 %v2579
        %v2581 = vpop.xlane.xlu0 %2580
        %v2582 = vmax.f32 %v1630, %v1632
        %2583 = vmax.xlane.f32.xlu0 %v2582
        %v2584 = vpop.xlane.xlu0 %2583
        %v2585 = vmax.f32 %v1636, %v1638
        %2586 = vmax.xlane.f32.xlu0 %v2585
        %v2587 = vpop.xlane.xlu0 %2586
        %v2588 = vmax.f32 %v1640, %v1642
        %2589 = vmax.xlane.f32.xlu0 %v2588
        %v2590 = vpop.xlane.xlu0 %2589
        %v2591 = vmax.f32 %v1646, %v1648
        %2592 = vmax.xlane.f32.xlu0 %v2591
        %v2593 = vpop.xlane.xlu0 %2592
        %v2594 = vmax.f32 %v1650, %v1652
        %2595 = vmax.xlane.f32.xlu0 %v2594
        %v2596 = vpop.xlane.xlu0 %2595
        %v2597 = vmax.f32 %v1656, %v1658
        %2598 = vmax.xlane.f32.xlu0 %v2597
        %v2599 = vpop.xlane.xlu0 %2598
        %v2600 = vmax.f32 %v1660, %v1662
        %2601 = vmax.xlane.f32.xlu0 %v2600
        %v2602 = vpop.xlane.xlu0 %2601
        %v2603 = vmax.f32 %v1745, %v1747
        %2604 = vmax.xlane.f32.xlu0 %v2603
        %v2605 = vpop.xlane.xlu0 %2604
        %v2606 = vmax.f32 %v1749, %v1751
        %2607 = vmax.xlane.f32.xlu0 %v2606
        %v2608 = vpop.xlane.xlu0 %2607
        %v2609 = vmax.f32 %v1755, %v1757
        %2610 = vmax.xlane.f32.xlu0 %v2609
        %v2611 = vpop.xlane.xlu0 %2610
        %v2612 = vmax.f32 %v1759, %v1761
        %2613 = vmax.xlane.f32.xlu0 %v2612
        %v2614 = vpop.xlane.xlu0 %2613
        %v2615 = vmax.f32 %v1765, %v1767
        %2616 = vmax.xlane.f32.xlu0 %v2615
        %v2617 = vpop.xlane.xlu0 %2616
        %v2618 = vmax.f32 %v1769, %v1771
        %2619 = vmax.xlane.f32.xlu0 %v2618
        %v2620 = vpop.xlane.xlu0 %2619
        %v2621 = vmax.f32 %v1775, %v1777
        %2622 = vmax.xlane.f32.xlu0 %v2621
        %v2623 = vpop.xlane.xlu0 %2622
        %v2624 = vmax.f32 %v1779, %v1781
        %2625 = vmax.xlane.f32.xlu0 %v2624
        %v2626 = vpop.xlane.xlu0 %2625
        %v2627 = vmax.f32 %v1785, %v1787
        %2628 = vmax.xlane.f32.xlu0 %v2627
        %v2629 = vpop.xlane.xlu0 %2628
        %v2630 = vmax.f32 %v1789, %v1791
        %2631 = vmax.xlane.f32.xlu0 %v2630
        %v2632 = vpop.xlane.xlu0 %2631
        %v2633 = vmax.f32 %v1795, %v1797
        %2634 = vmax.xlane.f32.xlu0 %v2633
        %v2635 = vpop.xlane.xlu0 %2634
        %v2636 = vmax.f32 %v1799, %v1801
        %2637 = vmax.xlane.f32.xlu0 %v2636
        %v2638 = vpop.xlane.xlu0 %2637
        %v2639 = vmax.f32 %v1805, %v1807
        %2640 = vmax.xlane.f32.xlu0 %v2639
        %v2641 = vpop.xlane.xlu0 %2640
        %v2642 = vmax.f32 %v1809, %v1811
        %2643 = vmax.xlane.f32.xlu0 %v2642
        %v2644 = vpop.xlane.xlu0 %2643
        %v2645 = vmax.f32 %v1815, %v1817
        %2646 = vmax.xlane.f32.xlu0 %v2645
        %v2647 = vpop.xlane.xlu0 %2646
        %v2648 = vmax.f32 %v1819, %v1821
        %2649 = vmax.xlane.f32.xlu0 %v2648
        %v2650 = vpop.xlane.xlu0 %2649
        %v2651 = vmax.f32 %v1904, %v1906
        %2652 = vmax.xlane.f32.xlu0 %v2651
        %v2653 = vpop.xlane.xlu0 %2652
        %v2654 = vmax.f32 %v1908, %v1910
        %2655 = vmax.xlane.f32.xlu0 %v2654
        %v2656 = vpop.xlane.xlu0 %2655
        %v2657 = vmax.f32 %v1914, %v1916
        %2658 = vmax.xlane.f32.xlu0 %v2657
        %v2659 = vpop.xlane.xlu0 %2658
        %v2660 = vmax.f32 %v1918, %v1920
        %2661 = vmax.xlane.f32.xlu0 %v2660
        %v2662 = vpop.xlane.xlu0 %2661
        %v2663 = vmax.f32 %v1924, %v1926
        %2664 = vmax.xlane.f32.xlu0 %v2663
        %v2665 = vpop.xlane.xlu0 %2664
        %v2666 = vmax.f32 %v1928, %v1930
        %2667 = vmax.xlane.f32.xlu0 %v2666
        %v2668 = vpop.xlane.xlu0 %2667
        %v2669 = vmax.f32 %v1934, %v1936
        %2670 = vmax.xlane.f32.xlu0 %v2669
        %v2671 = vpop.xlane.xlu0 %2670
        %v2672 = vmax.f32 %v1938, %v1940
        %2673 = vmax.xlane.f32.xlu0 %v2672
        %v2674 = vpop.xlane.xlu0 %2673
        %v2675 = vmax.f32 %v1944, %v1946
        %2676 = vmax.xlane.f32.xlu0 %v2675
        %v2677 = vpop.xlane.xlu0 %2676
        %v2678 = vmax.f32 %v1948, %v1950
        %2679 = vmax.xlane.f32.xlu0 %v2678
        %v2680 = vpop.xlane.xlu0 %2679
        %v2681 = vmax.f32 %v1954, %v1956
        %2682 = vmax.xlane.f32.xlu0 %v2681
        %v2683 = vpop.xlane.xlu0 %2682
        %v2684 = vmax.f32 %v1958, %v1960
        %2685 = vmax.xlane.f32.xlu0 %v2684
        %v2686 = vpop.xlane.xlu0 %2685
        %v2687 = vmax.f32 %v1964, %v1966
        %2688 = vmax.xlane.f32.xlu0 %v2687
        %v2689 = vpop.xlane.xlu0 %2688
        %v2690 = vmax.f32 %v1968, %v1970
        %2691 = vmax.xlane.f32.xlu0 %v2690
        %v2692 = vpop.xlane.xlu0 %2691
        %v2693 = vmax.f32 %v1974, %v1976
        %2694 = vmax.xlane.f32.xlu0 %v2693
        %v2695 = vpop.xlane.xlu0 %2694
        %v2696 = vmax.f32 %v1978, %v1980
        %2697 = vmax.xlane.f32.xlu0 %v2696
        %v2698 = vpop.xlane.xlu0 %2697
        %v2699 = vmax.f32 %v2063, %v2065
        %2700 = vmax.xlane.f32.xlu0 %v2699
        %v2701 = vpop.xlane.xlu0 %2700
        %v2702 = vmax.f32 %v2067, %v2069
        %2703 = vmax.xlane.f32.xlu0 %v2702
        %v2704 = vpop.xlane.xlu0 %2703
        %v2705 = vmax.f32 %v2073, %v2075
        %2706 = vmax.xlane.f32.xlu0 %v2705
        %v2707 = vpop.xlane.xlu0 %2706
        %v2708 = vmax.f32 %v2077, %v2079
        %2709 = vmax.xlane.f32.xlu0 %v2708
        %v2710 = vpop.xlane.xlu0 %2709
        %v2711 = vmax.f32 %v2083, %v2085
        %2712 = vmax.xlane.f32.xlu0 %v2711
        %v2713 = vpop.xlane.xlu0 %2712
        %v2714 = vmax.f32 %v2087, %v2089
        %2715 = vmax.xlane.f32.xlu0 %v2714
        %v2716 = vpop.xlane.xlu0 %2715
        %v2717 = vmax.f32 %v2093, %v2095
        %2718 = vmax.xlane.f32.xlu0 %v2717
        %v2719 = vpop.xlane.xlu0 %2718
        %v2720 = vmax.f32 %v2097, %v2099
        %2721 = vmax.xlane.f32.xlu0 %v2720
        %v2722 = vpop.xlane.xlu0 %2721
        %v2723 = vmax.f32 %v2103, %v2105
        %2724 = vmax.xlane.f32.xlu0 %v2723
        %v2725 = vpop.xlane.xlu0 %2724
        %v2726 = vmax.f32 %v2107, %v2109
        %2727 = vmax.xlane.f32.xlu0 %v2726
        %v2728 = vpop.xlane.xlu0 %2727
        %v2729 = vmax.f32 %v2113, %v2115
        %2730 = vmax.xlane.f32.xlu0 %v2729
        %v2731 = vpop.xlane.xlu0 %2730
        %v2732 = vmax.f32 %v2117, %v2119
        %2733 = vmax.xlane.f32.xlu0 %v2732
        %v2734 = vpop.xlane.xlu0 %2733
        %v2735 = vmax.f32 %v2123, %v2125
        %2736 = vmax.xlane.f32.xlu0 %v2735
        %v2737 = vpop.xlane.xlu0 %2736
        %v2738 = vmax.f32 %v2127, %v2129
        %2739 = vmax.xlane.f32.xlu0 %v2738
        %v2740 = vpop.xlane.xlu0 %2739
        %v2741 = vmax.f32 %v2133, %v2135
        %2742 = vmax.xlane.f32.xlu0 %v2741
        %v2743 = vpop.xlane.xlu0 %2742
        %v2744 = vmax.f32 %v2137, %v2139
        %2745 = vmax.xlane.f32.xlu0 %v2744
        %v2746 = vpop.xlane.xlu0 %2745
        %v2747 = vmax.f32 %v2222, %v2224
        %2748 = vmax.xlane.f32.xlu0 %v2747
        %v2749 = vpop.xlane.xlu0 %2748
        %v2750 = vmax.f32 %v2226, %v2228
        %2751 = vmax.xlane.f32.xlu0 %v2750
        %v2752 = vpop.xlane.xlu0 %2751
        %v2753 = vmax.f32 %v2232, %v2234
        %2754 = vmax.xlane.f32.xlu0 %v2753
        %v2755 = vpop.xlane.xlu0 %2754
        %v2756 = vmax.f32 %v2236, %v2238
        %2757 = vmax.xlane.f32.xlu0 %v2756
        %v2758 = vpop.xlane.xlu0 %2757
        %v2759 = vmax.f32 %v2242, %v2244
        %2760 = vmax.xlane.f32.xlu0 %v2759
        %v2761 = vpop.xlane.xlu0 %2760
        %v2762 = vmax.f32 %v2246, %v2248
        %2763 = vmax.xlane.f32.xlu0 %v2762
        %v2764 = vpop.xlane.xlu0 %2763
        %v2765 = vmax.f32 %v2252, %v2254
        %2766 = vmax.xlane.f32.xlu0 %v2765
        %v2767 = vpop.xlane.xlu0 %2766
        %v2768 = vmax.f32 %v2256, %v2258
        %2769 = vmax.xlane.f32.xlu0 %v2768
        %v2770 = vpop.xlane.xlu0 %2769
        %v2771 = vmax.f32 %v2262, %v2264
        %2772 = vmax.xlane.f32.xlu0 %v2771
        %v2773 = vpop.xlane.xlu0 %2772
        %v2774 = vmax.f32 %v2266, %v2268
        %2775 = vmax.xlane.f32.xlu0 %v2774
        %v2776 = vpop.xlane.xlu0 %2775
        %v2777 = vmax.f32 %v2272, %v2274
        %2778 = vmax.xlane.f32.xlu0 %v2777
        %v2779 = vpop.xlane.xlu0 %2778
        %v2780 = vmax.f32 %v2276, %v2278
        %2781 = vmax.xlane.f32.xlu0 %v2780
        %v2782 = vpop.xlane.xlu0 %2781
        %v2783 = vmax.f32 %v2282, %v2284
        %2784 = vmax.xlane.f32.xlu0 %v2783
        %v2785 = vpop.xlane.xlu0 %2784
        %v2786 = vmax.f32 %v2286, %v2288
        %2787 = vmax.xlane.f32.xlu0 %v2786
        %v2788 = vpop.xlane.xlu0 %2787
        %v2789 = vmax.f32 %v2292, %v2294
        %2790 = vmax.xlane.f32.xlu0 %v2789
        %v2791 = vpop.xlane.xlu0 %2790
        %v2792 = vmax.f32 %v2296, %v2298
        %2793 = vmax.xlane.f32.xlu0 %v2792
        %v2794 = vpop.xlane.xlu0 %2793
        %v2795 = vmax.f32 %v2381, %v2383
        %2796 = vmax.xlane.f32.xlu0 %v2795
        %v2797 = vpop.xlane.xlu0 %2796
        %v2798 = vmax.f32 %v2385, %v2387
        %2799 = vmax.xlane.f32.xlu0 %v2798
        %v2800 = vpop.xlane.xlu0 %2799
        %v2801 = vmax.f32 %v2391, %v2393
        %2802 = vmax.xlane.f32.xlu0 %v2801
        %v2803 = vpop.xlane.xlu0 %2802
        %v2804 = vmax.f32 %v2395, %v2397
        %2805 = vmax.xlane.f32.xlu0 %v2804
        %v2806 = vpop.xlane.xlu0 %2805
        %v2807 = vmax.f32 %v2401, %v2403
        %2808 = vmax.xlane.f32.xlu0 %v2807
        %v2809 = vpop.xlane.xlu0 %2808
        %v2810 = vmax.f32 %v2405, %v2407
        %2811 = vmax.xlane.f32.xlu0 %v2810
        %v2812 = vpop.xlane.xlu0 %2811
        %v2813 = vmax.f32 %v2411, %v2413
        %2814 = vmax.xlane.f32.xlu0 %v2813
        %v2815 = vpop.xlane.xlu0 %2814
        %v2816 = vmax.f32 %v2415, %v2417
        %2817 = vmax.xlane.f32.xlu0 %v2816
        %v2818 = vpop.xlane.xlu0 %2817
        %v2819 = vmax.f32 %v2421, %v2423
        %2820 = vmax.xlane.f32.xlu0 %v2819
        %v2821 = vpop.xlane.xlu0 %2820
        %v2822 = vmax.f32 %v2425, %v2427
        %2823 = vmax.xlane.f32.xlu0 %v2822
        %v2824 = vpop.xlane.xlu0 %2823
        %v2825 = vmax.f32 %v2431, %v2433
        %2826 = vmax.xlane.f32.xlu0 %v2825
        %v2827 = vpop.xlane.xlu0 %2826
        %v2828 = vmax.f32 %v2435, %v2437
        %2829 = vmax.xlane.f32.xlu0 %v2828
        %v2830 = vpop.xlane.xlu0 %2829
        %v2831 = vmax.f32 %v2441, %v2443
        %2832 = vmax.xlane.f32.xlu0 %v2831
        %v2833 = vpop.xlane.xlu0 %2832
        %v2834 = vmax.f32 %v2445, %v2447
        %2835 = vmax.xlane.f32.xlu0 %v2834
        %v2836 = vpop.xlane.xlu0 %2835
        %v2837 = vmax.f32 %v2451, %v2453
        %2838 = vmax.xlane.f32.xlu0 %v2837
        %v2839 = vpop.xlane.xlu0 %2838
        %v2840 = vmax.f32 %v2455, %v2457
        %2841 = vmax.xlane.f32.xlu0 %v2840
        %v2842 = vpop.xlane.xlu0 %2841
        %v2843 = vsub.f32 %v1268, %v2461
        %v2844 = vsub.f32 %v1270, %v2461
        %v2845 = vsub.f32 %v1272, %v2464
        %v2846 = vsub.f32 %v1274, %v2464
        %v2847 = vsub.f32 %v1278, %v2467
        %v2848 = vsub.f32 %v1280, %v2467
        %v2849 = vsub.f32 %v1282, %v2470
        %v2850 = vsub.f32 %v1284, %v2470
        %v2851 = vsub.f32 %v1288, %v2473
        %v2852 = vsub.f32 %v1290, %v2473
        %v2853 = vsub.f32 %v1292, %v2476
        %v2854 = vsub.f32 %v1294, %v2476
        %v2855 = vsub.f32 %v1298, %v2479
        %v2856 = vsub.f32 %v1300, %v2479
        %v2857 = vsub.f32 %v1302, %v2482
        %v2858 = vsub.f32 %v1304, %v2482
        %v2859 = vsub.f32 %v1308, %v2485
        %v2860 = vsub.f32 %v1310, %v2485
        %v2861 = vsub.f32 %v1312, %v2488
        %v2862 = vsub.f32 %v1314, %v2488
        %v2863 = vsub.f32 %v1318, %v2491
        %v2864 = vsub.f32 %v1320, %v2491
        %v2865 = vsub.f32 %v1322, %v2494
        %v2866 = vsub.f32 %v1324, %v2494
        %v2867 = vsub.f32 %v1328, %v2497
        %v2868 = vsub.f32 %v1330, %v2497
        %v2869 = vsub.f32 %v1332, %v2500
        %v2870 = vsub.f32 %v1334, %v2500
        %v2871 = vsub.f32 %v1338, %v2503
        %v2872 = vsub.f32 %v1340, %v2503
        %v2873 = vsub.f32 %v1342, %v2506
        %v2874 = vsub.f32 %v1344, %v2506
        %v2875 = vsub.f32 %v1427, %v2509
        %v2876 = vsub.f32 %v1429, %v2509
        %v2877 = vsub.f32 %v1431, %v2512
        %v2878 = vsub.f32 %v1433, %v2512
        %v2879 = vsub.f32 %v1437, %v2515
        %v2880 = vsub.f32 %v1439, %v2515
        %v2881 = vsub.f32 %v1441, %v2518
        %v2882 = vsub.f32 %v1443, %v2518
        %v2883 = vsub.f32 %v1447, %v2521
        %v2884 = vsub.f32 %v1449, %v2521
        %v2885 = vsub.f32 %v1451, %v2524
        %v2886 = vsub.f32 %v1453, %v2524
        %v2887 = vsub.f32 %v1457, %v2527
        %v2888 = vsub.f32 %v1459, %v2527
        %v2889 = vsub.f32 %v1461, %v2530
        %v2890 = vsub.f32 %v1463, %v2530
        %v2891 = vsub.f32 %v1467, %v2533
        %v2892 = vsub.f32 %v1469, %v2533
        %v2893 = vsub.f32 %v1471, %v2536
        %v2894 = vsub.f32 %v1473, %v2536
        %v2895 = vsub.f32 %v1477, %v2539
        %v2896 = vsub.f32 %v1479, %v2539
        %v2897 = vsub.f32 %v1481, %v2542
        %v2898 = vsub.f32 %v1483, %v2542
        %v2899 = vsub.f32 %v1487, %v2545
        %v2900 = vsub.f32 %v1489, %v2545
        %v2901 = vsub.f32 %v1491, %v2548
        %v2902 = vsub.f32 %v1493, %v2548
        %v2903 = vsub.f32 %v1497, %v2551
        %v2904 = vsub.f32 %v1499, %v2551
        %v2905 = vsub.f32 %v1501, %v2554
        %v2906 = vsub.f32 %v1503, %v2554
        %v2907 = vsub.f32 %v1586, %v2557
        %v2908 = vsub.f32 %v1588, %v2557
        %v2909 = vsub.f32 %v1590, %v2560
        %v2910 = vsub.f32 %v1592, %v2560
        %v2911 = vsub.f32 %v1596, %v2563
        %v2912 = vsub.f32 %v1598, %v2563
        %v2913 = vsub.f32 %v1600, %v2566
        %v2914 = vsub.f32 %v1602, %v2566
        %v2915 = vsub.f32 %v1606, %v2569
        %v2916 = vsub.f32 %v1608, %v2569
        %v2917 = vsub.f32 %v1610, %v2572
        %v2918 = vsub.f32 %v1612, %v2572
        %v2919 = vsub.f32 %v1616, %v2575
        %v2920 = vsub.f32 %v1618, %v2575
        %v2921 = vsub.f32 %v1620, %v2578
        %v2922 = vsub.f32 %v1622, %v2578
        %v2923 = vsub.f32 %v1626, %v2581
        %v2924 = vsub.f32 %v1628, %v2581
        %v2925 = vsub.f32 %v1630, %v2584
        %v2926 = vsub.f32 %v1632, %v2584
        %v2927 = vsub.f32 %v1636, %v2587
        %v2928 = vsub.f32 %v1638, %v2587
        %v2929 = vsub.f32 %v1640, %v2590
        %v2930 = vsub.f32 %v1642, %v2590
        %v2931 = vsub.f32 %v1646, %v2593
        %v2932 = vsub.f32 %v1648, %v2593
        %v2933 = vsub.f32 %v1650, %v2596
        %v2934 = vsub.f32 %v1652, %v2596
        %v2935 = vsub.f32 %v1656, %v2599
        %v2936 = vsub.f32 %v1658, %v2599
        %v2937 = vsub.f32 %v1660, %v2602
        %v2938 = vsub.f32 %v1662, %v2602
        %v2939 = vsub.f32 %v1745, %v2605
        %v2940 = vsub.f32 %v1747, %v2605
        %v2941 = vsub.f32 %v1749, %v2608
        %v2942 = vsub.f32 %v1751, %v2608
        %v2943 = vsub.f32 %v1755, %v2611
        %v2944 = vsub.f32 %v1757, %v2611
        %v2945 = vsub.f32 %v1759, %v2614
        %v2946 = vsub.f32 %v1761, %v2614
        %v2947 = vsub.f32 %v1765, %v2617
        %v2948 = vsub.f32 %v1767, %v2617
        %v2949 = vsub.f32 %v1769, %v2620
        %v2950 = vsub.f32 %v1771, %v2620
        %v2951 = vsub.f32 %v1775, %v2623
        %v2952 = vsub.f32 %v1777, %v2623
        %v2953 = vsub.f32 %v1779, %v2626
        %v2954 = vsub.f32 %v1781, %v2626
        %v2955 = vsub.f32 %v1785, %v2629
        %v2956 = vsub.f32 %v1787, %v2629
        %v2957 = vsub.f32 %v1789, %v2632
        %v2958 = vsub.f32 %v1791, %v2632
        %v2959 = vsub.f32 %v1795, %v2635
        %v2960 = vsub.f32 %v1797, %v2635
        %v2961 = vsub.f32 %v1799, %v2638
        %v2962 = vsub.f32 %v1801, %v2638
        %v2963 = vsub.f32 %v1805, %v2641
        %v2964 = vsub.f32 %v1807, %v2641
        %v2965 = vsub.f32 %v1809, %v2644
        %v2966 = vsub.f32 %v1811, %v2644
        %v2967 = vsub.f32 %v1815, %v2647
        %v2968 = vsub.f32 %v1817, %v2647
        %v2969 = vsub.f32 %v1819, %v2650
        %v2970 = vsub.f32 %v1821, %v2650
        %v2971 = vsub.f32 %v1904, %v2653
        %v2972 = vsub.f32 %v1906, %v2653
        %v2973 = vsub.f32 %v1908, %v2656
        %v2974 = vsub.f32 %v1910, %v2656
        %v2975 = vsub.f32 %v1914, %v2659
        %v2976 = vsub.f32 %v1916, %v2659
        %v2977 = vsub.f32 %v1918, %v2662
        %v2978 = vsub.f32 %v1920, %v2662
        %v2979 = vsub.f32 %v1924, %v2665
        %v2980 = vsub.f32 %v1926, %v2665
        %v2981 = vsub.f32 %v1928, %v2668
        %v2982 = vsub.f32 %v1930, %v2668
        %v2983 = vsub.f32 %v1934, %v2671
        %v2984 = vsub.f32 %v1936, %v2671
        %v2985 = vsub.f32 %v1938, %v2674
        %v2986 = vsub.f32 %v1940, %v2674
        %v2987 = vsub.f32 %v1944, %v2677
        %v2988 = vsub.f32 %v1946, %v2677
        %v2989 = vsub.f32 %v1948, %v2680
        %v2990 = vsub.f32 %v1950, %v2680
        %v2991 = vsub.f32 %v1954, %v2683
        %v2992 = vsub.f32 %v1956, %v2683
        %v2993 = vsub.f32 %v1958, %v2686
        %v2994 = vsub.f32 %v1960, %v2686
        %v2995 = vsub.f32 %v1964, %v2689
        %v2996 = vsub.f32 %v1966, %v2689
        %v2997 = vsub.f32 %v1968, %v2692
        %v2998 = vsub.f32 %v1970, %v2692
        %v2999 = vsub.f32 %v1974, %v2695
        %v3000 = vsub.f32 %v1976, %v2695
        %v3001 = vsub.f32 %v1978, %v2698
        %v3002 = vsub.f32 %v1980, %v2698
        %v3003 = vsub.f32 %v2063, %v2701
        %v3004 = vsub.f32 %v2065, %v2701
        %v3005 = vsub.f32 %v2067, %v2704
        %v3006 = vsub.f32 %v2069, %v2704
        %v3007 = vsub.f32 %v2073, %v2707
        %v3008 = vsub.f32 %v2075, %v2707
        %v3009 = vsub.f32 %v2077, %v2710
        %v3010 = vsub.f32 %v2079, %v2710
        %v3011 = vsub.f32 %v2083, %v2713
        %v3012 = vsub.f32 %v2085, %v2713
        %v3013 = vsub.f32 %v2087, %v2716
        %v3014 = vsub.f32 %v2089, %v2716
        %v3015 = vsub.f32 %v2093, %v2719
        %v3016 = vsub.f32 %v2095, %v2719
        %v3017 = vsub.f32 %v2097, %v2722
        %v3018 = vsub.f32 %v2099, %v2722
        %v3019 = vsub.f32 %v2103, %v2725
        %v3020 = vsub.f32 %v2105, %v2725
        %v3021 = vsub.f32 %v2107, %v2728
        %v3022 = vsub.f32 %v2109, %v2728
        %v3023 = vsub.f32 %v2113, %v2731
        %v3024 = vsub.f32 %v2115, %v2731
        %v3025 = vsub.f32 %v2117, %v2734
        %v3026 = vsub.f32 %v2119, %v2734
        %v3027 = vsub.f32 %v2123, %v2737
        %v3028 = vsub.f32 %v2125, %v2737
        %v3029 = vsub.f32 %v2127, %v2740
        %v3030 = vsub.f32 %v2129, %v2740
        %v3031 = vsub.f32 %v2133, %v2743
        %v3032 = vsub.f32 %v2135, %v2743
        %v3033 = vsub.f32 %v2137, %v2746
        %v3034 = vsub.f32 %v2139, %v2746
        %v3035 = vsub.f32 %v2222, %v2749
        %v3036 = vsub.f32 %v2224, %v2749
        %v3037 = vsub.f32 %v2226, %v2752
        %v3038 = vsub.f32 %v2228, %v2752
        %v3039 = vsub.f32 %v2232, %v2755
        %v3040 = vsub.f32 %v2234, %v2755
        %v3041 = vsub.f32 %v2236, %v2758
        %v3042 = vsub.f32 %v2238, %v2758
        %v3043 = vsub.f32 %v2242, %v2761
        %v3044 = vsub.f32 %v2244, %v2761
        %v3045 = vsub.f32 %v2246, %v2764
        %v3046 = vsub.f32 %v2248, %v2764
        %v3047 = vsub.f32 %v2252, %v2767
        %v3048 = vsub.f32 %v2254, %v2767
        %v3049 = vsub.f32 %v2256, %v2770
        %v3050 = vsub.f32 %v2258, %v2770
        %v3051 = vsub.f32 %v2262, %v2773
        %v3052 = vsub.f32 %v2264, %v2773
        %v3053 = vsub.f32 %v2266, %v2776
        %v3054 = vsub.f32 %v2268, %v2776
        %v3055 = vsub.f32 %v2272, %v2779
        %v3056 = vsub.f32 %v2274, %v2779
        %v3057 = vsub.f32 %v2276, %v2782
        %v3058 = vsub.f32 %v2278, %v2782
        %v3059 = vsub.f32 %v2282, %v2785
        %v3060 = vsub.f32 %v2284, %v2785
        %v3061 = vsub.f32 %v2286, %v2788
        %v3062 = vsub.f32 %v2288, %v2788
        %v3063 = vsub.f32 %v2292, %v2791
        %v3064 = vsub.f32 %v2294, %v2791
        %v3065 = vsub.f32 %v2296, %v2794
        %v3066 = vsub.f32 %v2298, %v2794
        %v3067 = vsub.f32 %v2381, %v2797
        %v3068 = vsub.f32 %v2383, %v2797
        %v3069 = vsub.f32 %v2385, %v2800
        %v3070 = vsub.f32 %v2387, %v2800
        %v3071 = vsub.f32 %v2391, %v2803
        %v3072 = vsub.f32 %v2393, %v2803
        %v3073 = vsub.f32 %v2395, %v2806
        %v3074 = vsub.f32 %v2397, %v2806
        %v3075 = vsub.f32 %v2401, %v2809
        %v3076 = vsub.f32 %v2403, %v2809
        %v3077 = vsub.f32 %v2405, %v2812
        %v3078 = vsub.f32 %v2407, %v2812
        %v3079 = vsub.f32 %v2411, %v2815
        %v3080 = vsub.f32 %v2413, %v2815
        %v3081 = vsub.f32 %v2415, %v2818
        %v3082 = vsub.f32 %v2417, %v2818
        %v3083 = vsub.f32 %v2421, %v2821
        %v3084 = vsub.f32 %v2423, %v2821
        %v3085 = vsub.f32 %v2425, %v2824
        %v3086 = vsub.f32 %v2427, %v2824
        %v3087 = vsub.f32 %v2431, %v2827
        %v3088 = vsub.f32 %v2433, %v2827
        %v3089 = vsub.f32 %v2435, %v2830
        %v3090 = vsub.f32 %v2437, %v2830
        %v3091 = vsub.f32 %v2441, %v2833
        %v3092 = vsub.f32 %v2443, %v2833
        %v3093 = vsub.f32 %v2445, %v2836
        %v3094 = vsub.f32 %v2447, %v2836
        %v3095 = vsub.f32 %v2451, %v2839
        %v3096 = vsub.f32 %v2453, %v2839
        %v3097 = vsub.f32 %v2455, %v2842
        %v3098 = vsub.f32 %v2457, %v2842
        %v3099 = vmul.f32 %v2843, 1.442695
        %v3100 = vpow.pop %v3099
        %v3101 = vmul.f32 %v2844, 1.442695
        %v3102 = vpow.pop %v3101
        %v3103 = vmul.f32 %v2845, 1.442695
        %v3104 = vpow.pop %v3103
        %v3105 = vmul.f32 %v2846, 1.442695
        %v3106 = vpow.pop %v3105
        %v3107 = vmul.f32 %v2847, 1.442695
        %v3108 = vpow.pop %v3107
        %v3109 = vmul.f32 %v2848, 1.442695
        %v3110 = vpow.pop %v3109
        %v3111 = vmul.f32 %v2849, 1.442695
        %v3112 = vpow.pop %v3111
        %v3113 = vmul.f32 %v2850, 1.442695
        %v3114 = vpow.pop %v3113
        %v3115 = vmul.f32 %v2851, 1.442695
        %v3116 = vpow.pop %v3115
        %v3117 = vmul.f32 %v2852, 1.442695
        %v3118 = vpow.pop %v3117
        %v3119 = vmul.f32 %v2853, 1.442695
        %v3120 = vpow.pop %v3119
        %v3121 = vmul.f32 %v2854, 1.442695
        %v3122 = vpow.pop %v3121
        %v3123 = vmul.f32 %v2855, 1.442695
        %v3124 = vpow.pop %v3123
        %v3125 = vmul.f32 %v2856, 1.442695
        %v3126 = vpow.pop %v3125
        %v3127 = vmul.f32 %v2857, 1.442695
        %v3128 = vpow.pop %v3127
        %v3129 = vmul.f32 %v2858, 1.442695
        %v3130 = vpow.pop %v3129
        %v3131 = vmul.f32 %v2859, 1.442695
        %v3132 = vpow.pop %v3131
        %v3133 = vmul.f32 %v2860, 1.442695
        %v3134 = vpow.pop %v3133
        %v3135 = vmul.f32 %v2861, 1.442695
        %v3136 = vpow.pop %v3135
        %v3137 = vmul.f32 %v2862, 1.442695
        %v3138 = vpow.pop %v3137
        %v3139 = vmul.f32 %v2863, 1.442695
        %v3140 = vpow.pop %v3139
        %v3141 = vmul.f32 %v2864, 1.442695
        %v3142 = vpow.pop %v3141
        %v3143 = vmul.f32 %v2865, 1.442695
        %v3144 = vpow.pop %v3143
        %v3145 = vmul.f32 %v2866, 1.442695
        %v3146 = vpow.pop %v3145
        %v3147 = vmul.f32 %v2867, 1.442695
        %v3148 = vpow.pop %v3147
        %v3149 = vmul.f32 %v2868, 1.442695
        %v3150 = vpow.pop %v3149
        %v3151 = vmul.f32 %v2869, 1.442695
        %v3152 = vpow.pop %v3151
        %v3153 = vmul.f32 %v2870, 1.442695
        %v3154 = vpow.pop %v3153
        %v3155 = vmul.f32 %v2871, 1.442695
        %v3156 = vpow.pop %v3155
        %v3157 = vmul.f32 %v2872, 1.442695
        %v3158 = vpow.pop %v3157
        %v3159 = vmul.f32 %v2873, 1.442695
        %v3160 = vpow.pop %v3159
        %v3161 = vmul.f32 %v2874, 1.442695
        %v3162 = vpow.pop %v3161
        %v3163 = vmul.f32 %v2875, 1.442695
        %v3164 = vpow.pop %v3163
        %v3165 = vmul.f32 %v2876, 1.442695
        %v3166 = vpow.pop %v3165
        %v3167 = vmul.f32 %v2877, 1.442695
        %v3168 = vpow.pop %v3167
        %v3169 = vmul.f32 %v2878, 1.442695
        %v3170 = vpow.pop %v3169
        %v3171 = vmul.f32 %v2879, 1.442695
        %v3172 = vpow.pop %v3171
        %v3173 = vmul.f32 %v2880, 1.442695
        %v3174 = vpow.pop %v3173
        %v3175 = vmul.f32 %v2881, 1.442695
        %v3176 = vpow.pop %v3175
        %v3177 = vmul.f32 %v2882, 1.442695
        %v3178 = vpow.pop %v3177
        %v3179 = vmul.f32 %v2883, 1.442695
        %v3180 = vpow.pop %v3179
        %v3181 = vmul.f32 %v2884, 1.442695
        %v3182 = vpow.pop %v3181
        %v3183 = vmul.f32 %v2885, 1.442695
        %v3184 = vpow.pop %v3183
        %v3185 = vmul.f32 %v2886, 1.442695
        %v3186 = vpow.pop %v3185
        %v3187 = vmul.f32 %v2887, 1.442695
        %v3188 = vpow.pop %v3187
        %v3189 = vmul.f32 %v2888, 1.442695
        %v3190 = vpow.pop %v3189
        %v3191 = vmul.f32 %v2889, 1.442695
        %v3192 = vpow.pop %v3191
        %v3193 = vmul.f32 %v2890, 1.442695
        %v3194 = vpow.pop %v3193
        %v3195 = vmul.f32 %v2891, 1.442695
        %v3196 = vpow.pop %v3195
        %v3197 = vmul.f32 %v2892, 1.442695
        %v3198 = vpow.pop %v3197
        %v3199 = vmul.f32 %v2893, 1.442695
        %v3200 = vpow.pop %v3199
        %v3201 = vmul.f32 %v2894, 1.442695
        %v3202 = vpow.pop %v3201
        %v3203 = vmul.f32 %v2895, 1.442695
        %v3204 = vpow.pop %v3203
        %v3205 = vmul.f32 %v2896, 1.442695
        %v3206 = vpow.pop %v3205
        %v3207 = vmul.f32 %v2897, 1.442695
        %v3208 = vpow.pop %v3207
        %v3209 = vmul.f32 %v2898, 1.442695
        %v3210 = vpow.pop %v3209
        %v3211 = vmul.f32 %v2899, 1.442695
        %v3212 = vpow.pop %v3211
        %v3213 = vmul.f32 %v2900, 1.442695
        %v3214 = vpow.pop %v3213
        %v3215 = vmul.f32 %v2901, 1.442695
        %v3216 = vpow.pop %v3215
        %v3217 = vmul.f32 %v2902, 1.442695
        %v3218 = vpow.pop %v3217
        %v3219 = vmul.f32 %v2903, 1.442695
        %v3220 = vpow.pop %v3219
        %v3221 = vmul.f32 %v2904, 1.442695
        %v3222 = vpow.pop %v3221
        %v3223 = vmul.f32 %v2905, 1.442695
        %v3224 = vpow.pop %v3223
        %v3225 = vmul.f32 %v2906, 1.442695
        %v3226 = vpow.pop %v3225
        %v3227 = vmul.f32 %v2907, 1.442695
        %v3228 = vpow.pop %v3227
        %v3229 = vmul.f32 %v2908, 1.442695
        %v3230 = vpow.pop %v3229
        %v3231 = vmul.f32 %v2909, 1.442695
        %v3232 = vpow.pop %v3231
        %v3233 = vmul.f32 %v2910, 1.442695
        %v3234 = vpow.pop %v3233
        %v3235 = vmul.f32 %v2911, 1.442695
        %v3236 = vpow.pop %v3235
        %v3237 = vmul.f32 %v2912, 1.442695
        %v3238 = vpow.pop %v3237
        %v3239 = vmul.f32 %v2913, 1.442695
        %v3240 = vpow.pop %v3239
        %v3241 = vmul.f32 %v2914, 1.442695
        %v3242 = vpow.pop %v3241
        %v3243 = vmul.f32 %v2915, 1.442695
        %v3244 = vpow.pop %v3243
        %v3245 = vmul.f32 %v2916, 1.442695
        %v3246 = vpow.pop %v3245
        %v3247 = vmul.f32 %v2917, 1.442695
        %v3248 = vpow.pop %v3247
        %v3249 = vmul.f32 %v2918, 1.442695
        %v3250 = vpow.pop %v3249
        %v3251 = vmul.f32 %v2919, 1.442695
        %v3252 = vpow.pop %v3251
        %v3253 = vmul.f32 %v2920, 1.442695
        %v3254 = vpow.pop %v3253
        %v3255 = vmul.f32 %v2921, 1.442695
        %v3256 = vpow.pop %v3255
        %v3257 = vmul.f32 %v2922, 1.442695
        %v3258 = vpow.pop %v3257
        %v3259 = vmul.f32 %v2923, 1.442695
        %v3260 = vpow.pop %v3259
        %v3261 = vmul.f32 %v2924, 1.442695
        %v3262 = vpow.pop %v3261
        %v3263 = vmul.f32 %v2925, 1.442695
        %v3264 = vpow.pop %v3263
        %v3265 = vmul.f32 %v2926, 1.442695
        %v3266 = vpow.pop %v3265
        %v3267 = vmul.f32 %v2927, 1.442695
        %v3268 = vpow.pop %v3267
        %v3269 = vmul.f32 %v2928, 1.442695
        %v3270 = vpow.pop %v3269
        %v3271 = vmul.f32 %v2929, 1.442695
        %v3272 = vpow.pop %v3271
        %v3273 = vmul.f32 %v2930, 1.442695
        %v3274 = vpow.pop %v3273
        %v3275 = vmul.f32 %v2931, 1.442695
        %v3276 = vpow.pop %v3275
        %v3277 = vmul.f32 %v2932, 1.442695
        %v3278 = vpow.pop %v3277
        %v3279 = vmul.f32 %v2933, 1.442695
        %v3280 = vpow.pop %v3279
        %v3281 = vmul.f32 %v2934, 1.442695
        %v3282 = vpow.pop %v3281
        %v3283 = vmul.f32 %v2935, 1.442695
        %v3284 = vpow.pop %v3283
        %v3285 = vmul.f32 %v2936, 1.442695
        %v3286 = vpow.pop %v3285
        %v3287 = vmul.f32 %v2937, 1.442695
        %v3288 = vpow.pop %v3287
        %v3289 = vmul.f32 %v2938, 1.442695
        %v3290 = vpow.pop %v3289
        %v3291 = vmul.f32 %v2939, 1.442695
        %v3292 = vpow.pop %v3291
        %v3293 = vmul.f32 %v2940, 1.442695
        %v3294 = vpow.pop %v3293
        %v3295 = vmul.f32 %v2941, 1.442695
        %v3296 = vpow.pop %v3295
        %v3297 = vmul.f32 %v2942, 1.442695
        %v3298 = vpow.pop %v3297
        %v3299 = vmul.f32 %v2943, 1.442695
        %v3300 = vpow.pop %v3299
        %v3301 = vmul.f32 %v2944, 1.442695
        %v3302 = vpow.pop %v3301
        %v3303 = vmul.f32 %v2945, 1.442695
        %v3304 = vpow.pop %v3303
        %v3305 = vmul.f32 %v2946, 1.442695
        %v3306 = vpow.pop %v3305
        %v3307 = vmul.f32 %v2947, 1.442695
        %v3308 = vpow.pop %v3307
        %v3309 = vmul.f32 %v2948, 1.442695
        %v3310 = vpow.pop %v3309
        %v3311 = vmul.f32 %v2949, 1.442695
        %v3312 = vpow.pop %v3311
        %v3313 = vmul.f32 %v2950, 1.442695
        %v3314 = vpow.pop %v3313
        %v3315 = vmul.f32 %v2951, 1.442695
        %v3316 = vpow.pop %v3315
        %v3317 = vmul.f32 %v2952, 1.442695
        %v3318 = vpow.pop %v3317
        %v3319 = vmul.f32 %v2953, 1.442695
        %v3320 = vpow.pop %v3319
        %v3321 = vmul.f32 %v2954, 1.442695
        %v3322 = vpow.pop %v3321
        %v3323 = vmul.f32 %v2955, 1.442695
        %v3324 = vpow.pop %v3323
        %v3325 = vmul.f32 %v2956, 1.442695
        %v3326 = vpow.pop %v3325
        %v3327 = vmul.f32 %v2957, 1.442695
        %v3328 = vpow.pop %v3327
        %v3329 = vmul.f32 %v2958, 1.442695
        %v3330 = vpow.pop %v3329
        %v3331 = vmul.f32 %v2959, 1.442695
        %v3332 = vpow.pop %v3331
        %v3333 = vmul.f32 %v2960, 1.442695
        %v3334 = vpow.pop %v3333
        %v3335 = vmul.f32 %v2961, 1.442695
        %v3336 = vpow.pop %v3335
        %v3337 = vmul.f32 %v2962, 1.442695
        %v3338 = vpow.pop %v3337
        %v3339 = vmul.f32 %v2963, 1.442695
        %v3340 = vpow.pop %v3339
        %v3341 = vmul.f32 %v2964, 1.442695
        %v3342 = vpow.pop %v3341
        %v3343 = vmul.f32 %v2965, 1.442695
        %v3344 = vpow.pop %v3343
        %v3345 = vmul.f32 %v2966, 1.442695
        %v3346 = vpow.pop %v3345
        %v3347 = vmul.f32 %v2967, 1.442695
        %v3348 = vpow.pop %v3347
        %v3349 = vmul.f32 %v2968, 1.442695
        %v3350 = vpow.pop %v3349
        %v3351 = vmul.f32 %v2969, 1.442695
        %v3352 = vpow.pop %v3351
        %v3353 = vmul.f32 %v2970, 1.442695
        %v3354 = vpow.pop %v3353
        %v3355 = vmul.f32 %v2971, 1.442695
        %v3356 = vpow.pop %v3355
        %v3357 = vmul.f32 %v2972, 1.442695
        %v3358 = vpow.pop %v3357
        %v3359 = vmul.f32 %v2973, 1.442695
        %v3360 = vpow.pop %v3359
        %v3361 = vmul.f32 %v2974, 1.442695
        %v3362 = vpow.pop %v3361
        %v3363 = vmul.f32 %v2975, 1.442695
        %v3364 = vpow.pop %v3363
        %v3365 = vmul.f32 %v2976, 1.442695
        %v3366 = vpow.pop %v3365
        %v3367 = vmul.f32 %v2977, 1.442695
        %v3368 = vpow.pop %v3367
        %v3369 = vmul.f32 %v2978, 1.442695
        %v3370 = vpow.pop %v3369
        %v3371 = vmul.f32 %v2979, 1.442695
        %v3372 = vpow.pop %v3371
        %v3373 = vmul.f32 %v2980, 1.442695
        %v3374 = vpow.pop %v3373
        %v3375 = vmul.f32 %v2981, 1.442695
        %v3376 = vpow.pop %v3375
        %v3377 = vmul.f32 %v2982, 1.442695
        %v3378 = vpow.pop %v3377
        %v3379 = vmul.f32 %v2983, 1.442695
        %v3380 = vpow.pop %v3379
        %v3381 = vmul.f32 %v2984, 1.442695
        %v3382 = vpow.pop %v3381
        %v3383 = vmul.f32 %v2985, 1.442695
        %v3384 = vpow.pop %v3383
        %v3385 = vmul.f32 %v2986, 1.442695
        %v3386 = vpow.pop %v3385
        %v3387 = vmul.f32 %v2987, 1.442695
        %v3388 = vpow.pop %v3387
        %v3389 = vmul.f32 %v2988, 1.442695
        %v3390 = vpow.pop %v3389
        %v3391 = vmul.f32 %v2989, 1.442695
        %v3392 = vpow.pop %v3391
        %v3393 = vmul.f32 %v2990, 1.442695
        %v3394 = vpow.pop %v3393
        %v3395 = vmul.f32 %v2991, 1.442695
        %v3396 = vpow.pop %v3395
        %v3397 = vmul.f32 %v2992, 1.442695
        %v3398 = vpow.pop %v3397
        %v3399 = vmul.f32 %v2993, 1.442695
        %v3400 = vpow.pop %v3399
        %v3401 = vmul.f32 %v2994, 1.442695
        %v3402 = vpow.pop %v3401
        %v3403 = vmul.f32 %v2995, 1.442695
        %v3404 = vpow.pop %v3403
        %v3405 = vmul.f32 %v2996, 1.442695
        %v3406 = vpow.pop %v3405
        %v3407 = vmul.f32 %v2997, 1.442695
        %v3408 = vpow.pop %v3407
        %v3409 = vmul.f32 %v2998, 1.442695
        %v3410 = vpow.pop %v3409
        %v3411 = vmul.f32 %v2999, 1.442695
        %v3412 = vpow.pop %v3411
        %v3413 = vmul.f32 %v3000, 1.442695
        %v3414 = vpow.pop %v3413
        %v3415 = vmul.f32 %v3001, 1.442695
        %v3416 = vpow.pop %v3415
        %v3417 = vmul.f32 %v3002, 1.442695
        %v3418 = vpow.pop %v3417
        %v3419 = vmul.f32 %v3003, 1.442695
        %v3420 = vpow.pop %v3419
        %v3421 = vmul.f32 %v3004, 1.442695
        %v3422 = vpow.pop %v3421
        %v3423 = vmul.f32 %v3005, 1.442695
        %v3424 = vpow.pop %v3423
        %v3425 = vmul.f32 %v3006, 1.442695
        %v3426 = vpow.pop %v3425
        %v3427 = vmul.f32 %v3007, 1.442695
        %v3428 = vpow.pop %v3427
        %v3429 = vmul.f32 %v3008, 1.442695
        %v3430 = vpow.pop %v3429
        %v3431 = vmul.f32 %v3009, 1.442695
        %v3432 = vpow.pop %v3431
        %v3433 = vmul.f32 %v3010, 1.442695
        %v3434 = vpow.pop %v3433
        %v3435 = vmul.f32 %v3011, 1.442695
        %v3436 = vpow.pop %v3435
        %v3437 = vmul.f32 %v3012, 1.442695
        %v3438 = vpow.pop %v3437
        %v3439 = vmul.f32 %v3013, 1.442695
        %v3440 = vpow.pop %v3439
        %v3441 = vmul.f32 %v3014, 1.442695
        %v3442 = vpow.pop %v3441
        %v3443 = vmul.f32 %v3015, 1.442695
        %v3444 = vpow.pop %v3443
        %v3445 = vmul.f32 %v3016, 1.442695
        %v3446 = vpow.pop %v3445
        %v3447 = vmul.f32 %v3017, 1.442695
        %v3448 = vpow.pop %v3447
        %v3449 = vmul.f32 %v3018, 1.442695
        %v3450 = vpow.pop %v3449
        %v3451 = vmul.f32 %v3019, 1.442695
        %v3452 = vpow.pop %v3451
        %v3453 = vmul.f32 %v3020, 1.442695
        %v3454 = vpow.pop %v3453
        %v3455 = vmul.f32 %v3021, 1.442695
        %v3456 = vpow.pop %v3455
        %v3457 = vmul.f32 %v3022, 1.442695
        %v3458 = vpow.pop %v3457
        %v3459 = vmul.f32 %v3023, 1.442695
        %v3460 = vpow.pop %v3459
        %v3461 = vmul.f32 %v3024, 1.442695
        %v3462 = vpow.pop %v3461
        %v3463 = vmul.f32 %v3025, 1.442695
        %v3464 = vpow.pop %v3463
        %v3465 = vmul.f32 %v3026, 1.442695
        %v3466 = vpow.pop %v3465
        %v3467 = vmul.f32 %v3027, 1.442695
        %v3468 = vpow.pop %v3467
        %v3469 = vmul.f32 %v3028, 1.442695
        %v3470 = vpow.pop %v3469
        %v3471 = vmul.f32 %v3029, 1.442695
        %v3472 = vpow.pop %v3471
        %v3473 = vmul.f32 %v3030, 1.442695
        %v3474 = vpow.pop %v3473
        %v3475 = vmul.f32 %v3031, 1.442695
        %v3476 = vpow.pop %v3475
        %v3477 = vmul.f32 %v3032, 1.442695
        %v3478 = vpow.pop %v3477
        %v3479 = vmul.f32 %v3033, 1.442695
        %v3480 = vpow.pop %v3479
        %v3481 = vmul.f32 %v3034, 1.442695
        %v3482 = vpow.pop %v3481
        %v3483 = vmul.f32 %v3035, 1.442695
        %v3484 = vpow.pop %v3483
        %v3485 = vmul.f32 %v3036, 1.442695
        %v3486 = vpow.pop %v3485
        %v3487 = vmul.f32 %v3037, 1.442695
        %v3488 = vpow.pop %v3487
        %v3489 = vmul.f32 %v3038, 1.442695
        %v3490 = vpow.pop %v3489
        %v3491 = vmul.f32 %v3039, 1.442695
        %v3492 = vpow.pop %v3491
        %v3493 = vmul.f32 %v3040, 1.442695
        %v3494 = vpow.pop %v3493
        %v3495 = vmul.f32 %v3041, 1.442695
        %v3496 = vpow.pop %v3495
        %v3497 = vmul.f32 %v3042, 1.442695
        %v3498 = vpow.pop %v3497
        %v3499 = vmul.f32 %v3043, 1.442695
        %v3500 = vpow.pop %v3499
        %v3501 = vmul.f32 %v3044, 1.442695
        %v3502 = vpow.pop %v3501
        %v3503 = vmul.f32 %v3045, 1.442695
        %v3504 = vpow.pop %v3503
        %v3505 = vmul.f32 %v3046, 1.442695
        %v3506 = vpow.pop %v3505
        %v3507 = vmul.f32 %v3047, 1.442695
        %v3508 = vpow.pop %v3507
        %v3509 = vmul.f32 %v3048, 1.442695
        %v3510 = vpow.pop %v3509
        %v3511 = vmul.f32 %v3049, 1.442695
        %v3512 = vpow.pop %v3511
        %v3513 = vmul.f32 %v3050, 1.442695
        %v3514 = vpow.pop %v3513
        %v3515 = vmul.f32 %v3051, 1.442695
        %v3516 = vpow.pop %v3515
        %v3517 = vmul.f32 %v3052, 1.442695
        %v3518 = vpow.pop %v3517
        %v3519 = vmul.f32 %v3053, 1.442695
        %v3520 = vpow.pop %v3519
        %v3521 = vmul.f32 %v3054, 1.442695
        %v3522 = vpow.pop %v3521
        %v3523 = vmul.f32 %v3055, 1.442695
        %v3524 = vpow.pop %v3523
        %v3525 = vmul.f32 %v3056, 1.442695
        %v3526 = vpow.pop %v3525
        %v3527 = vmul.f32 %v3057, 1.442695
        %v3528 = vpow.pop %v3527
        %v3529 = vmul.f32 %v3058, 1.442695
        %v3530 = vpow.pop %v3529
        %v3531 = vmul.f32 %v3059, 1.442695
        %v3532 = vpow.pop %v3531
        %v3533 = vmul.f32 %v3060, 1.442695
        %v3534 = vpow.pop %v3533
        %v3535 = vmul.f32 %v3061, 1.442695
        %v3536 = vpow.pop %v3535
        %v3537 = vmul.f32 %v3062, 1.442695
        %v3538 = vpow.pop %v3537
        %v3539 = vmul.f32 %v3063, 1.442695
        %v3540 = vpow.pop %v3539
        %v3541 = vmul.f32 %v3064, 1.442695
        %v3542 = vpow.pop %v3541
        %v3543 = vmul.f32 %v3065, 1.442695
        %v3544 = vpow.pop %v3543
        %v3545 = vmul.f32 %v3066, 1.442695
        %v3546 = vpow.pop %v3545
        %v3547 = vmul.f32 %v3067, 1.442695
        %v3548 = vpow.pop %v3547
        %v3549 = vmul.f32 %v3068, 1.442695
        %v3550 = vpow.pop %v3549
        %v3551 = vmul.f32 %v3069, 1.442695
        %v3552 = vpow.pop %v3551
        %v3553 = vmul.f32 %v3070, 1.442695
        %v3554 = vpow.pop %v3553
        %v3555 = vmul.f32 %v3071, 1.442695
        %v3556 = vpow.pop %v3555
        %v3557 = vmul.f32 %v3072, 1.442695
        %v3558 = vpow.pop %v3557
        %v3559 = vmul.f32 %v3073, 1.442695
        %v3560 = vpow.pop %v3559
        %v3561 = vmul.f32 %v3074, 1.442695
        %v3562 = vpow.pop %v3561
        %v3563 = vmul.f32 %v3075, 1.442695
        %v3564 = vpow.pop %v3563
        %v3565 = vmul.f32 %v3076, 1.442695
        %v3566 = vpow.pop %v3565
        %v3567 = vmul.f32 %v3077, 1.442695
        %v3568 = vpow.pop %v3567
        %v3569 = vmul.f32 %v3078, 1.442695
        %v3570 = vpow.pop %v3569
        %v3571 = vmul.f32 %v3079, 1.442695
        %v3572 = vpow.pop %v3571
        %v3573 = vmul.f32 %v3080, 1.442695
        %v3574 = vpow.pop %v3573
        %v3575 = vmul.f32 %v3081, 1.442695
        %v3576 = vpow.pop %v3575
        %v3577 = vmul.f32 %v3082, 1.442695
        %v3578 = vpow.pop %v3577
        %v3579 = vmul.f32 %v3083, 1.442695
        %v3580 = vpow.pop %v3579
        %v3581 = vmul.f32 %v3084, 1.442695
        %v3582 = vpow.pop %v3581
        %v3583 = vmul.f32 %v3085, 1.442695
        %v3584 = vpow.pop %v3583
        %v3585 = vmul.f32 %v3086, 1.442695
        %v3586 = vpow.pop %v3585
        %v3587 = vmul.f32 %v3087, 1.442695
        %v3588 = vpow.pop %v3587
        %v3589 = vmul.f32 %v3088, 1.442695
        %v3590 = vpow.pop %v3589
        %v3591 = vmul.f32 %v3089, 1.442695
        %v3592 = vpow.pop %v3591
        %v3593 = vmul.f32 %v3090, 1.442695
        %v3594 = vpow.pop %v3593
        %v3595 = vmul.f32 %v3091, 1.442695
        %v3596 = vpow.pop %v3595
        %v3597 = vmul.f32 %v3092, 1.442695
        %v3598 = vpow.pop %v3597
        %v3599 = vmul.f32 %v3093, 1.442695
        %v3600 = vpow.pop %v3599
        %v3601 = vmul.f32 %v3094, 1.442695
        %v3602 = vpow.pop %v3601
        %v3603 = vmul.f32 %v3095, 1.442695
        %v3604 = vpow.pop %v3603
        %v3605 = vmul.f32 %v3096, 1.442695
        %v3606 = vpow.pop %v3605
        %v3607 = vmul.f32 %v3097, 1.442695
        %v3608 = vpow.pop %v3607
        %v3609 = vmul.f32 %v3098, 1.442695
        %v3610 = vpow.pop %v3609
        %v3611 = vadd.f32 %v3100, %v3102
        %3612 = vadd.xlane.f32.xlu0 %v3611
        %v3613 = vpop.xlane.xlu0 %3612
        %v3614 = vadd.f32 %v3104, %v3106
        %3615 = vadd.xlane.f32.xlu0 %v3614
        %v3616 = vpop.xlane.xlu0 %3615
        %v3617 = vadd.f32 %v3108, %v3110
        %3618 = vadd.xlane.f32.xlu0 %v3617
        %v3619 = vpop.xlane.xlu0 %3618
        %v3620 = vadd.f32 %v3112, %v3114
        %3621 = vadd.xlane.f32.xlu0 %v3620
        %v3622 = vpop.xlane.xlu0 %3621
        %v3623 = vadd.f32 %v3116, %v3118
        %3624 = vadd.xlane.f32.xlu0 %v3623
        %v3625 = vpop.xlane.xlu0 %3624
        %v3626 = vadd.f32 %v3120, %v3122
        %3627 = vadd.xlane.f32.xlu0 %v3626
        %v3628 = vpop.xlane.xlu0 %3627
        %v3629 = vadd.f32 %v3124, %v3126
        %3630 = vadd.xlane.f32.xlu0 %v3629
        %v3631 = vpop.xlane.xlu0 %3630
        %v3632 = vadd.f32 %v3128, %v3130
        %3633 = vadd.xlane.f32.xlu0 %v3632
        %v3634 = vpop.xlane.xlu0 %3633
        %v3635 = vadd.f32 %v3132, %v3134
        %3636 = vadd.xlane.f32.xlu0 %v3635
        %v3637 = vpop.xlane.xlu0 %3636
        %v3638 = vadd.f32 %v3136, %v3138
        %3639 = vadd.xlane.f32.xlu0 %v3638
        %v3640 = vpop.xlane.xlu0 %3639
        %v3641 = vadd.f32 %v3140, %v3142
        %3642 = vadd.xlane.f32.xlu0 %v3641
        %v3643 = vpop.xlane.xlu0 %3642
        %v3644 = vadd.f32 %v3144, %v3146
        %3645 = vadd.xlane.f32.xlu0 %v3644
        %v3646 = vpop.xlane.xlu0 %3645
        %v3647 = vadd.f32 %v3148, %v3150
        %3648 = vadd.xlane.f32.xlu0 %v3647
        %v3649 = vpop.xlane.xlu0 %3648
        %v3650 = vadd.f32 %v3152, %v3154
        %3651 = vadd.xlane.f32.xlu0 %v3650
        %v3652 = vpop.xlane.xlu0 %3651
        %v3653 = vadd.f32 %v3156, %v3158
        %3654 = vadd.xlane.f32.xlu0 %v3653
        %v3655 = vpop.xlane.xlu0 %3654
        %v3656 = vadd.f32 %v3160, %v3162
        %3657 = vadd.xlane.f32.xlu0 %v3656
        %v3658 = vpop.xlane.xlu0 %3657
        %v3659 = vadd.f32 %v3164, %v3166
        %3660 = vadd.xlane.f32.xlu0 %v3659
        %v3661 = vpop.xlane.xlu0 %3660
        %v3662 = vadd.f32 %v3168, %v3170
        %3663 = vadd.xlane.f32.xlu0 %v3662
        %v3664 = vpop.xlane.xlu0 %3663
        %v3665 = vadd.f32 %v3172, %v3174
        %3666 = vadd.xlane.f32.xlu0 %v3665
        %v3667 = vpop.xlane.xlu0 %3666
        %v3668 = vadd.f32 %v3176, %v3178
        %3669 = vadd.xlane.f32.xlu0 %v3668
        %v3670 = vpop.xlane.xlu0 %3669
        %v3671 = vadd.f32 %v3180, %v3182
        %3672 = vadd.xlane.f32.xlu0 %v3671
        %v3673 = vpop.xlane.xlu0 %3672
        %v3674 = vadd.f32 %v3184, %v3186
        %3675 = vadd.xlane.f32.xlu0 %v3674
        %v3676 = vpop.xlane.xlu0 %3675
        %v3677 = vadd.f32 %v3188, %v3190
        %3678 = vadd.xlane.f32.xlu0 %v3677
        %v3679 = vpop.xlane.xlu0 %3678
        %v3680 = vadd.f32 %v3192, %v3194
        %3681 = vadd.xlane.f32.xlu0 %v3680
        %v3682 = vpop.xlane.xlu0 %3681
        %v3683 = vadd.f32 %v3196, %v3198
        %3684 = vadd.xlane.f32.xlu0 %v3683
        %v3685 = vpop.xlane.xlu0 %3684
        %v3686 = vadd.f32 %v3200, %v3202
        %3687 = vadd.xlane.f32.xlu0 %v3686
        %v3688 = vpop.xlane.xlu0 %3687
        %v3689 = vadd.f32 %v3204, %v3206
        %3690 = vadd.xlane.f32.xlu0 %v3689
        %v3691 = vpop.xlane.xlu0 %3690
        %v3692 = vadd.f32 %v3208, %v3210
        %3693 = vadd.xlane.f32.xlu0 %v3692
        %v3694 = vpop.xlane.xlu0 %3693
        %v3695 = vadd.f32 %v3212, %v3214
        %3696 = vadd.xlane.f32.xlu0 %v3695
        %v3697 = vpop.xlane.xlu0 %3696
        %v3698 = vadd.f32 %v3216, %v3218
        %3699 = vadd.xlane.f32.xlu0 %v3698
        %v3700 = vpop.xlane.xlu0 %3699
        %v3701 = vadd.f32 %v3220, %v3222
        %3702 = vadd.xlane.f32.xlu0 %v3701
        %v3703 = vpop.xlane.xlu0 %3702
        %v3704 = vadd.f32 %v3224, %v3226
        %3705 = vadd.xlane.f32.xlu0 %v3704
        %v3706 = vpop.xlane.xlu0 %3705
        %v3707 = vadd.f32 %v3228, %v3230
        %3708 = vadd.xlane.f32.xlu0 %v3707
        %v3709 = vpop.xlane.xlu0 %3708
        %v3710 = vadd.f32 %v3232, %v3234
        %3711 = vadd.xlane.f32.xlu0 %v3710
        %v3712 = vpop.xlane.xlu0 %3711
        %v3713 = vadd.f32 %v3236, %v3238
        %3714 = vadd.xlane.f32.xlu0 %v3713
        %v3715 = vpop.xlane.xlu0 %3714
        %v3716 = vadd.f32 %v3240, %v3242
        %3717 = vadd.xlane.f32.xlu0 %v3716
        %v3718 = vpop.xlane.xlu0 %3717
        %v3719 = vadd.f32 %v3244, %v3246
        %3720 = vadd.xlane.f32.xlu0 %v3719
        %v3721 = vpop.xlane.xlu0 %3720
        %v3722 = vadd.f32 %v3248, %v3250
        %3723 = vadd.xlane.f32.xlu0 %v3722
        %v3724 = vpop.xlane.xlu0 %3723
        %v3725 = vadd.f32 %v3252, %v3254
        %3726 = vadd.xlane.f32.xlu0 %v3725
        %v3727 = vpop.xlane.xlu0 %3726
        %v3728 = vadd.f32 %v3256, %v3258
        %3729 = vadd.xlane.f32.xlu0 %v3728
        %v3730 = vpop.xlane.xlu0 %3729
        %v3731 = vadd.f32 %v3260, %v3262
        %3732 = vadd.xlane.f32.xlu0 %v3731
        %v3733 = vpop.xlane.xlu0 %3732
        %v3734 = vadd.f32 %v3264, %v3266
        %3735 = vadd.xlane.f32.xlu0 %v3734
        %v3736 = vpop.xlane.xlu0 %3735
        %v3737 = vadd.f32 %v3268, %v3270
        %3738 = vadd.xlane.f32.xlu0 %v3737
        %v3739 = vpop.xlane.xlu0 %3738
        %v3740 = vadd.f32 %v3272, %v3274
        %3741 = vadd.xlane.f32.xlu0 %v3740
        %v3742 = vpop.xlane.xlu0 %3741
        %v3743 = vadd.f32 %v3276, %v3278
        %3744 = vadd.xlane.f32.xlu0 %v3743
        %v3745 = vpop.xlane.xlu0 %3744
        %v3746 = vadd.f32 %v3280, %v3282
        %3747 = vadd.xlane.f32.xlu0 %v3746
        %v3748 = vpop.xlane.xlu0 %3747
        %v3749 = vadd.f32 %v3284, %v3286
        %3750 = vadd.xlane.f32.xlu0 %v3749
        %v3751 = vpop.xlane.xlu0 %3750
        %v3752 = vadd.f32 %v3288, %v3290
        %3753 = vadd.xlane.f32.xlu0 %v3752
        %v3754 = vpop.xlane.xlu0 %3753
        %v3755 = vadd.f32 %v3292, %v3294
        %3756 = vadd.xlane.f32.xlu0 %v3755
        %v3757 = vpop.xlane.xlu0 %3756
        %v3758 = vadd.f32 %v3296, %v3298
        %3759 = vadd.xlane.f32.xlu0 %v3758
        %v3760 = vpop.xlane.xlu0 %3759
        %v3761 = vadd.f32 %v3300, %v3302
        %3762 = vadd.xlane.f32.xlu0 %v3761
        %v3763 = vpop.xlane.xlu0 %3762
        %v3764 = vadd.f32 %v3304, %v3306
        %3765 = vadd.xlane.f32.xlu0 %v3764
        %v3766 = vpop.xlane.xlu0 %3765
        %v3767 = vadd.f32 %v3308, %v3310
        %3768 = vadd.xlane.f32.xlu0 %v3767
        %v3769 = vpop.xlane.xlu0 %3768
        %v3770 = vadd.f32 %v3312, %v3314
        %3771 = vadd.xlane.f32.xlu0 %v3770
        %v3772 = vpop.xlane.xlu0 %3771
        %v3773 = vadd.f32 %v3316, %v3318
        %3774 = vadd.xlane.f32.xlu0 %v3773
        %v3775 = vpop.xlane.xlu0 %3774
        %v3776 = vadd.f32 %v3320, %v3322
        %3777 = vadd.xlane.f32.xlu0 %v3776
        %v3778 = vpop.xlane.xlu0 %3777
        %v3779 = vadd.f32 %v3324, %v3326
        %3780 = vadd.xlane.f32.xlu0 %v3779
        %v3781 = vpop.xlane.xlu0 %3780
        %v3782 = vadd.f32 %v3328, %v3330
        %3783 = vadd.xlane.f32.xlu0 %v3782
        %v3784 = vpop.xlane.xlu0 %3783
        %v3785 = vadd.f32 %v3332, %v3334
        %3786 = vadd.xlane.f32.xlu0 %v3785
        %v3787 = vpop.xlane.xlu0 %3786
        %v3788 = vadd.f32 %v3336, %v3338
        %3789 = vadd.xlane.f32.xlu0 %v3788
        %v3790 = vpop.xlane.xlu0 %3789
        %v3791 = vadd.f32 %v3340, %v3342
        %3792 = vadd.xlane.f32.xlu0 %v3791
        %v3793 = vpop.xlane.xlu0 %3792
        %v3794 = vadd.f32 %v3344, %v3346
        %3795 = vadd.xlane.f32.xlu0 %v3794
        %v3796 = vpop.xlane.xlu0 %3795
        %v3797 = vadd.f32 %v3348, %v3350
        %3798 = vadd.xlane.f32.xlu0 %v3797
        %v3799 = vpop.xlane.xlu0 %3798
        %v3800 = vadd.f32 %v3352, %v3354
        %3801 = vadd.xlane.f32.xlu0 %v3800
        %v3802 = vpop.xlane.xlu0 %3801
        %v3803 = vadd.f32 %v3356, %v3358
        %3804 = vadd.xlane.f32.xlu0 %v3803
        %v3805 = vpop.xlane.xlu0 %3804
        %v3806 = vadd.f32 %v3360, %v3362
        %3807 = vadd.xlane.f32.xlu0 %v3806
        %v3808 = vpop.xlane.xlu0 %3807
        %v3809 = vadd.f32 %v3364, %v3366
        %3810 = vadd.xlane.f32.xlu0 %v3809
        %v3811 = vpop.xlane.xlu0 %3810
        %v3812 = vadd.f32 %v3368, %v3370
        %3813 = vadd.xlane.f32.xlu0 %v3812
        %v3814 = vpop.xlane.xlu0 %3813
        %v3815 = vadd.f32 %v3372, %v3374
        %3816 = vadd.xlane.f32.xlu0 %v3815
        %v3817 = vpop.xlane.xlu0 %3816
        %v3818 = vadd.f32 %v3376, %v3378
        %3819 = vadd.xlane.f32.xlu0 %v3818
        %v3820 = vpop.xlane.xlu0 %3819
        %v3821 = vadd.f32 %v3380, %v3382
        %3822 = vadd.xlane.f32.xlu0 %v3821
        %v3823 = vpop.xlane.xlu0 %3822
        %v3824 = vadd.f32 %v3384, %v3386
        %3825 = vadd.xlane.f32.xlu0 %v3824
        %v3826 = vpop.xlane.xlu0 %3825
        %v3827 = vadd.f32 %v3388, %v3390
        %3828 = vadd.xlane.f32.xlu0 %v3827
        %v3829 = vpop.xlane.xlu0 %3828
        %v3830 = vadd.f32 %v3392, %v3394
        %3831 = vadd.xlane.f32.xlu0 %v3830
        %v3832 = vpop.xlane.xlu0 %3831
        %v3833 = vadd.f32 %v3396, %v3398
        %3834 = vadd.xlane.f32.xlu0 %v3833
        %v3835 = vpop.xlane.xlu0 %3834
        %v3836 = vadd.f32 %v3400, %v3402
        %3837 = vadd.xlane.f32.xlu0 %v3836
        %v3838 = vpop.xlane.xlu0 %3837
        %v3839 = vadd.f32 %v3404, %v3406
        %3840 = vadd.xlane.f32.xlu0 %v3839
        %v3841 = vpop.xlane.xlu0 %3840
        %v3842 = vadd.f32 %v3408, %v3410
        %3843 = vadd.xlane.f32.xlu0 %v3842
        %v3844 = vpop.xlane.xlu0 %3843
        %v3845 = vadd.f32 %v3412, %v3414
        %3846 = vadd.xlane.f32.xlu0 %v3845
        %v3847 = vpop.xlane.xlu0 %3846
        %v3848 = vadd.f32 %v3416, %v3418
        %3849 = vadd.xlane.f32.xlu0 %v3848
        %v3850 = vpop.xlane.xlu0 %3849
        %v3851 = vadd.f32 %v3420, %v3422
        %3852 = vadd.xlane.f32.xlu0 %v3851
        %v3853 = vpop.xlane.xlu0 %3852
        %v3854 = vadd.f32 %v3424, %v3426
        %3855 = vadd.xlane.f32.xlu0 %v3854
        %v3856 = vpop.xlane.xlu0 %3855
        %v3857 = vadd.f32 %v3428, %v3430
        %3858 = vadd.xlane.f32.xlu0 %v3857
        %v3859 = vpop.xlane.xlu0 %3858
        %v3860 = vadd.f32 %v3432, %v3434
        %3861 = vadd.xlane.f32.xlu0 %v3860
        %v3862 = vpop.xlane.xlu0 %3861
        %v3863 = vadd.f32 %v3436, %v3438
        %3864 = vadd.xlane.f32.xlu0 %v3863
        %v3865 = vpop.xlane.xlu0 %3864
        %v3866 = vadd.f32 %v3440, %v3442
        %3867 = vadd.xlane.f32.xlu0 %v3866
        %v3868 = vpop.xlane.xlu0 %3867
        %v3869 = vadd.f32 %v3444, %v3446
        %3870 = vadd.xlane.f32.xlu0 %v3869
        %v3871 = vpop.xlane.xlu0 %3870
        %v3872 = vadd.f32 %v3448, %v3450
        %3873 = vadd.xlane.f32.xlu0 %v3872
        %v3874 = vpop.xlane.xlu0 %3873
        %v3875 = vadd.f32 %v3452, %v3454
        %3876 = vadd.xlane.f32.xlu0 %v3875
        %v3877 = vpop.xlane.xlu0 %3876
        %v3878 = vadd.f32 %v3456, %v3458
        %3879 = vadd.xlane.f32.xlu0 %v3878
        %v3880 = vpop.xlane.xlu0 %3879
        %v3881 = vadd.f32 %v3460, %v3462
        %3882 = vadd.xlane.f32.xlu0 %v3881
        %v3883 = vpop.xlane.xlu0 %3882
        %v3884 = vadd.f32 %v3464, %v3466
        %3885 = vadd.xlane.f32.xlu0 %v3884
        %v3886 = vpop.xlane.xlu0 %3885
        %v3887 = vadd.f32 %v3468, %v3470
        %3888 = vadd.xlane.f32.xlu0 %v3887
        %v3889 = vpop.xlane.xlu0 %3888
        %v3890 = vadd.f32 %v3472, %v3474
        %3891 = vadd.xlane.f32.xlu0 %v3890
        %v3892 = vpop.xlane.xlu0 %3891
        %v3893 = vadd.f32 %v3476, %v3478
        %3894 = vadd.xlane.f32.xlu0 %v3893
        %v3895 = vpop.xlane.xlu0 %3894
        %v3896 = vadd.f32 %v3480, %v3482
        %3897 = vadd.xlane.f32.xlu0 %v3896
        %v3898 = vpop.xlane.xlu0 %3897
        %v3899 = vadd.f32 %v3484, %v3486
        %3900 = vadd.xlane.f32.xlu0 %v3899
        %v3901 = vpop.xlane.xlu0 %3900
        %v3902 = vadd.f32 %v3488, %v3490
        %3903 = vadd.xlane.f32.xlu0 %v3902
        %v3904 = vpop.xlane.xlu0 %3903
        %v3905 = vadd.f32 %v3492, %v3494
        %3906 = vadd.xlane.f32.xlu0 %v3905
        %v3907 = vpop.xlane.xlu0 %3906
        %v3908 = vadd.f32 %v3496, %v3498
        %3909 = vadd.xlane.f32.xlu0 %v3908
        %v3910 = vpop.xlane.xlu0 %3909
        %v3911 = vadd.f32 %v3500, %v3502
        %3912 = vadd.xlane.f32.xlu0 %v3911
        %v3913 = vpop.xlane.xlu0 %3912
        %v3914 = vadd.f32 %v3504, %v3506
        %3915 = vadd.xlane.f32.xlu0 %v3914
        %v3916 = vpop.xlane.xlu0 %3915
        %v3917 = vadd.f32 %v3508, %v3510
        %3918 = vadd.xlane.f32.xlu0 %v3917
        %v3919 = vpop.xlane.xlu0 %3918
        %v3920 = vadd.f32 %v3512, %v3514
        %3921 = vadd.xlane.f32.xlu0 %v3920
        %v3922 = vpop.xlane.xlu0 %3921
        %v3923 = vadd.f32 %v3516, %v3518
        %3924 = vadd.xlane.f32.xlu0 %v3923
        %v3925 = vpop.xlane.xlu0 %3924
        %v3926 = vadd.f32 %v3520, %v3522
        %3927 = vadd.xlane.f32.xlu0 %v3926
        %v3928 = vpop.xlane.xlu0 %3927
        %v3929 = vadd.f32 %v3524, %v3526
        %3930 = vadd.xlane.f32.xlu0 %v3929
        %v3931 = vpop.xlane.xlu0 %3930
        %v3932 = vadd.f32 %v3528, %v3530
        %3933 = vadd.xlane.f32.xlu0 %v3932
        %v3934 = vpop.xlane.xlu0 %3933
        %v3935 = vadd.f32 %v3532, %v3534
        %3936 = vadd.xlane.f32.xlu0 %v3935
        %v3937 = vpop.xlane.xlu0 %3936
        %v3938 = vadd.f32 %v3536, %v3538
        %3939 = vadd.xlane.f32.xlu0 %v3938
        %v3940 = vpop.xlane.xlu0 %3939
        %v3941 = vadd.f32 %v3540, %v3542
        %3942 = vadd.xlane.f32.xlu0 %v3941
        %v3943 = vpop.xlane.xlu0 %3942
        %v3944 = vadd.f32 %v3544, %v3546
        %3945 = vadd.xlane.f32.xlu0 %v3944
        %v3946 = vpop.xlane.xlu0 %3945
        %v3947 = vadd.f32 %v3548, %v3550
        %3948 = vadd.xlane.f32.xlu0 %v3947
        %v3949 = vpop.xlane.xlu0 %3948
        %v3950 = vadd.f32 %v3552, %v3554
        %3951 = vadd.xlane.f32.xlu0 %v3950
        %v3952 = vpop.xlane.xlu0 %3951
        %v3953 = vadd.f32 %v3556, %v3558
        %3954 = vadd.xlane.f32.xlu0 %v3953
        %v3955 = vpop.xlane.xlu0 %3954
        %v3956 = vadd.f32 %v3560, %v3562
        %3957 = vadd.xlane.f32.xlu0 %v3956
        %v3958 = vpop.xlane.xlu0 %3957
        %v3959 = vadd.f32 %v3564, %v3566
        %3960 = vadd.xlane.f32.xlu0 %v3959
        %v3961 = vpop.xlane.xlu0 %3960
        %v3962 = vadd.f32 %v3568, %v3570
        %3963 = vadd.xlane.f32.xlu0 %v3962
        %v3964 = vpop.xlane.xlu0 %3963
        %v3965 = vadd.f32 %v3572, %v3574
        %3966 = vadd.xlane.f32.xlu0 %v3965
        %v3967 = vpop.xlane.xlu0 %3966
        %v3968 = vadd.f32 %v3576, %v3578
        %3969 = vadd.xlane.f32.xlu0 %v3968
        %v3970 = vpop.xlane.xlu0 %3969
        %v3971 = vadd.f32 %v3580, %v3582
        %3972 = vadd.xlane.f32.xlu0 %v3971
        %v3973 = vpop.xlane.xlu0 %3972
        %v3974 = vadd.f32 %v3584, %v3586
        %3975 = vadd.xlane.f32.xlu0 %v3974
        %v3976 = vpop.xlane.xlu0 %3975
        %v3977 = vadd.f32 %v3588, %v3590
        %3978 = vadd.xlane.f32.xlu0 %v3977
        %v3979 = vpop.xlane.xlu0 %3978
        %v3980 = vadd.f32 %v3592, %v3594
        %3981 = vadd.xlane.f32.xlu0 %v3980
        %v3982 = vpop.xlane.xlu0 %3981
        %v3983 = vadd.f32 %v3596, %v3598
        %3984 = vadd.xlane.f32.xlu0 %v3983
        %v3985 = vpop.xlane.xlu0 %3984
        %v3986 = vadd.f32 %v3600, %v3602
        %3987 = vadd.xlane.f32.xlu0 %v3986
        %v3988 = vpop.xlane.xlu0 %3987
        %v3989 = vadd.f32 %v3604, %v3606
        %3990 = vadd.xlane.f32.xlu0 %v3989
        %v3991 = vpop.xlane.xlu0 %3990
        %v3992 = vadd.f32 %v3608, %v3610
        %3993 = vadd.xlane.f32.xlu0 %v3992
        %v3994 = vpop.xlane.xlu0 %3993
        %v3995 = vrcp.pop %v3613
        %v3996 = vrcp.pop %v3616
        %v3997 = vrcp.pop %v3619
        %v3998 = vrcp.pop %v3622
        %v3999 = vrcp.pop %v3625
        %v4000 = vrcp.pop %v3628
        %v4001 = vrcp.pop %v3631
        %v4002 = vrcp.pop %v3634
        %v4003 = vrcp.pop %v3637
        %v4004 = vrcp.pop %v3640
        %v4005 = vrcp.pop %v3643
        %v4006 = vrcp.pop %v3646
        %v4007 = vrcp.pop %v3649
        %v4008 = vrcp.pop %v3652
        %v4009 = vrcp.pop %v3655
        %v4010 = vrcp.pop %v3658
        %v4011 = vrcp.pop %v3661
        %v4012 = vrcp.pop %v3664
        %v4013 = vrcp.pop %v3667
        %v4014 = vrcp.pop %v3670
        %v4015 = vrcp.pop %v3673
        %v4016 = vrcp.pop %v3676
        %v4017 = vrcp.pop %v3679
        %v4018 = vrcp.pop %v3682
        %v4019 = vrcp.pop %v3685
        %v4020 = vrcp.pop %v3688
        %v4021 = vrcp.pop %v3691
        %v4022 = vrcp.pop %v3694
        %v4023 = vrcp.pop %v3697
        %v4024 = vrcp.pop %v3700
        %v4025 = vrcp.pop %v3703
        %v4026 = vrcp.pop %v3706
        %v4027 = vrcp.pop %v3709
        %v4028 = vrcp.pop %v3712
        %v4029 = vrcp.pop %v3715
        %v4030 = vrcp.pop %v3718
        %v4031 = vrcp.pop %v3721
        %v4032 = vrcp.pop %v3724
        %v4033 = vrcp.pop %v3727
        %v4034 = vrcp.pop %v3730
        %v4035 = vrcp.pop %v3733
        %v4036 = vrcp.pop %v3736
        %v4037 = vrcp.pop %v3739
        %v4038 = vrcp.pop %v3742
        %v4039 = vrcp.pop %v3745
        %v4040 = vrcp.pop %v3748
        %v4041 = vrcp.pop %v3751
        %v4042 = vrcp.pop %v3754
        %v4043 = vrcp.pop %v3757
        %v4044 = vrcp.pop %v3760
        %v4045 = vrcp.pop %v3763
        %v4046 = vrcp.pop %v3766
        %v4047 = vrcp.pop %v3769
        %v4048 = vrcp.pop %v3772
        %v4049 = vrcp.pop %v3775
        %v4050 = vrcp.pop %v3778
        %v4051 = vrcp.pop %v3781
        %v4052 = vrcp.pop %v3784
        %v4053 = vrcp.pop %v3787
        %v4054 = vrcp.pop %v3790
        %v4055 = vrcp.pop %v3793
        %v4056 = vrcp.pop %v3796
        %v4057 = vrcp.pop %v3799
        %v4058 = vrcp.pop %v3802
        %v4059 = vrcp.pop %v3805
        %v4060 = vrcp.pop %v3808
        %v4061 = vrcp.pop %v3811
        %v4062 = vrcp.pop %v3814
        %v4063 = vrcp.pop %v3817
        %v4064 = vrcp.pop %v3820
        %v4065 = vrcp.pop %v3823
        %v4066 = vrcp.pop %v3826
        %v4067 = vrcp.pop %v3829
        %v4068 = vrcp.pop %v3832
        %v4069 = vrcp.pop %v3835
        %v4070 = vrcp.pop %v3838
        %v4071 = vrcp.pop %v3841
        %v4072 = vrcp.pop %v3844
        %v4073 = vrcp.pop %v3847
        %v4074 = vrcp.pop %v3850
        %v4075 = vrcp.pop %v3853
        %v4076 = vrcp.pop %v3856
        %v4077 = vrcp.pop %v3859
        %v4078 = vrcp.pop %v3862
        %v4079 = vrcp.pop %v3865
        %v4080 = vrcp.pop %v3868
        %v4081 = vrcp.pop %v3871
        %v4082 = vrcp.pop %v3874
        %v4083 = vrcp.pop %v3877
        %v4084 = vrcp.pop %v3880
        %v4085 = vrcp.pop %v3883
        %v4086 = vrcp.pop %v3886
        %v4087 = vrcp.pop %v3889
        %v4088 = vrcp.pop %v3892
        %v4089 = vrcp.pop %v3895
        %v4090 = vrcp.pop %v3898
        %v4091 = vrcp.pop %v3901
        %v4092 = vrcp.pop %v3904
        %v4093 = vrcp.pop %v3907
        %v4094 = vrcp.pop %v3910
        %v4095 = vrcp.pop %v3913
        %v4096 = vrcp.pop %v3916
        %v4097 = vrcp.pop %v3919
        %v4098 = vrcp.pop %v3922
        %v4099 = vrcp.pop %v3925
        %v4100 = vrcp.pop %v3928
        %v4101 = vrcp.pop %v3931
        %v4102 = vrcp.pop %v3934
        %v4103 = vrcp.pop %v3937
        %v4104 = vrcp.pop %v3940
        %v4105 = vrcp.pop %v3943
        %v4106 = vrcp.pop %v3946
        %v4107 = vrcp.pop %v3949
        %v4108 = vrcp.pop %v3952
        %v4109 = vrcp.pop %v3955
        %v4110 = vrcp.pop %v3958
        %v4111 = vrcp.pop %v3961
        %v4112 = vrcp.pop %v3964
        %v4113 = vrcp.pop %v3967
        %v4114 = vrcp.pop %v3970
        %v4115 = vrcp.pop %v3973
        %v4116 = vrcp.pop %v3976
        %v4117 = vrcp.pop %v3979
        %v4118 = vrcp.pop %v3982
        %v4119 = vrcp.pop %v3985
        %v4120 = vrcp.pop %v3988
        %v4121 = vrcp.pop %v3991
        %v4122 = vrcp.pop %v3994
        %v4123 = vmul.f32 %v3100, %v3995
        %v4124 = vmul.f32 %v3102, %v3995
        %v4125 = vmul.f32 %v3104, %v3996
        %v4126 = vmul.f32 %v3106, %v3996
        %v4127 = vmul.f32 %v3108, %v3997
        %v4128 = vmul.f32 %v3110, %v3997
        %v4129 = vmul.f32 %v3112, %v3998
        %v4130 = vmul.f32 %v3114, %v3998
        %v4131 = vmul.f32 %v3116, %v3999
        %v4132 = vmul.f32 %v3118, %v3999
        %v4133 = vmul.f32 %v3120, %v4000
        %v4134 = vmul.f32 %v3122, %v4000
        %v4135 = vmul.f32 %v3124, %v4001
        %v4136 = vmul.f32 %v3126, %v4001
        %v4137 = vmul.f32 %v3128, %v4002
        %v4138 = vmul.f32 %v3130, %v4002
        %v4139 = vmul.f32 %v3132, %v4003
        %v4140 = vmul.f32 %v3134, %v4003
        %v4141 = vmul.f32 %v3136, %v4004
        %v4142 = vmul.f32 %v3138, %v4004
        %v4143 = vmul.f32 %v3140, %v4005
        %v4144 = vmul.f32 %v3142, %v4005
        %v4145 = vmul.f32 %v3144, %v4006
        %v4146 = vmul.f32 %v3146, %v4006
        %v4147 = vmul.f32 %v3148, %v4007
        %v4148 = vmul.f32 %v3150, %v4007
        %v4149 = vmul.f32 %v3152, %v4008
        %v4150 = vmul.f32 %v3154, %v4008
        %v4151 = vmul.f32 %v3156, %v4009
        %v4152 = vmul.f32 %v3158, %v4009
        %v4153 = vmul.f32 %v3160, %v4010
        %v4154 = vmul.f32 %v3162, %v4010
        %v4155 = vmul.f32 %v3164, %v4011
        %v4156 = vmul.f32 %v3166, %v4011
        %v4157 = vmul.f32 %v3168, %v4012
        %v4158 = vmul.f32 %v3170, %v4012
        %v4159 = vmul.f32 %v3172, %v4013
        %v4160 = vmul.f32 %v3174, %v4013
        %v4161 = vmul.f32 %v3176, %v4014
        %v4162 = vmul.f32 %v3178, %v4014
        %v4163 = vmul.f32 %v3180, %v4015
        %v4164 = vmul.f32 %v3182, %v4015
        %v4165 = vmul.f32 %v3184, %v4016
        %v4166 = vmul.f32 %v3186, %v4016
        %v4167 = vmul.f32 %v3188, %v4017
        %v4168 = vmul.f32 %v3190, %v4017
        %v4169 = vmul.f32 %v3192, %v4018
        %v4170 = vmul.f32 %v3194, %v4018
        %v4171 = vmul.f32 %v3196, %v4019
        %v4172 = vmul.f32 %v3198, %v4019
        %v4173 = vmul.f32 %v3200, %v4020
        %v4174 = vmul.f32 %v3202, %v4020
        %v4175 = vmul.f32 %v3204, %v4021
        %v4176 = vmul.f32 %v3206, %v4021
        %v4177 = vmul.f32 %v3208, %v4022
        %v4178 = vmul.f32 %v3210, %v4022
        %v4179 = vmul.f32 %v3212, %v4023
        %v4180 = vmul.f32 %v3214, %v4023
        %v4181 = vmul.f32 %v3216, %v4024
        %v4182 = vmul.f32 %v3218, %v4024
        %v4183 = vmul.f32 %v3220, %v4025
        %v4184 = vmul.f32 %v3222, %v4025
        %v4185 = vmul.f32 %v3224, %v4026
        %v4186 = vmul.f32 %v3226, %v4026
        %v4187 = vmul.f32 %v3228, %v4027
        %v4188 = vmul.f32 %v3230, %v4027
        %v4189 = vmul.f32 %v3232, %v4028
        %v4190 = vmul.f32 %v3234, %v4028
        %v4191 = vmul.f32 %v3236, %v4029
        %v4192 = vmul.f32 %v3238, %v4029
        %v4193 = vmul.f32 %v3240, %v4030
        %v4194 = vmul.f32 %v3242, %v4030
        %v4195 = vmul.f32 %v3244, %v4031
        %v4196 = vmul.f32 %v3246, %v4031
        %v4197 = vmul.f32 %v3248, %v4032
        %v4198 = vmul.f32 %v3250, %v4032
        %v4199 = vmul.f32 %v3252, %v4033
        %v4200 = vmul.f32 %v3254, %v4033
        %v4201 = vmul.f32 %v3256, %v4034
        %v4202 = vmul.f32 %v3258, %v4034
        %v4203 = vmul.f32 %v3260, %v4035
        %v4204 = vmul.f32 %v3262, %v4035
        %v4205 = vmul.f32 %v3264, %v4036
        %v4206 = vmul.f32 %v3266, %v4036
        %v4207 = vmul.f32 %v3268, %v4037
        %v4208 = vmul.f32 %v3270, %v4037
        %v4209 = vmul.f32 %v3272, %v4038
        %v4210 = vmul.f32 %v3274, %v4038
        %v4211 = vmul.f32 %v3276, %v4039
        %v4212 = vmul.f32 %v3278, %v4039
        %v4213 = vmul.f32 %v3280, %v4040
        %v4214 = vmul.f32 %v3282, %v4040
        %v4215 = vmul.f32 %v3284, %v4041
        %v4216 = vmul.f32 %v3286, %v4041
        %v4217 = vmul.f32 %v3288, %v4042
        %v4218 = vmul.f32 %v3290, %v4042
        %v4219 = vmul.f32 %v3292, %v4043
        %v4220 = vmul.f32 %v3294, %v4043
        %v4221 = vmul.f32 %v3296, %v4044
        %v4222 = vmul.f32 %v3298, %v4044
        %v4223 = vmul.f32 %v3300, %v4045
        %v4224 = vmul.f32 %v3302, %v4045
        %v4225 = vmul.f32 %v3304, %v4046
        %v4226 = vmul.f32 %v3306, %v4046
        %v4227 = vmul.f32 %v3308, %v4047
        %v4228 = vmul.f32 %v3310, %v4047
        %v4229 = vmul.f32 %v3312, %v4048
        %v4230 = vmul.f32 %v3314, %v4048
        %v4231 = vmul.f32 %v3316, %v4049
        %v4232 = vmul.f32 %v3318, %v4049
        %v4233 = vmul.f32 %v3320, %v4050
        %v4234 = vmul.f32 %v3322, %v4050
        %v4235 = vmul.f32 %v3324, %v4051
        %v4236 = vmul.f32 %v3326, %v4051
        %v4237 = vmul.f32 %v3328, %v4052
        %v4238 = vmul.f32 %v3330, %v4052
        %v4239 = vmul.f32 %v3332, %v4053
        %v4240 = vmul.f32 %v3334, %v4053
        %v4241 = vmul.f32 %v3336, %v4054
        %v4242 = vmul.f32 %v3338, %v4054
        %v4243 = vmul.f32 %v3340, %v4055
        %v4244 = vmul.f32 %v3342, %v4055
        %v4245 = vmul.f32 %v3344, %v4056
        %v4246 = vmul.f32 %v3346, %v4056
        %v4247 = vmul.f32 %v3348, %v4057
        %v4248 = vmul.f32 %v3350, %v4057
        %v4249 = vmul.f32 %v3352, %v4058
        %v4250 = vmul.f32 %v3354, %v4058
        %v4251 = vmul.f32 %v3356, %v4059
        %v4252 = vmul.f32 %v3358, %v4059
        %v4253 = vmul.f32 %v3360, %v4060
        %v4254 = vmul.f32 %v3362, %v4060
        %v4255 = vmul.f32 %v3364, %v4061
        %v4256 = vmul.f32 %v3366, %v4061
        %v4257 = vmul.f32 %v3368, %v4062
        %v4258 = vmul.f32 %v3370, %v4062
        %v4259 = vmul.f32 %v3372, %v4063
        %v4260 = vmul.f32 %v3374, %v4063
        %v4261 = vmul.f32 %v3376, %v4064
        %v4262 = vmul.f32 %v3378, %v4064
        %v4263 = vmul.f32 %v3380, %v4065
        %v4264 = vmul.f32 %v3382, %v4065
        %v4265 = vmul.f32 %v3384, %v4066
        %v4266 = vmul.f32 %v3386, %v4066
        %v4267 = vmul.f32 %v3388, %v4067
        %v4268 = vmul.f32 %v3390, %v4067
        %v4269 = vmul.f32 %v3392, %v4068
        %v4270 = vmul.f32 %v3394, %v4068
        %v4271 = vmul.f32 %v3396, %v4069
        %v4272 = vmul.f32 %v3398, %v4069
        %v4273 = vmul.f32 %v3400, %v4070
        %v4274 = vmul.f32 %v3402, %v4070
        %v4275 = vmul.f32 %v3404, %v4071
        %v4276 = vmul.f32 %v3406, %v4071
        %v4277 = vmul.f32 %v3408, %v4072
        %v4278 = vmul.f32 %v3410, %v4072
        %v4279 = vmul.f32 %v3412, %v4073
        %v4280 = vmul.f32 %v3414, %v4073
        %v4281 = vmul.f32 %v3416, %v4074
        %v4282 = vmul.f32 %v3418, %v4074
        %v4283 = vmul.f32 %v3420, %v4075
        %v4284 = vmul.f32 %v3422, %v4075
        %v4285 = vmul.f32 %v3424, %v4076
        %v4286 = vmul.f32 %v3426, %v4076
        %v4287 = vmul.f32 %v3428, %v4077
        %v4288 = vmul.f32 %v3430, %v4077
        %v4289 = vmul.f32 %v3432, %v4078
        %v4290 = vmul.f32 %v3434, %v4078
        %v4291 = vmul.f32 %v3436, %v4079
        %v4292 = vmul.f32 %v3438, %v4079
        %v4293 = vmul.f32 %v3440, %v4080
        %v4294 = vmul.f32 %v3442, %v4080
        %v4295 = vmul.f32 %v3444, %v4081
        %v4296 = vmul.f32 %v3446, %v4081
        %v4297 = vmul.f32 %v3448, %v4082
        %v4298 = vmul.f32 %v3450, %v4082
        %v4299 = vmul.f32 %v3452, %v4083
        %v4300 = vmul.f32 %v3454, %v4083
        %v4301 = vmul.f32 %v3456, %v4084
        %v4302 = vmul.f32 %v3458, %v4084
        %v4303 = vmul.f32 %v3460, %v4085
        %v4304 = vmul.f32 %v3462, %v4085
        %v4305 = vmul.f32 %v3464, %v4086
        %v4306 = vmul.f32 %v3466, %v4086
        %v4307 = vmul.f32 %v3468, %v4087
        %v4308 = vmul.f32 %v3470, %v4087
        %v4309 = vmul.f32 %v3472, %v4088
        %v4310 = vmul.f32 %v3474, %v4088
        %v4311 = vmul.f32 %v3476, %v4089
        %v4312 = vmul.f32 %v3478, %v4089
        %v4313 = vmul.f32 %v3480, %v4090
        %v4314 = vmul.f32 %v3482, %v4090
        %v4315 = vmul.f32 %v3484, %v4091
        %v4316 = vmul.f32 %v3486, %v4091
        %v4317 = vmul.f32 %v3488, %v4092
        %v4318 = vmul.f32 %v3490, %v4092
        %v4319 = vmul.f32 %v3492, %v4093
        %v4320 = vmul.f32 %v3494, %v4093
        %v4321 = vmul.f32 %v3496, %v4094
        %v4322 = vmul.f32 %v3498, %v4094
        %v4323 = vmul.f32 %v3500, %v4095
        %v4324 = vmul.f32 %v3502, %v4095
        %v4325 = vmul.f32 %v3504, %v4096
        %v4326 = vmul.f32 %v3506, %v4096
        %v4327 = vmul.f32 %v3508, %v4097
        %v4328 = vmul.f32 %v3510, %v4097
        %v4329 = vmul.f32 %v3512, %v4098
        %v4330 = vmul.f32 %v3514, %v4098
        %v4331 = vmul.f32 %v3516, %v4099
        %v4332 = vmul.f32 %v3518, %v4099
        %v4333 = vmul.f32 %v3520, %v4100
        %v4334 = vmul.f32 %v3522, %v4100
        %v4335 = vmul.f32 %v3524, %v4101
        %v4336 = vmul.f32 %v3526, %v4101
        %v4337 = vmul.f32 %v3528, %v4102
        %v4338 = vmul.f32 %v3530, %v4102
        %v4339 = vmul.f32 %v3532, %v4103
        %v4340 = vmul.f32 %v3534, %v4103
        %v4341 = vmul.f32 %v3536, %v4104
        %v4342 = vmul.f32 %v3538, %v4104
        %v4343 = vmul.f32 %v3540, %v4105
        %v4344 = vmul.f32 %v3542, %v4105
        %v4345 = vmul.f32 %v3544, %v4106
        %v4346 = vmul.f32 %v3546, %v4106
        %v4347 = vmul.f32 %v3548, %v4107
        %v4348 = vmul.f32 %v3550, %v4107
        %v4349 = vmul.f32 %v3552, %v4108
        %v4350 = vmul.f32 %v3554, %v4108
        %v4351 = vmul.f32 %v3556, %v4109
        %v4352 = vmul.f32 %v3558, %v4109
        %v4353 = vmul.f32 %v3560, %v4110
        %v4354 = vmul.f32 %v3562, %v4110
        %v4355 = vmul.f32 %v3564, %v4111
        %v4356 = vmul.f32 %v3566, %v4111
        %v4357 = vmul.f32 %v3568, %v4112
        %v4358 = vmul.f32 %v3570, %v4112
        %v4359 = vmul.f32 %v3572, %v4113
        %v4360 = vmul.f32 %v3574, %v4113
        %v4361 = vmul.f32 %v3576, %v4114
        %v4362 = vmul.f32 %v3578, %v4114
        %v4363 = vmul.f32 %v3580, %v4115
        %v4364 = vmul.f32 %v3582, %v4115
        %v4365 = vmul.f32 %v3584, %v4116
        %v4366 = vmul.f32 %v3586, %v4116
        %v4367 = vmul.f32 %v3588, %v4117
        %v4368 = vmul.f32 %v3590, %v4117
        %v4369 = vmul.f32 %v3592, %v4118
        %v4370 = vmul.f32 %v3594, %v4118
        %v4371 = vmul.f32 %v3596, %v4119
        %v4372 = vmul.f32 %v3598, %v4119
        %v4373 = vmul.f32 %v3600, %v4120
        %v4374 = vmul.f32 %v3602, %v4120
        %v4375 = vmul.f32 %v3604, %v4121
        %v4376 = vmul.f32 %v3606, %v4121
        %v4377 = vmul.f32 %v3608, %v4122
        %v4378 = vmul.f32 %v3610, %v4122
        %v4379 = vpack.c.bf16 %v4125, %v4123
        %v4380 = vpack.c.bf16 %v4126, %v4124
        %v4381 = vpack.c.bf16 %v4129, %v4127
        %v4382 = vpack.c.bf16 %v4130, %v4128
        %v4383 = vpack.c.bf16 %v4133, %v4131
        %v4384 = vpack.c.bf16 %v4134, %v4132
        %v4385 = vpack.c.bf16 %v4137, %v4135
        %v4386 = vpack.c.bf16 %v4138, %v4136
        %v4387 = vpack.c.bf16 %v4141, %v4139
        %v4388 = vpack.c.bf16 %v4142, %v4140
        %v4389 = vpack.c.bf16 %v4145, %v4143
        %v4390 = vpack.c.bf16 %v4146, %v4144
        %v4391 = vpack.c.bf16 %v4149, %v4147
        %v4392 = vpack.c.bf16 %v4150, %v4148
        %v4393 = vpack.c.bf16 %v4153, %v4151
        %v4394 = vpack.c.bf16 %v4154, %v4152
        %v4395 = vpack.c.bf16 %v4157, %v4155
        %v4396 = vpack.c.bf16 %v4158, %v4156
        %v4397 = vpack.c.bf16 %v4161, %v4159
        %v4398 = vpack.c.bf16 %v4162, %v4160
        %v4399 = vpack.c.bf16 %v4165, %v4163
        %v4400 = vpack.c.bf16 %v4166, %v4164
        %v4401 = vpack.c.bf16 %v4169, %v4167
        %v4402 = vpack.c.bf16 %v4170, %v4168
        %v4403 = vpack.c.bf16 %v4173, %v4171
        %v4404 = vpack.c.bf16 %v4174, %v4172
        %v4405 = vpack.c.bf16 %v4177, %v4175
        %v4406 = vpack.c.bf16 %v4178, %v4176
        %v4407 = vpack.c.bf16 %v4181, %v4179
        %v4408 = vpack.c.bf16 %v4182, %v4180
        %v4409 = vpack.c.bf16 %v4185, %v4183
        %v4410 = vpack.c.bf16 %v4186, %v4184
        %v4411 = vpack.c.bf16 %v4189, %v4187
        %v4412 = vpack.c.bf16 %v4190, %v4188
        %v4413 = vpack.c.bf16 %v4193, %v4191
        %v4414 = vpack.c.bf16 %v4194, %v4192
        %v4415 = vpack.c.bf16 %v4197, %v4195
        %v4416 = vpack.c.bf16 %v4198, %v4196
        %v4417 = vpack.c.bf16 %v4201, %v4199
        %v4418 = vpack.c.bf16 %v4202, %v4200
        %v4419 = vpack.c.bf16 %v4205, %v4203
        %v4420 = vpack.c.bf16 %v4206, %v4204
        %v4421 = vpack.c.bf16 %v4209, %v4207
        %v4422 = vpack.c.bf16 %v4210, %v4208
        %v4423 = vpack.c.bf16 %v4213, %v4211
        %v4424 = vpack.c.bf16 %v4214, %v4212
        %v4425 = vpack.c.bf16 %v4217, %v4215
        %v4426 = vpack.c.bf16 %v4218, %v4216
        %v4427 = vpack.c.bf16 %v4221, %v4219
        %v4428 = vpack.c.bf16 %v4222, %v4220
        %v4429 = vpack.c.bf16 %v4225, %v4223
        %v4430 = vpack.c.bf16 %v4226, %v4224
        %v4431 = vpack.c.bf16 %v4229, %v4227
        %v4432 = vpack.c.bf16 %v4230, %v4228
        %v4433 = vpack.c.bf16 %v4233, %v4231
        %v4434 = vpack.c.bf16 %v4234, %v4232
        %v4435 = vpack.c.bf16 %v4237, %v4235
        %v4436 = vpack.c.bf16 %v4238, %v4236
        %v4437 = vpack.c.bf16 %v4241, %v4239
        %v4438 = vpack.c.bf16 %v4242, %v4240
        %v4439 = vpack.c.bf16 %v4245, %v4243
        %v4440 = vpack.c.bf16 %v4246, %v4244
        %v4441 = vpack.c.bf16 %v4249, %v4247
        %v4442 = vpack.c.bf16 %v4250, %v4248
        %v4443 = vpack.c.bf16 %v4253, %v4251
        %v4444 = vpack.c.bf16 %v4254, %v4252
        %v4445 = vpack.c.bf16 %v4257, %v4255
        %v4446 = vpack.c.bf16 %v4258, %v4256
        %v4447 = vpack.c.bf16 %v4261, %v4259
        %v4448 = vpack.c.bf16 %v4262, %v4260
        %v4449 = vpack.c.bf16 %v4265, %v4263
        %v4450 = vpack.c.bf16 %v4266, %v4264
        %v4451 = vpack.c.bf16 %v4269, %v4267
        %v4452 = vpack.c.bf16 %v4270, %v4268
        %v4453 = vpack.c.bf16 %v4273, %v4271
        %v4454 = vpack.c.bf16 %v4274, %v4272
        %v4455 = vpack.c.bf16 %v4277, %v4275
        %v4456 = vpack.c.bf16 %v4278, %v4276
        %v4457 = vpack.c.bf16 %v4281, %v4279
        %v4458 = vpack.c.bf16 %v4282, %v4280
        %v4459 = vpack.c.bf16 %v4285, %v4283
        %v4460 = vpack.c.bf16 %v4286, %v4284
        %v4461 = vpack.c.bf16 %v4289, %v4287
        %v4462 = vpack.c.bf16 %v4290, %v4288
        %v4463 = vpack.c.bf16 %v4293, %v4291
        %v4464 = vpack.c.bf16 %v4294, %v4292
        %v4465 = vpack.c.bf16 %v4297, %v4295
        %v4466 = vpack.c.bf16 %v4298, %v4296
        %v4467 = vpack.c.bf16 %v4301, %v4299
        %v4468 = vpack.c.bf16 %v4302, %v4300
        %v4469 = vpack.c.bf16 %v4305, %v4303
        %v4470 = vpack.c.bf16 %v4306, %v4304
        %v4471 = vpack.c.bf16 %v4309, %v4307
        %v4472 = vpack.c.bf16 %v4310, %v4308
        %v4473 = vpack.c.bf16 %v4313, %v4311
        %v4474 = vpack.c.bf16 %v4314, %v4312
        %v4475 = vpack.c.bf16 %v4317, %v4315
        %v4476 = vpack.c.bf16 %v4318, %v4316
        %v4477 = vpack.c.bf16 %v4321, %v4319
        %v4478 = vpack.c.bf16 %v4322, %v4320
        %v4479 = vpack.c.bf16 %v4325, %v4323
        %v4480 = vpack.c.bf16 %v4326, %v4324
        %v4481 = vpack.c.bf16 %v4329, %v4327
        %v4482 = vpack.c.bf16 %v4330, %v4328
        %v4483 = vpack.c.bf16 %v4333, %v4331
        %v4484 = vpack.c.bf16 %v4334, %v4332
        %v4485 = vpack.c.bf16 %v4337, %v4335
        %v4486 = vpack.c.bf16 %v4338, %v4336
        %v4487 = vpack.c.bf16 %v4341, %v4339
        %v4488 = vpack.c.bf16 %v4342, %v4340
        %v4489 = vpack.c.bf16 %v4345, %v4343
        %v4490 = vpack.c.bf16 %v4346, %v4344
        %v4491 = vpack.c.bf16 %v4349, %v4347
        %v4492 = vpack.c.bf16 %v4350, %v4348
        %v4493 = vpack.c.bf16 %v4353, %v4351
        %v4494 = vpack.c.bf16 %v4354, %v4352
        %v4495 = vpack.c.bf16 %v4357, %v4355
        %v4496 = vpack.c.bf16 %v4358, %v4356
        %v4497 = vpack.c.bf16 %v4361, %v4359
        %v4498 = vpack.c.bf16 %v4362, %v4360
        %v4499 = vpack.c.bf16 %v4365, %v4363
        %v4500 = vpack.c.bf16 %v4366, %v4364
        %v4501 = vpack.c.bf16 %v4369, %v4367
        %v4502 = vpack.c.bf16 %v4370, %v4368
        %v4503 = vpack.c.bf16 %v4373, %v4371
        %v4504 = vpack.c.bf16 %v4374, %v4372
        %v4505 = vpack.c.bf16 %v4377, %v4375
        %v4506 = vpack.c.bf16 %v4378, %v4376
        %4507 = vmatprep.subr.bf16.mxu0 %v4380
        %4508 = vmatpush1.bf16.xpose.msra.mxu0 %v4379
        %4509 = vmatprep.subr.bf16.mxu0 %v4382
        %4510 = vmatpush1.bf16.xpose.msra.mxu0 %v4381
        %4511 = vmatprep.subr.bf16.mxu0 %v4384
        %4512 = vmatpush1.bf16.xpose.msra.mxu0 %v4383
        %4513 = vmatprep.subr.bf16.mxu0 %v4386
        %4514 = vmatpush1.bf16.xpose.msra.mxu0 %v4385
        %4515 = vmatprep.subr.bf16.mxu0 %v4388
        %4516 = vmatpush1.bf16.xpose.msra.mxu0 %v4387
        %4517 = vmatprep.subr.bf16.mxu0 %v4390
        %4518 = vmatpush1.bf16.xpose.msra.mxu0 %v4389
        %4519 = vmatprep.subr.bf16.mxu0 %v4392
        %4520 = vmatpush1.bf16.xpose.msra.mxu0 %v4391
        %4521 = vmatprep.subr.bf16.mxu0 %v4394
        %4522 = vmatpush1.bf16.xpose.msra.mxu0 %v4393
        %4523 = vmatprep.subr.bf16.mxu0 0
        %4524 = vmatpush1.bf16.xpose.msra.mxu0 0
        %4525 = vmatprep.subr.bf16.mxu0 0
        %4526 = vmatpush1.bf16.xpose.msra.mxu0 0
        %4527 = vmatprep.subr.bf16.mxu0 0
        %4528 = vmatpush1.bf16.xpose.msra.mxu0 0
        %4529 = vmatprep.subr.bf16.mxu0 0
        %4530 = vmatpush1.bf16.xpose.msra.mxu0 0
        %4531 = vmatprep.subr.bf16.mxu0 0
        %4532 = vmatpush1.bf16.xpose.msra.mxu0 0
        %4533 = vmatprep.subr.bf16.mxu0 0
        %4534 = vmatpush1.bf16.xpose.msra.mxu0 0
        %4535 = vmatprep.subr.bf16.mxu0 0
        %4536 = vmatpush1.bf16.xpose.msra.mxu0 0
        %4537 = vmatprep.subr.bf16.mxu0 0
        %4538 = vmatpush1.bf16.xpose.msra.mxu0 0
        %4539 = vmatprep.mubr.bf16.mxu0 %v1170
        %4540 = vmatmul.mubr.bf16.gmra.mrb[0].mxu0 %v1169
        %v4541 = vpop.f32.mrb[0].mxu0
        %v4542 = vadd.f32 0.0, %v4541
        %v4543 = vpop.f32.mrb[0].mxu0
        %v4544 = vpop.f32.mrb[0].mxu0
        %v4545 = vpop.f32.mrb[0].mxu0
        %4546 = vdwg.mxu0
        %4547 = vmatprep.subr.bf16.mxu0 %v4396
        %4548 = vmatpush1.bf16.xpose.msra.mxu0 %v4395
        %4549 = vmatprep.subr.bf16.mxu0 %v4398
        %4550 = vmatpush1.bf16.xpose.msra.mxu0 %v4397
        %4551 = vmatprep.subr.bf16.mxu0 %v4400
        %4552 = vmatpush1.bf16.xpose.msra.mxu0 %v4399
        %4553 = vmatprep.subr.bf16.mxu0 %v4402
        %4554 = vmatpush1.bf16.xpose.msra.mxu0 %v4401
        %4555 = vmatprep.subr.bf16.mxu0 %v4404
        %4556 = vmatpush1.bf16.xpose.msra.mxu0 %v4403
        %4557 = vmatprep.subr.bf16.mxu0 %v4406
        %4558 = vmatpush1.bf16.xpose.msra.mxu0 %v4405
        %4559 = vmatprep.subr.bf16.mxu0 %v4408
        %4560 = vmatpush1.bf16.xpose.msra.mxu0 %v4407
        %4561 = vmatprep.subr.bf16.mxu0 %v4410
        %4562 = vmatpush1.bf16.xpose.msra.mxu0 %v4409
        %4563 = vmatprep.subr.bf16.mxu0 0
        %4564 = vmatpush1.bf16.xpose.msra.mxu0 0
        %4565 = vmatprep.subr.bf16.mxu0 0
        %4566 = vmatpush1.bf16.xpose.msra.mxu0 0
        %4567 = vmatprep.subr.bf16.mxu0 0
        %4568 = vmatpush1.bf16.xpose.msra.mxu0 0
        %4569 = vmatprep.subr.bf16.mxu0 0
        %4570 = vmatpush1.bf16.xpose.msra.mxu0 0
        %4571 = vmatprep.subr.bf16.mxu0 0
        %4572 = vmatpush1.bf16.xpose.msra.mxu0 0
        %4573 = vmatprep.subr.bf16.mxu0 0
        %4574 = vmatpush1.bf16.xpose.msra.mxu0 0
        %4575 = vmatprep.subr.bf16.mxu0 0
        %4576 = vmatpush1.bf16.xpose.msra.mxu0 0
        %4577 = vmatprep.subr.bf16.mxu0 0
        %4578 = vmatpush1.bf16.xpose.msra.mxu0 0
        %4579 = vmatprep.mubr.bf16.mxu0 %v1172
        %4580 = vmatmul.mubr.bf16.gmra.mrb[0].mxu0 %v1171
        %v4581 = vpop.f32.mrb[0].mxu0
        %v4582 = vadd.f32 0.0, %v4581
        %v4583 = vpop.f32.mrb[0].mxu0
        %v4584 = vpop.f32.mrb[0].mxu0
        %v4585 = vpop.f32.mrb[0].mxu0
        %4586 = vdwg.mxu0
        %4587 = vmatprep.subr.bf16.mxu0 %v4412
        %4588 = vmatpush1.bf16.xpose.msra.mxu0 %v4411
        %4589 = vmatprep.subr.bf16.mxu0 %v4414
        %4590 = vmatpush1.bf16.xpose.msra.mxu0 %v4413
        %4591 = vmatprep.subr.bf16.mxu0 %v4416
        %4592 = vmatpush1.bf16.xpose.msra.mxu0 %v4415
        %4593 = vmatprep.subr.bf16.mxu0 %v4418
        %4594 = vmatpush1.bf16.xpose.msra.mxu0 %v4417
        %4595 = vmatprep.subr.bf16.mxu0 %v4420
        %4596 = vmatpush1.bf16.xpose.msra.mxu0 %v4419
        %4597 = vmatprep.subr.bf16.mxu0 %v4422
        %4598 = vmatpush1.bf16.xpose.msra.mxu0 %v4421
        %4599 = vmatprep.subr.bf16.mxu0 %v4424
        %4600 = vmatpush1.bf16.xpose.msra.mxu0 %v4423
        %4601 = vmatprep.subr.bf16.mxu0 %v4426
        %4602 = vmatpush1.bf16.xpose.msra.mxu0 %v4425
        %4603 = vmatprep.subr.bf16.mxu0 0
        %4604 = vmatpush1.bf16.xpose.msra.mxu0 0
        %4605 = vmatprep.subr.bf16.mxu0 0
        %4606 = vmatpush1.bf16.xpose.msra.mxu0 0
        %4607 = vmatprep.subr.bf16.mxu0 0
        %4608 = vmatpush1.bf16.xpose.msra.mxu0 0
        %4609 = vmatprep.subr.bf16.mxu0 0
        %4610 = vmatpush1.bf16.xpose.msra.mxu0 0
        %4611 = vmatprep.subr.bf16.mxu0 0
        %4612 = vmatpush1.bf16.xpose.msra.mxu0 0
        %4613 = vmatprep.subr.bf16.mxu0 0
        %4614 = vmatpush1.bf16.xpose.msra.mxu0 0
        %4615 = vmatprep.subr.bf16.mxu0 0
        %4616 = vmatpush1.bf16.xpose.msra.mxu0 0
        %4617 = vmatprep.subr.bf16.mxu0 0
        %4618 = vmatpush1.bf16.xpose.msra.mxu0 0
        %4619 = vmatprep.mubr.bf16.mxu0 %v1174
        %4620 = vmatmul.mubr.bf16.gmra.mrb[0].mxu0 %v1173
        %v4621 = vpop.f32.mrb[0].mxu0
        %v4622 = vadd.f32 0.0, %v4621
        %v4623 = vpop.f32.mrb[0].mxu0
        %v4624 = vpop.f32.mrb[0].mxu0
        %v4625 = vpop.f32.mrb[0].mxu0
        %4626 = vdwg.mxu0
        %4627 = vmatprep.subr.bf16.mxu0 %v4428
        %4628 = vmatpush1.bf16.xpose.msra.mxu0 %v4427
        %4629 = vmatprep.subr.bf16.mxu0 %v4430
        %4630 = vmatpush1.bf16.xpose.msra.mxu0 %v4429
        %4631 = vmatprep.subr.bf16.mxu0 %v4432
        %4632 = vmatpush1.bf16.xpose.msra.mxu0 %v4431
        %4633 = vmatprep.subr.bf16.mxu0 %v4434
        %4634 = vmatpush1.bf16.xpose.msra.mxu0 %v4433
        %4635 = vmatprep.subr.bf16.mxu0 %v4436
        %4636 = vmatpush1.bf16.xpose.msra.mxu0 %v4435
        %4637 = vmatprep.subr.bf16.mxu0 %v4438
        %4638 = vmatpush1.bf16.xpose.msra.mxu0 %v4437
        %4639 = vmatprep.subr.bf16.mxu0 %v4440
        %4640 = vmatpush1.bf16.xpose.msra.mxu0 %v4439
        %4641 = vmatprep.subr.bf16.mxu0 %v4442
        %4642 = vmatpush1.bf16.xpose.msra.mxu0 %v4441
        %4643 = vmatprep.subr.bf16.mxu0 0
        %4644 = vmatpush1.bf16.xpose.msra.mxu0 0
        %4645 = vmatprep.subr.bf16.mxu0 0
        %4646 = vmatpush1.bf16.xpose.msra.mxu0 0
        %4647 = vmatprep.subr.bf16.mxu0 0
        %4648 = vmatpush1.bf16.xpose.msra.mxu0 0
        %4649 = vmatprep.subr.bf16.mxu0 0
        %4650 = vmatpush1.bf16.xpose.msra.mxu0 0
        %4651 = vmatprep.subr.bf16.mxu0 0
        %4652 = vmatpush1.bf16.xpose.msra.mxu0 0
        %4653 = vmatprep.subr.bf16.mxu0 0
        %4654 = vmatpush1.bf16.xpose.msra.mxu0 0
        %4655 = vmatprep.subr.bf16.mxu0 0
        %4656 = vmatpush1.bf16.xpose.msra.mxu0 0
        %4657 = vmatprep.subr.bf16.mxu0 0
        %4658 = vmatpush1.bf16.xpose.msra.mxu0 0
        %4659 = vmatprep.mubr.bf16.mxu0 %v1176
        %4660 = vmatmul.mubr.bf16.gmra.mrb[0].mxu0 %v1175
        %v4661 = vpop.f32.mrb[0].mxu0
        %v4662 = vadd.f32 0.0, %v4661
        %v4663 = vpop.f32.mrb[0].mxu0
        %v4664 = vpop.f32.mrb[0].mxu0
        %v4665 = vpop.f32.mrb[0].mxu0
        %4666 = vdwg.mxu0
        %4667 = vmatprep.subr.bf16.mxu0 %v4444
        %4668 = vmatpush1.bf16.xpose.msra.mxu0 %v4443
        %4669 = vmatprep.subr.bf16.mxu0 %v4446
        %4670 = vmatpush1.bf16.xpose.msra.mxu0 %v4445
        %4671 = vmatprep.subr.bf16.mxu0 %v4448
        %4672 = vmatpush1.bf16.xpose.msra.mxu0 %v4447
        %4673 = vmatprep.subr.bf16.mxu0 %v4450
        %4674 = vmatpush1.bf16.xpose.msra.mxu0 %v4449
        %4675 = vmatprep.subr.bf16.mxu0 %v4452
        %4676 = vmatpush1.bf16.xpose.msra.mxu0 %v4451
        %4677 = vmatprep.subr.bf16.mxu0 %v4454
        %4678 = vmatpush1.bf16.xpose.msra.mxu0 %v4453
        %4679 = vmatprep.subr.bf16.mxu0 %v4456
        %4680 = vmatpush1.bf16.xpose.msra.mxu0 %v4455
        %4681 = vmatprep.subr.bf16.mxu0 %v4458
        %4682 = vmatpush1.bf16.xpose.msra.mxu0 %v4457
        %4683 = vmatprep.subr.bf16.mxu0 0
        %4684 = vmatpush1.bf16.xpose.msra.mxu0 0
        %4685 = vmatprep.subr.bf16.mxu0 0
        %4686 = vmatpush1.bf16.xpose.msra.mxu0 0
        %4687 = vmatprep.subr.bf16.mxu0 0
        %4688 = vmatpush1.bf16.xpose.msra.mxu0 0
        %4689 = vmatprep.subr.bf16.mxu0 0
        %4690 = vmatpush1.bf16.xpose.msra.mxu0 0
        %4691 = vmatprep.subr.bf16.mxu0 0
        %4692 = vmatpush1.bf16.xpose.msra.mxu0 0
        %4693 = vmatprep.subr.bf16.mxu0 0
        %4694 = vmatpush1.bf16.xpose.msra.mxu0 0
        %4695 = vmatprep.subr.bf16.mxu0 0
        %4696 = vmatpush1.bf16.xpose.msra.mxu0 0
        %4697 = vmatprep.subr.bf16.mxu0 0
        %4698 = vmatpush1.bf16.xpose.msra.mxu0 0
        %4699 = vmatprep.mubr.bf16.mxu0 %v1178
        %4700 = vmatmul.mubr.bf16.gmra.mrb[0].mxu0 %v1177
        %v4701 = vpop.f32.mrb[0].mxu0
        %v4702 = vadd.f32 0.0, %v4701
        %v4703 = vpop.f32.mrb[0].mxu0
        %v4704 = vpop.f32.mrb[0].mxu0
        %v4705 = vpop.f32.mrb[0].mxu0
        %4706 = vdwg.mxu0
        %4707 = vmatprep.subr.bf16.mxu0 %v4460
        %4708 = vmatpush1.bf16.xpose.msra.mxu0 %v4459
        %4709 = vmatprep.subr.bf16.mxu0 %v4462
        %4710 = vmatpush1.bf16.xpose.msra.mxu0 %v4461
        %4711 = vmatprep.subr.bf16.mxu0 %v4464
        %4712 = vmatpush1.bf16.xpose.msra.mxu0 %v4463
        %4713 = vmatprep.subr.bf16.mxu0 %v4466
        %4714 = vmatpush1.bf16.xpose.msra.mxu0 %v4465
        %4715 = vmatprep.subr.bf16.mxu0 %v4468
        %4716 = vmatpush1.bf16.xpose.msra.mxu0 %v4467
        %4717 = vmatprep.subr.bf16.mxu0 %v4470
        %4718 = vmatpush1.bf16.xpose.msra.mxu0 %v4469
        %4719 = vmatprep.subr.bf16.mxu0 %v4472
        %4720 = vmatpush1.bf16.xpose.msra.mxu0 %v4471
        %4721 = vmatprep.subr.bf16.mxu0 %v4474
        %4722 = vmatpush1.bf16.xpose.msra.mxu0 %v4473
        %4723 = vmatprep.subr.bf16.mxu0 0
        %4724 = vmatpush1.bf16.xpose.msra.mxu0 0
        %4725 = vmatprep.subr.bf16.mxu0 0
        %4726 = vmatpush1.bf16.xpose.msra.mxu0 0
        %4727 = vmatprep.subr.bf16.mxu0 0
        %4728 = vmatpush1.bf16.xpose.msra.mxu0 0
        %4729 = vmatprep.subr.bf16.mxu0 0
        %4730 = vmatpush1.bf16.xpose.msra.mxu0 0
        %4731 = vmatprep.subr.bf16.mxu0 0
        %4732 = vmatpush1.bf16.xpose.msra.mxu0 0
        %4733 = vmatprep.subr.bf16.mxu0 0
        %4734 = vmatpush1.bf16.xpose.msra.mxu0 0
        %4735 = vmatprep.subr.bf16.mxu0 0
        %4736 = vmatpush1.bf16.xpose.msra.mxu0 0
        %4737 = vmatprep.subr.bf16.mxu0 0
        %4738 = vmatpush1.bf16.xpose.msra.mxu0 0
        %4739 = vmatprep.mubr.bf16.mxu0 %v1180
        %4740 = vmatmul.mubr.bf16.gmra.mrb[0].mxu0 %v1179
        %v4741 = vpop.f32.mrb[0].mxu0
        %v4742 = vadd.f32 0.0, %v4741
        %v4743 = vpop.f32.mrb[0].mxu0
        %v4744 = vpop.f32.mrb[0].mxu0
        %v4745 = vpop.f32.mrb[0].mxu0
        %4746 = vdwg.mxu0
        %4747 = vmatprep.subr.bf16.mxu0 %v4476
        %4748 = vmatpush1.bf16.xpose.msra.mxu0 %v4475
        %4749 = vmatprep.subr.bf16.mxu0 %v4478
        %4750 = vmatpush1.bf16.xpose.msra.mxu0 %v4477
        %4751 = vmatprep.subr.bf16.mxu0 %v4480
        %4752 = vmatpush1.bf16.xpose.msra.mxu0 %v4479
        %4753 = vmatprep.subr.bf16.mxu0 %v4482
        %4754 = vmatpush1.bf16.xpose.msra.mxu0 %v4481
        %4755 = vmatprep.subr.bf16.mxu0 %v4484
        %4756 = vmatpush1.bf16.xpose.msra.mxu0 %v4483
        %4757 = vmatprep.subr.bf16.mxu0 %v4486
        %4758 = vmatpush1.bf16.xpose.msra.mxu0 %v4485
        %4759 = vmatprep.subr.bf16.mxu0 %v4488
        %4760 = vmatpush1.bf16.xpose.msra.mxu0 %v4487
        %4761 = vmatprep.subr.bf16.mxu0 %v4490
        %4762 = vmatpush1.bf16.xpose.msra.mxu0 %v4489
        %4763 = vmatprep.subr.bf16.mxu0 0
        %4764 = vmatpush1.bf16.xpose.msra.mxu0 0
        %4765 = vmatprep.subr.bf16.mxu0 0
        %4766 = vmatpush1.bf16.xpose.msra.mxu0 0
        %4767 = vmatprep.subr.bf16.mxu0 0
        %4768 = vmatpush1.bf16.xpose.msra.mxu0 0
        %4769 = vmatprep.subr.bf16.mxu0 0
        %4770 = vmatpush1.bf16.xpose.msra.mxu0 0
        %4771 = vmatprep.subr.bf16.mxu0 0
        %4772 = vmatpush1.bf16.xpose.msra.mxu0 0
        %4773 = vmatprep.subr.bf16.mxu0 0
        %4774 = vmatpush1.bf16.xpose.msra.mxu0 0
        %4775 = vmatprep.subr.bf16.mxu0 0
        %4776 = vmatpush1.bf16.xpose.msra.mxu0 0
        %4777 = vmatprep.subr.bf16.mxu0 0
        %4778 = vmatpush1.bf16.xpose.msra.mxu0 0
        %4779 = vmatprep.mubr.bf16.mxu0 %v1182
        %4780 = vmatmul.mubr.bf16.gmra.mrb[0].mxu0 %v1181
        %v4781 = vpop.f32.mrb[0].mxu0
        %v4782 = vadd.f32 0.0, %v4781
        %v4783 = vpop.f32.mrb[0].mxu0
        %v4784 = vpop.f32.mrb[0].mxu0
        %v4785 = vpop.f32.mrb[0].mxu0
        %4786 = vdwg.mxu0
        %4787 = vmatprep.subr.bf16.mxu0 %v4492
        %4788 = vmatpush1.bf16.xpose.msra.mxu0 %v4491
        %4789 = vmatprep.subr.bf16.mxu0 %v4494
        %4790 = vmatpush1.bf16.xpose.msra.mxu0 %v4493
        %4791 = vmatprep.subr.bf16.mxu0 %v4496
        %4792 = vmatpush1.bf16.xpose.msra.mxu0 %v4495
        %4793 = vmatprep.subr.bf16.mxu0 %v4498
        %4794 = vmatpush1.bf16.xpose.msra.mxu0 %v4497
        %4795 = vmatprep.subr.bf16.mxu0 %v4500
        %4796 = vmatpush1.bf16.xpose.msra.mxu0 %v4499
        %4797 = vmatprep.subr.bf16.mxu0 %v4502
        %4798 = vmatpush1.bf16.xpose.msra.mxu0 %v4501
        %4799 = vmatprep.subr.bf16.mxu0 %v4504
        %4800 = vmatpush1.bf16.xpose.msra.mxu0 %v4503
        %4801 = vmatprep.subr.bf16.mxu0 %v4506
        %4802 = vmatpush1.bf16.xpose.msra.mxu0 %v4505
        %4803 = vmatprep.subr.bf16.mxu0 0
        %4804 = vmatpush1.bf16.xpose.msra.mxu0 0
        %4805 = vmatprep.subr.bf16.mxu0 0
        %4806 = vmatpush1.bf16.xpose.msra.mxu0 0
        %4807 = vmatprep.subr.bf16.mxu0 0
        %4808 = vmatpush1.bf16.xpose.msra.mxu0 0
        %4809 = vmatprep.subr.bf16.mxu0 0
        %4810 = vmatpush1.bf16.xpose.msra.mxu0 0
        %4811 = vmatprep.subr.bf16.mxu0 0
        %4812 = vmatpush1.bf16.xpose.msra.mxu0 0
        %4813 = vmatprep.subr.bf16.mxu0 0
        %4814 = vmatpush1.bf16.xpose.msra.mxu0 0
        %4815 = vmatprep.subr.bf16.mxu0 0
        %4816 = vmatpush1.bf16.xpose.msra.mxu0 0
        %4817 = vmatprep.subr.bf16.mxu0 0
        %4818 = vmatpush1.bf16.xpose.msra.mxu0 0
        %4819 = vmatprep.mubr.bf16.mxu0 %v1184
        %4820 = vmatmul.mubr.bf16.gmra.mrb[0].mxu0 %v1183
        %v4821 = vpop.f32.mrb[0].mxu0
        %v4822 = vadd.f32 0.0, %v4821
        %v4823 = vpop.f32.mrb[0].mxu0
        %v4824 = vpop.f32.mrb[0].mxu0
        %v4825 = vpop.f32.mrb[0].mxu0
        %4826 = vdwg.mxu0
        %v4827 = vld [vmem:[%s8] sm:$0xf]
        %v4828 = vld [vmem:[%s8 + $0x4] sm:$0xf]
        %v4829 = vld [vmem:[%s8 + $0x8] sm:$0xf]
        %v4830 = vld [vmem:[%s8 + $0xc] sm:$0xf]
        %v4839 = vcombine.low %v4542, %v4582
        %v4840 = vcombine.low %v4622, %v4662
        %v4841 = vcombine.low %v4702, %v4742
        %v4842 = vcombine.low %v4782, %v4822
        %v4847 = vpack.c.bf16 %v4840, %v4839
        %v4848 = vpack.c.bf16 %v4842, %v4841
        %v4849 = vld [vmem:[%s9] sm:$0xff]
        %v4850 = vld [vmem:[%s9 + $0x8] sm:$0xff]
        %v4851 = vld [vmem:[%s9 + $0x10] sm:$0xff]
        %v4852 = vld [vmem:[%s9 + $0x18] sm:$0xff]
        %4854 = vset.pattern.permute.xlu0 0
        %4855 = vperm.xlu0 %4854, %v4849
        %v4856 = vpop.permute.xlu0 %4855
        %4859 = vset.pattern.permute.xlu0 0
        %4860 = vperm.xlu0 %4859, %v4850
        %v4861 = vpop.permute.xlu0 %4860
        %4864 = vset.pattern.permute.xlu0 0
        %4865 = vperm.xlu0 %4864, %v4851
        %v4866 = vpop.permute.xlu0 %4865
        %4869 = vset.pattern.permute.xlu0 0
        %4870 = vperm.xlu0 %4869, %v4852
        %v4871 = vpop.permute.xlu0 %4870
        %v4877 = vunpack.c.l.b16 %v4827
        %v4878 = vunpack.c.l.b16 %v4828
        %v4879 = vunpack.c.l.b16 %v4829
        %v4880 = vunpack.c.l.b16 %v4830
        %v4881 = vpack.c.b16 %v4878, %v4877
        %v4882 = vpack.c.b16 %v4880, %v4879
        %v4884 = vsel %vm836, %v4881, 0
        %v4887 = vsel %vm836, %v4882, 0
        %4889 = vmatprep.subr.bf16.mxu0 0
        %4890 = vmatpush1.bf16.msra.mxu0 %v4847
        %4891 = vmatprep.subr.bf16.mxu0 0
        %4892 = vmatpush1.bf16.msra.mxu0 %v4848
        %4893 = vmatprep.subr.bf16.mxu0 0
        %4894 = vmatpush1.bf16.msra.mxu0 0
        %4895 = vmatprep.subr.bf16.mxu0 0
        %4896 = vmatpush1.bf16.msra.mxu0 0
        %4897 = vmatprep.subr.bf16.mxu0 0
        %4898 = vmatpush1.bf16.msra.mxu0 0
        %4899 = vmatprep.subr.bf16.mxu0 0
        %4900 = vmatpush1.bf16.msra.mxu0 0
        %4901 = vmatprep.subr.bf16.mxu0 0
        %4902 = vmatpush1.bf16.msra.mxu0 0
        %4903 = vmatprep.subr.bf16.mxu0 0
        %4904 = vmatpush1.bf16.msra.mxu0 0
        %4905 = vmatprep.subr.bf16.mxu0 0
        %4906 = vmatpush1.bf16.msra.mxu0 0
        %4907 = vmatprep.subr.bf16.mxu0 0
        %4908 = vmatpush1.bf16.msra.mxu0 0
        %4909 = vmatprep.subr.bf16.mxu0 0
        %4910 = vmatpush1.bf16.msra.mxu0 0
        %4911 = vmatprep.subr.bf16.mxu0 0
        %4912 = vmatpush1.bf16.msra.mxu0 0
        %4913 = vmatprep.subr.bf16.mxu0 0
        %4914 = vmatpush1.bf16.msra.mxu0 0
        %4915 = vmatprep.subr.bf16.mxu0 0
        %4916 = vmatpush1.bf16.msra.mxu0 0
        %4917 = vmatprep.subr.bf16.mxu0 0
        %4918 = vmatpush1.bf16.msra.mxu0 0
        %4919 = vmatprep.subr.bf16.mxu0 0
        %4920 = vmatpush1.bf16.msra.mxu0 0
        %4921 = vmatprep.mubr.bf16.mxu0 0
        %4922 = vmatmul.mubr.bf16.gmra.mrb[0].mxu0 %v4884
        %v4923 = vpop.f32.mrb[0].mxu0
        %v4924 = vadd.f32 %v4856, %v4923
        %v4925 = vpop.f32.mrb[0].mxu0
        %v4926 = vpop.f32.mrb[0].mxu0
        %v4927 = vadd.f32 %v4861, %v4926
        %v4928 = vpop.f32.mrb[0].mxu0
        %4929 = vmatprep.mubr.bf16.mxu0 0
        %4930 = vmatmul.mubr.bf16.gmra.mrb[0].mxu0 %v4887
        %v4931 = vpop.f32.mrb[0].mxu0
        %v4932 = vadd.f32 %v4866, %v4931
        %v4933 = vpop.f32.mrb[0].mxu0
        %v4934 = vpop.f32.mrb[0].mxu0
        %v4935 = vadd.f32 %v4871, %v4934
        %v4936 = vpop.f32.mrb[0].mxu0
        %4937 = vdwg.mxu0
        %v4938 = vadd.f32 %v613, %v4924
        %v4939 = vadd.f32 %v614, %v4927
        %v4940 = vadd.f32 %v615, %v4932
        %v4941 = vadd.f32 %v616, %v4935
        %v4942 = vld [vmem:[%s10] sm:$0xff]
        %v4943 = vld [vmem:[%s10 + $0x8] sm:$0xff]
        %v4944 = vld [vmem:[%s10 + $0x10] sm:$0xff]
        %v4945 = vld [vmem:[%s10 + $0x18] sm:$0xff]
        %v4946 = vld [vmem:[%s11] sm:$0xff]
        %v4947 = vld [vmem:[%s11 + $0x8] sm:$0xff]
        %v4948 = vld [vmem:[%s11 + $0x10] sm:$0xff]
        %v4949 = vld [vmem:[%s11 + $0x18] sm:$0xff]
        %v4950 = vadd.f32 %v4938, %v4939
        %v4951 = vadd.f32 %v4950, %v4940
        %v4952 = vadd.f32 %v4951, %v4941
        %v4953 = vrot.slane %v4952, 4
        %v4954 = vadd.f32 %v4952, %v4953
        %v4955 = vrot.slane %v4954, 2
        %v4956 = vadd.f32 %v4954, %v4955
        %v4957 = vrot.slane %v4956, 1
        %v4958 = vadd.f32 %v4956, %v4957
        %v4959 = vmul.f32 %v4958, %v643
        %v4960 = vsub.f32 %v4938, %v4959
        %v4961 = vsub.f32 %v4939, %v4959
        %v4962 = vsub.f32 %v4940, %v4959
        %v4963 = vsub.f32 %v4941, %v4959
        %v4964 = vmul.f32 %v4960, %v4960
        %v4965 = vmul.f32 %v4961, %v4961
        %v4966 = vmul.f32 %v4962, %v4962
        %v4967 = vmul.f32 %v4963, %v4963
        %v4968 = vadd.f32 %v4964, %v4965
        %v4969 = vadd.f32 %v4968, %v4966
        %v4970 = vadd.f32 %v4969, %v4967
        %v4971 = vrot.slane %v4970, 4
        %v4972 = vadd.f32 %v4970, %v4971
        %v4973 = vrot.slane %v4972, 2
        %v4974 = vadd.f32 %v4972, %v4973
        %v4975 = vrot.slane %v4974, 1
        %v4976 = vadd.f32 %v4974, %v4975
        %v4977 = vmul.f32 %v4976, %v643
        %v4978 = vadd.f32 %v4977, 1e-05
        %v4979 = vrsqrt.pop %v4978
        %v4980 = vmul.f32 %v4960, %v4979
        %v4981 = vmul.f32 %v4961, %v4979
        %v4982 = vmul.f32 %v4962, %v4979
        %v4983 = vmul.f32 %v4963, %v4979
        %4985 = vset.pattern.permute.xlu0 0
        %4986 = vperm.xlu0 %4985, %v4942
        %v4987 = vpop.permute.xlu0 %4986
        %4990 = vset.pattern.permute.xlu0 0
        %4991 = vperm.xlu0 %4990, %v4943
        %v4992 = vpop.permute.xlu0 %4991
        %4995 = vset.pattern.permute.xlu0 0
        %4996 = vperm.xlu0 %4995, %v4944
        %v4997 = vpop.permute.xlu0 %4996
        %5000 = vset.pattern.permute.xlu0 0
        %5001 = vperm.xlu0 %5000, %v4945
        %v5002 = vpop.permute.xlu0 %5001
        %v5004 = vmul.f32 %v4980, %v4987
        %v5005 = vmul.f32 %v4981, %v4992
        %v5006 = vmul.f32 %v4982, %v4997
        %v5007 = vmul.f32 %v4983, %v5002
        %5009 = vset.pattern.permute.xlu0 0
        %5010 = vperm.xlu0 %5009, %v4946
        %v5011 = vpop.permute.xlu0 %5010
        %5014 = vset.pattern.permute.xlu0 0
        %5015 = vperm.xlu0 %5014, %v4947
        %v5016 = vpop.permute.xlu0 %5015
        %5019 = vset.pattern.permute.xlu0 0
        %5020 = vperm.xlu0 %5019, %v4948
        %v5021 = vpop.permute.xlu0 %5020
        %5024 = vset.pattern.permute.xlu0 0
        %5025 = vperm.xlu0 %5024, %v4949
        %v5026 = vpop.permute.xlu0 %5025
        %v5028 = vadd.f32 %v5004, %v5011
        %v5029 = vadd.f32 %v5005, %v5016
        %v5030 = vadd.f32 %v5006, %v5021
        %v5031 = vadd.f32 %v5007, %v5026
        %v5032 = vpack.c.bf16 %v5029, %v5028
        %v5033 = vpack.c.bf16 %v5031, %v5030
        %v5034 = vld [vmem:[%s12] sm:$0xf]
        %v5035 = vld [vmem:[%s12 + $0x4] sm:$0xf]
        %v5036 = vld [vmem:[%s12 + $0x8] sm:$0xf]
        %v5037 = vld [vmem:[%s12 + $0xc] sm:$0xf]
        %v5038 = vld [vmem:[%s12 + $0x10] sm:$0xf]
        %v5039 = vld [vmem:[%s12 + $0x14] sm:$0xf]
        %v5040 = vld [vmem:[%s12 + $0x18] sm:$0xf]
        %v5041 = vld [vmem:[%s12 + $0x1c] sm:$0xf]
        %v5042 = vld [vmem:[%s12 + $0x20] sm:$0xf]
        %v5043 = vld [vmem:[%s12 + $0x24] sm:$0xf]
        %v5044 = vld [vmem:[%s12 + $0x28] sm:$0xf]
        %v5045 = vld [vmem:[%s12 + $0x2c] sm:$0xf]
        %v5046 = vld [vmem:[%s12 + $0x30] sm:$0xf]
        %v5047 = vld [vmem:[%s12 + $0x34] sm:$0xf]
        %v5048 = vld [vmem:[%s12 + $0x38] sm:$0xf]
        %v5049 = vld [vmem:[%s12 + $0x3c] sm:$0xf]
        %v5050 = vld [vmem:[%s13] sm:$0xff]
        %v5051 = vld [vmem:[%s13 + $0x8] sm:$0xff]
        %v5052 = vld [vmem:[%s13 + $0x10] sm:$0xff]
        %v5053 = vld [vmem:[%s13 + $0x18] sm:$0xff]
        %v5054 = vld [vmem:[%s13 + $0x20] sm:$0xff]
        %v5055 = vld [vmem:[%s13 + $0x28] sm:$0xff]
        %v5056 = vld [vmem:[%s13 + $0x30] sm:$0xff]
        %v5057 = vld [vmem:[%s13 + $0x38] sm:$0xff]
        %v5058 = vld [vmem:[%s13 + $0x40] sm:$0xff]
        %v5059 = vld [vmem:[%s13 + $0x48] sm:$0xff]
        %v5060 = vld [vmem:[%s13 + $0x50] sm:$0xff]
        %v5061 = vld [vmem:[%s13 + $0x58] sm:$0xff]
        %v5062 = vld [vmem:[%s13 + $0x60] sm:$0xff]
        %v5063 = vld [vmem:[%s13 + $0x68] sm:$0xff]
        %v5064 = vld [vmem:[%s13 + $0x70] sm:$0xff]
        %v5065 = vld [vmem:[%s13 + $0x78] sm:$0xff]
        %5067 = vset.pattern.permute.xlu0 0
        %5068 = vperm.xlu0 %5067, %v5050
        %v5069 = vpop.permute.xlu0 %5068
        %5072 = vset.pattern.permute.xlu0 0
        %5073 = vperm.xlu0 %5072, %v5051
        %v5074 = vpop.permute.xlu0 %5073
        %5077 = vset.pattern.permute.xlu0 0
        %5078 = vperm.xlu0 %5077, %v5052
        %v5079 = vpop.permute.xlu0 %5078
        %5082 = vset.pattern.permute.xlu0 0
        %5083 = vperm.xlu0 %5082, %v5053
        %v5084 = vpop.permute.xlu0 %5083
        %5087 = vset.pattern.permute.xlu0 0
        %5088 = vperm.xlu0 %5087, %v5054
        %v5089 = vpop.permute.xlu0 %5088
        %5092 = vset.pattern.permute.xlu0 0
        %5093 = vperm.xlu0 %5092, %v5055
        %v5094 = vpop.permute.xlu0 %5093
        %5097 = vset.pattern.permute.xlu0 0
        %5098 = vperm.xlu0 %5097, %v5056
        %v5099 = vpop.permute.xlu0 %5098
        %5102 = vset.pattern.permute.xlu0 0
        %5103 = vperm.xlu0 %5102, %v5057
        %v5104 = vpop.permute.xlu0 %5103
        %5107 = vset.pattern.permute.xlu0 0
        %5108 = vperm.xlu0 %5107, %v5058
        %v5109 = vpop.permute.xlu0 %5108
        %5112 = vset.pattern.permute.xlu0 0
        %5113 = vperm.xlu0 %5112, %v5059
        %v5114 = vpop.permute.xlu0 %5113
        %5117 = vset.pattern.permute.xlu0 0
        %5118 = vperm.xlu0 %5117, %v5060
        %v5119 = vpop.permute.xlu0 %5118
        %5122 = vset.pattern.permute.xlu0 0
        %5123 = vperm.xlu0 %5122, %v5061
        %v5124 = vpop.permute.xlu0 %5123
        %5127 = vset.pattern.permute.xlu0 0
        %5128 = vperm.xlu0 %5127, %v5062
        %v5129 = vpop.permute.xlu0 %5128
        %5132 = vset.pattern.permute.xlu0 0
        %5133 = vperm.xlu0 %5132, %v5063
        %v5134 = vpop.permute.xlu0 %5133
        %5137 = vset.pattern.permute.xlu0 0
        %5138 = vperm.xlu0 %5137, %v5064
        %v5139 = vpop.permute.xlu0 %5138
        %5142 = vset.pattern.permute.xlu0 0
        %5143 = vperm.xlu0 %5142, %v5065
        %v5144 = vpop.permute.xlu0 %5143
        %v5162 = vunpack.c.l.b16 %v5034
        %v5163 = vunpack.c.l.b16 %v5035
        %v5164 = vunpack.c.l.b16 %v5036
        %v5165 = vunpack.c.l.b16 %v5037
        %v5166 = vunpack.c.l.b16 %v5038
        %v5167 = vunpack.c.l.b16 %v5039
        %v5168 = vunpack.c.l.b16 %v5040
        %v5169 = vunpack.c.l.b16 %v5041
        %v5170 = vunpack.c.l.b16 %v5042
        %v5171 = vunpack.c.l.b16 %v5043
        %v5172 = vunpack.c.l.b16 %v5044
        %v5173 = vunpack.c.l.b16 %v5045
        %v5174 = vunpack.c.l.b16 %v5046
        %v5175 = vunpack.c.l.b16 %v5047
        %v5176 = vunpack.c.l.b16 %v5048
        %v5177 = vunpack.c.l.b16 %v5049
        %v5178 = vpack.c.b16 %v5163, %v5162
        %v5179 = vpack.c.b16 %v5165, %v5164
        %v5180 = vpack.c.b16 %v5167, %v5166
        %v5181 = vpack.c.b16 %v5169, %v5168
        %v5182 = vpack.c.b16 %v5171, %v5170
        %v5183 = vpack.c.b16 %v5173, %v5172
        %v5184 = vpack.c.b16 %v5175, %v5174
        %v5185 = vpack.c.b16 %v5177, %v5176
        %v5187 = vsel %vm836, %v5178, 0
        %v5190 = vsel %vm836, %v5179, 0
        %v5193 = vsel %vm836, %v5180, 0
        %v5196 = vsel %vm836, %v5181, 0
        %v5199 = vsel %vm836, %v5182, 0
        %v5202 = vsel %vm836, %v5183, 0
        %v5205 = vsel %vm836, %v5184, 0
        %v5208 = vsel %vm836, %v5185, 0
        %5210 = vmatprep.subr.bf16.mxu0 0
        %5211 = vmatpush1.bf16.msra.mxu0 %v5032
        %5212 = vmatprep.subr.bf16.mxu0 0
        %5213 = vmatpush1.bf16.msra.mxu0 %v5033
        %5214 = vmatprep.subr.bf16.mxu0 0
        %5215 = vmatpush1.bf16.msra.mxu0 0
        %5216 = vmatprep.subr.bf16.mxu0 0
        %5217 = vmatpush1.bf16.msra.mxu0 0
        %5218 = vmatprep.subr.bf16.mxu0 0
        %5219 = vmatpush1.bf16.msra.mxu0 0
        %5220 = vmatprep.subr.bf16.mxu0 0
        %5221 = vmatpush1.bf16.msra.mxu0 0
        %5222 = vmatprep.subr.bf16.mxu0 0
        %5223 = vmatpush1.bf16.msra.mxu0 0
        %5224 = vmatprep.subr.bf16.mxu0 0
        %5225 = vmatpush1.bf16.msra.mxu0 0
        %5226 = vmatprep.subr.bf16.mxu0 0
        %5227 = vmatpush1.bf16.msra.mxu0 0
        %5228 = vmatprep.subr.bf16.mxu0 0
        %5229 = vmatpush1.bf16.msra.mxu0 0
        %5230 = vmatprep.subr.bf16.mxu0 0
        %5231 = vmatpush1.bf16.msra.mxu0 0
        %5232 = vmatprep.subr.bf16.mxu0 0
        %5233 = vmatpush1.bf16.msra.mxu0 0
        %5234 = vmatprep.subr.bf16.mxu0 0
        %5235 = vmatpush1.bf16.msra.mxu0 0
        %5236 = vmatprep.subr.bf16.mxu0 0
        %5237 = vmatpush1.bf16.msra.mxu0 0
        %5238 = vmatprep.subr.bf16.mxu0 0
        %5239 = vmatpush1.bf16.msra.mxu0 0
        %5240 = vmatprep.subr.bf16.mxu0 0
        %5241 = vmatpush1.bf16.msra.mxu0 0
        %5242 = vmatprep.mubr.bf16.mxu0 0
        %5243 = vmatmul.mubr.bf16.gmra.mrb[0].mxu0 %v5187
        %v5244 = vpop.f32.mrb[0].mxu0
        %v5245 = vadd.f32 %v5069, %v5244
        %v5246 = vpop.f32.mrb[0].mxu0
        %v5247 = vpop.f32.mrb[0].mxu0
        %v5248 = vadd.f32 %v5074, %v5247
        %v5249 = vpop.f32.mrb[0].mxu0
        %5250 = vmatprep.mubr.bf16.mxu0 0
        %5251 = vmatmul.mubr.bf16.gmra.mrb[0].mxu0 %v5190
        %v5252 = vpop.f32.mrb[0].mxu0
        %v5253 = vadd.f32 %v5079, %v5252
        %v5254 = vpop.f32.mrb[0].mxu0
        %v5255 = vpop.f32.mrb[0].mxu0
        %v5256 = vadd.f32 %v5084, %v5255
        %v5257 = vpop.f32.mrb[0].mxu0
        %5258 = vmatprep.mubr.bf16.mxu0 0
        %5259 = vmatmul.mubr.bf16.gmra.mrb[0].mxu0 %v5193
        %v5260 = vpop.f32.mrb[0].mxu0
        %v5261 = vadd.f32 %v5089, %v5260
        %v5262 = vpop.f32.mrb[0].mxu0
        %v5263 = vpop.f32.mrb[0].mxu0
        %v5264 = vadd.f32 %v5094, %v5263
        %v5265 = vpop.f32.mrb[0].mxu0
        %5266 = vmatprep.mubr.bf16.mxu0 0
        %5267 = vmatmul.mubr.bf16.gmra.mrb[0].mxu0 %v5196
        %v5268 = vpop.f32.mrb[0].mxu0
        %v5269 = vadd.f32 %v5099, %v5268
        %v5270 = vpop.f32.mrb[0].mxu0
        %v5271 = vpop.f32.mrb[0].mxu0
        %v5272 = vadd.f32 %v5104, %v5271
        %v5273 = vpop.f32.mrb[0].mxu0
        %5274 = vmatprep.mubr.bf16.mxu0 0
        %5275 = vmatmul.mubr.bf16.gmra.mrb[0].mxu0 %v5199
        %v5276 = vpop.f32.mrb[0].mxu0
        %v5277 = vadd.f32 %v5109, %v5276
        %v5278 = vpop.f32.mrb[0].mxu0
        %v5279 = vpop.f32.mrb[0].mxu0
        %v5280 = vadd.f32 %v5114, %v5279
        %v5281 = vpop.f32.mrb[0].mxu0
        %5282 = vmatprep.mubr.bf16.mxu0 0
        %5283 = vmatmul.mubr.bf16.gmra.mrb[0].mxu0 %v5202
        %v5284 = vpop.f32.mrb[0].mxu0
        %v5285 = vadd.f32 %v5119, %v5284
        %v5286 = vpop.f32.mrb[0].mxu0
        %v5287 = vpop.f32.mrb[0].mxu0
        %v5288 = vadd.f32 %v5124, %v5287
        %v5289 = vpop.f32.mrb[0].mxu0
        %5290 = vmatprep.mubr.bf16.mxu0 0
        %5291 = vmatmul.mubr.bf16.gmra.mrb[0].mxu0 %v5205
        %v5292 = vpop.f32.mrb[0].mxu0
        %v5293 = vadd.f32 %v5129, %v5292
        %v5294 = vpop.f32.mrb[0].mxu0
        %v5295 = vpop.f32.mrb[0].mxu0
        %v5296 = vadd.f32 %v5134, %v5295
        %v5297 = vpop.f32.mrb[0].mxu0
        %5298 = vmatprep.mubr.bf16.mxu0 0
        %5299 = vmatmul.mubr.bf16.gmra.mrb[0].mxu0 %v5208
        %v5300 = vpop.f32.mrb[0].mxu0
        %v5301 = vadd.f32 %v5139, %v5300
        %v5302 = vpop.f32.mrb[0].mxu0
        %v5303 = vpop.f32.mrb[0].mxu0
        %v5304 = vadd.f32 %v5144, %v5303
        %v5305 = vpop.f32.mrb[0].mxu0
        %5306 = vdwg.mxu0
        %v5307 = vmul.f32 %v5245, %v5245
        %v5308 = vmul.f32 %v5248, %v5248
        %v5309 = vmul.f32 %v5253, %v5253
        %v5310 = vmul.f32 %v5256, %v5256
        %v5311 = vmul.f32 %v5261, %v5261
        %v5312 = vmul.f32 %v5264, %v5264
        %v5313 = vmul.f32 %v5269, %v5269
        %v5314 = vmul.f32 %v5272, %v5272
        %v5315 = vmul.f32 %v5277, %v5277
        %v5316 = vmul.f32 %v5280, %v5280
        %v5317 = vmul.f32 %v5285, %v5285
        %v5318 = vmul.f32 %v5288, %v5288
        %v5319 = vmul.f32 %v5293, %v5293
        %v5320 = vmul.f32 %v5296, %v5296
        %v5321 = vmul.f32 %v5301, %v5301
        %v5322 = vmul.f32 %v5304, %v5304
        %v5323 = vmul.f32 %v5245, %v5307
        %v5324 = vmul.f32 %v5248, %v5308
        %v5325 = vmul.f32 %v5253, %v5309
        %v5326 = vmul.f32 %v5256, %v5310
        %v5327 = vmul.f32 %v5261, %v5311
        %v5328 = vmul.f32 %v5264, %v5312
        %v5329 = vmul.f32 %v5269, %v5313
        %v5330 = vmul.f32 %v5272, %v5314
        %v5331 = vmul.f32 %v5277, %v5315
        %v5332 = vmul.f32 %v5280, %v5316
        %v5333 = vmul.f32 %v5285, %v5317
        %v5334 = vmul.f32 %v5288, %v5318
        %v5335 = vmul.f32 %v5293, %v5319
        %v5336 = vmul.f32 %v5296, %v5320
        %v5337 = vmul.f32 %v5301, %v5321
        %v5338 = vmul.f32 %v5304, %v5322
        %v5339 = vmul.f32 %v5323, 0.044715
        %v5340 = vmul.f32 %v5324, 0.044715
        %v5341 = vmul.f32 %v5325, 0.044715
        %v5342 = vmul.f32 %v5326, 0.044715
        %v5343 = vmul.f32 %v5327, 0.044715
        %v5344 = vmul.f32 %v5328, 0.044715
        %v5345 = vmul.f32 %v5329, 0.044715
        %v5346 = vmul.f32 %v5330, 0.044715
        %v5347 = vmul.f32 %v5331, 0.044715
        %v5348 = vmul.f32 %v5332, 0.044715
        %v5349 = vmul.f32 %v5333, 0.044715
        %v5350 = vmul.f32 %v5334, 0.044715
        %v5351 = vmul.f32 %v5335, 0.044715
        %v5352 = vmul.f32 %v5336, 0.044715
        %v5353 = vmul.f32 %v5337, 0.044715
        %v5354 = vmul.f32 %v5338, 0.044715
        %v5355 = vadd.f32 %v5245, %v5339
        %v5356 = vadd.f32 %v5248, %v5340
        %v5357 = vadd.f32 %v5253, %v5341
        %v5358 = vadd.f32 %v5256, %v5342
        %v5359 = vadd.f32 %v5261, %v5343
        %v5360 = vadd.f32 %v5264, %v5344
        %v5361 = vadd.f32 %v5269, %v5345
        %v5362 = vadd.f32 %v5272, %v5346
        %v5363 = vadd.f32 %v5277, %v5347
        %v5364 = vadd.f32 %v5280, %v5348
        %v5365 = vadd.f32 %v5285, %v5349
        %v5366 = vadd.f32 %v5288, %v5350
        %v5367 = vadd.f32 %v5293, %v5351
        %v5368 = vadd.f32 %v5296, %v5352
        %v5369 = vadd.f32 %v5301, %v5353
        %v5370 = vadd.f32 %v5304, %v5354
        %v5371 = vmul.f32 %v5355, 0.7978846
        %v5372 = vmul.f32 %v5356, 0.7978846
        %v5373 = vmul.f32 %v5357, 0.7978846
        %v5374 = vmul.f32 %v5358, 0.7978846
        %v5375 = vmul.f32 %v5359, 0.7978846
        %v5376 = vmul.f32 %v5360, 0.7978846
        %v5377 = vmul.f32 %v5361, 0.7978846
        %v5378 = vmul.f32 %v5362, 0.7978846
        %v5379 = vmul.f32 %v5363, 0.7978846
        %v5380 = vmul.f32 %v5364, 0.7978846
        %v5381 = vmul.f32 %v5365, 0.7978846
        %v5382 = vmul.f32 %v5366, 0.7978846
        %v5383 = vmul.f32 %v5367, 0.7978846
        %v5384 = vmul.f32 %v5368, 0.7978846
        %v5385 = vmul.f32 %v5369, 0.7978846
        %v5386 = vmul.f32 %v5370, 0.7978846
        %v5387 = vtanh.pop %v5371
        %v5388 = vtanh.pop %v5372
        %v5389 = vtanh.pop %v5373
        %v5390 = vtanh.pop %v5374
        %v5391 = vtanh.pop %v5375
        %v5392 = vtanh.pop %v5376
        %v5393 = vtanh.pop %v5377
        %v5394 = vtanh.pop %v5378
        %v5395 = vtanh.pop %v5379
        %v5396 = vtanh.pop %v5380
        %v5397 = vtanh.pop %v5381
        %v5398 = vtanh.pop %v5382
        %v5399 = vtanh.pop %v5383
        %v5400 = vtanh.pop %v5384
        %v5401 = vtanh.pop %v5385
        %v5402 = vtanh.pop %v5386
        %v5403 = vadd.f32 %v5387, 1.0
        %v5404 = vadd.f32 %v5388, 1.0
        %v5405 = vadd.f32 %v5389, 1.0
        %v5406 = vadd.f32 %v5390, 1.0
        %v5407 = vadd.f32 %v5391, 1.0
        %v5408 = vadd.f32 %v5392, 1.0
        %v5409 = vadd.f32 %v5393, 1.0
        %v5410 = vadd.f32 %v5394, 1.0
        %v5411 = vadd.f32 %v5395, 1.0
        %v5412 = vadd.f32 %v5396, 1.0
        %v5413 = vadd.f32 %v5397, 1.0
        %v5414 = vadd.f32 %v5398, 1.0
        %v5415 = vadd.f32 %v5399, 1.0
        %v5416 = vadd.f32 %v5400, 1.0
        %v5417 = vadd.f32 %v5401, 1.0
        %v5418 = vadd.f32 %v5402, 1.0
        %v5419 = vmul.f32 %v5403, 0.5
        %v5420 = vmul.f32 %v5404, 0.5
        %v5421 = vmul.f32 %v5405, 0.5
        %v5422 = vmul.f32 %v5406, 0.5
        %v5423 = vmul.f32 %v5407, 0.5
        %v5424 = vmul.f32 %v5408, 0.5
        %v5425 = vmul.f32 %v5409, 0.5
        %v5426 = vmul.f32 %v5410, 0.5
        %v5427 = vmul.f32 %v5411, 0.5
        %v5428 = vmul.f32 %v5412, 0.5
        %v5429 = vmul.f32 %v5413, 0.5
        %v5430 = vmul.f32 %v5414, 0.5
        %v5431 = vmul.f32 %v5415, 0.5
        %v5432 = vmul.f32 %v5416, 0.5
        %v5433 = vmul.f32 %v5417, 0.5
        %v5434 = vmul.f32 %v5418, 0.5
        %v5435 = vmul.f32 %v5245, %v5419
        %v5436 = vmul.f32 %v5248, %v5420
        %v5437 = vmul.f32 %v5253, %v5421
        %v5438 = vmul.f32 %v5256, %v5422
        %v5439 = vmul.f32 %v5261, %v5423
        %v5440 = vmul.f32 %v5264, %v5424
        %v5441 = vmul.f32 %v5269, %v5425
        %v5442 = vmul.f32 %v5272, %v5426
        %v5443 = vmul.f32 %v5277, %v5427
        %v5444 = vmul.f32 %v5280, %v5428
        %v5445 = vmul.f32 %v5285, %v5429
        %v5446 = vmul.f32 %v5288, %v5430
        %v5447 = vmul.f32 %v5293, %v5431
        %v5448 = vmul.f32 %v5296, %v5432
        %v5449 = vmul.f32 %v5301, %v5433
        %v5450 = vmul.f32 %v5304, %v5434
        %v5451 = vld [vmem:[%s14] sm:$0xf]
        %v5452 = vld [vmem:[%s14 + $0x4] sm:$0xf]
        %v5453 = vld [vmem:[%s14 + $0x8] sm:$0xf]
        %v5454 = vld [vmem:[%s14 + $0xc] sm:$0xf]
        %v5455 = vpack.c.bf16 %v5436, %v5435
        %v5456 = vpack.c.bf16 %v5438, %v5437
        %v5457 = vpack.c.bf16 %v5440, %v5439
        %v5458 = vpack.c.bf16 %v5442, %v5441
        %v5459 = vpack.c.bf16 %v5444, %v5443
        %v5460 = vpack.c.bf16 %v5446, %v5445
        %v5461 = vpack.c.bf16 %v5448, %v5447
        %v5462 = vpack.c.bf16 %v5450, %v5449
        %v5463 = vld [vmem:[%s15] sm:$0xff]
        %v5464 = vld [vmem:[%s15 + $0x8] sm:$0xff]
        %v5465 = vld [vmem:[%s15 + $0x10] sm:$0xff]
        %v5466 = vld [vmem:[%s15 + $0x18] sm:$0xff]
        %5468 = vset.pattern.permute.xlu0 0
        %5469 = vperm.xlu0 %5468, %v5463
        %v5470 = vpop.permute.xlu0 %5469
        %5473 = vset.pattern.permute.xlu0 0
        %5474 = vperm.xlu0 %5473, %v5464
        %v5475 = vpop.permute.xlu0 %5474
        %5478 = vset.pattern.permute.xlu0 0
        %5479 = vperm.xlu0 %5478, %v5465
        %v5480 = vpop.permute.xlu0 %5479
        %5483 = vset.pattern.permute.xlu0 0
        %5484 = vperm.xlu0 %5483, %v5466
        %v5485 = vpop.permute.xlu0 %5484
        %v5491 = vunpack.c.l.b16 %v5451
        %v5492 = vunpack.c.l.b16 %v5452
        %v5493 = vunpack.c.l.b16 %v5453
        %v5494 = vunpack.c.l.b16 %v5454
        %v5495 = vpack.c.b16 %v5492, %v5491
        %v5496 = vpack.c.b16 %v5494, %v5493
        %5499 = vmatprep.subr.bf16.mxu0 0
        %5500 = vmatpush1.bf16.msra.mxu0 %v5455
        %5501 = vmatprep.subr.bf16.mxu0 0
        %5502 = vmatpush1.bf16.msra.mxu0 %v5456
        %5503 = vmatprep.subr.bf16.mxu0 0
        %5504 = vmatpush1.bf16.msra.mxu0 %v5457
        %5505 = vmatprep.subr.bf16.mxu0 0
        %5506 = vmatpush1.bf16.msra.mxu0 %v5458
        %5507 = vmatprep.subr.bf16.mxu0 0
        %5508 = vmatpush1.bf16.msra.mxu0 %v5459
        %5509 = vmatprep.subr.bf16.mxu0 0
        %5510 = vmatpush1.bf16.msra.mxu0 %v5460
        %5511 = vmatprep.subr.bf16.mxu0 0
        %5512 = vmatpush1.bf16.msra.mxu0 %v5461
        %5513 = vmatprep.subr.bf16.mxu0 0
        %5514 = vmatpush1.bf16.msra.mxu0 %v5462
        %5515 = vmatprep.subr.bf16.mxu0 0
        %5516 = vmatpush1.bf16.msra.mxu0 0
        %5517 = vmatprep.subr.bf16.mxu0 0
        %5518 = vmatpush1.bf16.msra.mxu0 0
        %5519 = vmatprep.subr.bf16.mxu0 0
        %5520 = vmatpush1.bf16.msra.mxu0 0
        %5521 = vmatprep.subr.bf16.mxu0 0
        %5522 = vmatpush1.bf16.msra.mxu0 0
        %5523 = vmatprep.subr.bf16.mxu0 0
        %5524 = vmatpush1.bf16.msra.mxu0 0
        %5525 = vmatprep.subr.bf16.mxu0 0
        %5526 = vmatpush1.bf16.msra.mxu0 0
        %5527 = vmatprep.subr.bf16.mxu0 0
        %5528 = vmatpush1.bf16.msra.mxu0 0
        %5529 = vmatprep.subr.bf16.mxu0 0
        %5530 = vmatpush1.bf16.msra.mxu0 0
        %5531 = vmatprep.mubr.bf16.mxu0 0
        %5532 = vmatmul.mubr.bf16.gmra.mrb[0].mxu0 %v5495
        %v5533 = vpop.f32.mrb[0].mxu0
        %v5534 = vadd.f32 %v5470, %v5533
        %v5535 = vpop.f32.mrb[0].mxu0
        %v5536 = vpop.f32.mrb[0].mxu0
        %v5537 = vadd.f32 %v5475, %v5536
        %v5538 = vpop.f32.mrb[0].mxu0
        %5539 = vmatprep.mubr.bf16.mxu0 0
        %5540 = vmatmul.mubr.bf16.gmra.mrb[0].mxu0 %v5496
        %v5541 = vpop.f32.mrb[0].mxu0
        %v5542 = vadd.f32 %v5480, %v5541
        %v5543 = vpop.f32.mrb[0].mxu0
        %v5544 = vpop.f32.mrb[0].mxu0
        %v5545 = vadd.f32 %v5485, %v5544
        %v5546 = vpop.f32.mrb[0].mxu0
        %5547 = vdwg.mxu0
        %v5548 = vadd.f32 %v4938, %v5534
        %v5549 = vadd.f32 %v4939, %v5537
        %v5550 = vadd.f32 %v4940, %v5542
        %v5551 = vadd.f32 %v4941, %v5545
        %5552 = vst [vmem:[%s598] sm:$0xff] %v5548
        %5553 = vst [vmem:[%s598 + $0x8] sm:$0xff] %v5549
        %5554 = vst [vmem:[%s598 + $0x10] sm:$0xff] %v5550
        %5555 = vst [vmem:[%s598 + $0x18] sm:$0xff] %v5551
        %s5556 = sand.u32 %s400, 1
        %s5557 = scalar_lea.sflag [#allocation4], %s5556
        %s5558 = sand.u32 %s400, 1
        %s5559 = smul.addr %s5558, 32
        %s5560 = scalar_lea.vmem [#allocation3], %s5559
        // Predicated region
        $region123: #{tpu_custom_call.1} parent=117 // pred_check
          %p5561 = pneg %p410
        $region124: #{tpu_custom_call.1} parent=117 // pred_check_branch
          %5563 = sbr.rel (%p5561) target = $region126
        $region125: #{tpu_custom_call.1} parent=117 // pred_region
          %s5565 = ssub.s32 512, 512
          %5566 = vsyncadd %s5557, %s5565
          %s5567 = smul.addr %s34, 8
          %s5568 = sadd.s32 %s35, %s5567
          %s5569 = smul.addr %s5568, 128
          %s5570 = scalar_lea.hbm %s16, %s5569
          %s5571 = sshll.u32 %s5560, 4
          %s5572 = int_to_ptr.vmem [resolvable:$true] %s5571
          %5577 = dma.vmem_to_hbm [thread:$0]  %s5572, 512, %s5570, %s5557, 128, 256, 8
        $region126: #{tpu_custom_call.1} parent=117 // pred_fallthru
          _
      $region118: #{tpu_custom_call.1} parent=5 // pred_fallthru
        _
      %p5578 = scmp.le.s32.totalorder 2, %s25
      // Predicated region
      $region127: #{tpu_custom_call.1} parent=5 // pred_check
        %p5579 = pneg %p5578
      $region128: #{tpu_custom_call.1} parent=5 // pred_check_branch
        %5581 = sbr.rel (%p5579) target = $region130
      $region129: #{tpu_custom_call.1} parent=5 // pred_region
        %s5582 = ssub.s32 %s25, 2
        // Predicated region
        $region131: #{tpu_custom_call.1} parent=129 // pred_check
          %p5583 = pneg %p416
        $region132: #{tpu_custom_call.1} parent=129 // pred_check_branch
          %5585 = sbr.rel (%p5583) target = $region134
        $region133: #{tpu_custom_call.1} parent=129 // pred_region
          %s5586 = sand.u32 %s401, 1
          %s5587 = scalar_lea.sflag [#allocation4], %s5586
          %s5588 = sand.u32 %s401, 1
          %s5589 = smul.addr %s5588, 32
          %s5590 = scalar_lea.vmem [#allocation3], %s5589
          %5591 = dma.done %s5587, 512
        $region134: #{tpu_custom_call.1} parent=129 // pred_fallthru
          _
      $region130: #{tpu_custom_call.1} parent=5 // pred_fallthru
        _
    $region6: #{tpu_custom_call.1} parent=1 // loop_footer
      %s29 = sadd.s32 1, %s25
    $region7: #{tpu_custom_call.1} parent=1 // loop_footer_branch
      %24 = sbr.rel target = $region3
    $region8: #{tpu_custom_call.1} parent=1 // loop_exit
      _
    %5592 = vsyncpa [#allocation4], 1
    %s5593 = scalar_lea.sflag [#allocation4], 1
    %5594 = vsyncpa %s5593, 1

</llo_original>
